<compile_context>
chip_gen: v7x
topology: tpu7x:2x2x1
jax: 0.10.0
libtpu: 0.0.40
codegen_flags: <defaults>
</compile_context>

<pallas_src>
import functools

import jax
import jax.numpy as jnp
from jax.experimental import pallas as pl
from jax.experimental.pallas import tpu as pltpu

KERNEL_SIZES = (3, 4, 5)


def textcnn_kernel(tok_ref, emb_ref, wp_ref, cb_ref, mask_ref, fcw_ref, fcb_ref,
                   out_ref, *, seq_len):
    rows = tok_ref.shape[0]              # bt * S
    S = seq_len
    bt = rows // S
    V, D = emb_ref.shape                 # padded vocab, embed dim
    C = cb_ref.shape[-1]                 # n_branch * kernel_num
    max_ks = wp_ref.shape[0] // D

    # ---- fused embedding lookup: one-hot(tokens) @ emb_table (exact gather) ----
    tok = tok_ref[...]                                              # (rows, 1) int32
    viota = jax.lax.broadcasted_iota(jnp.int32, (rows, V), 1)
    onehot = (tok == viota).astype(emb_ref.dtype)                   # (rows, V) bf16
    # Exact: exactly one 1.0 per row, f32 accumulation -> row of the bf16 table.
    x = jnp.dot(onehot, emb_ref[...], preferred_element_type=jnp.float32)   # (rows, D)

    # ---- im2col on x: sublane rolls (XLU) + lane concat -> ONE deep conv matmul ----
    # rolled[j][r, :] == x[(r + j) % rows, :]   (jnp.roll semantics, positive shift)
    cols = [x] + [pltpu.roll(x, rows - j, axis=0) for j in range(1, max_ks)]
    xcat = jnp.concatenate(cols, axis=-1).astype(jnp.bfloat16)      # (rows, max_ks*D)

    # Every tap of every branch in a single matmul; taps a branch does not have are
    # zero columns of wp.  Contraction depth = max_ks*D.
    y = jnp.dot(xcat, wp_ref[...], preferred_element_type=jnp.float32)      # (rows, C)
    y = jnp.maximum(y + cb_ref[...], 0.0)                                   # bias + ReLU

    # ---- max-pool over time ----
    # (bt*S, C) -> (bt, S, C) is layout-free when S % 8 == 0 (lane dim unchanged).
    # Rows with t >= S-ks+1 (incl. cross-sample / wraparound taps) hold garbage and are
    # zeroed via the precomputed mask.  Exact (not just safe): ReLU output >= 0 so the
    # pooled max over the valid window is >= 0 and extra zeros never change it.
    y3 = y.reshape(bt, S, C) * mask_ref[...][None, :, :]
    feat = jnp.max(y3, axis=1)                                              # (bt, C) f32

    # ---- lane-dense FC: single (bt, C) @ (C, L_pad) matmul + bias, padded-L output ----
    # TODO(synk): nn.Dropout is identity in eval mode; training-mode dropout not implemented.
    out_ref[...] = (jnp.dot(feat, fcw_ref[...], preferred_element_type=jnp.float32)
                    + fcb_ref[...])


def textcnn_forward(tokens, emb_weight, conv_ws, conv_bs, fc_w, fc_b, *, batch_tile=32):
    B, S = tokens.shape
    V, D = emb_weight.shape
    K = int(conv_bs[0].shape[0])
    L = int(fc_b.shape[-1])
    n_branch = len(KERNEL_SIZES)
    max_ks = max(KERNEL_SIZES)
    C = n_branch * K

    # Batch tile: multiple of 8 (sublane rule).  Larger tiles amortize per-grid-step
    # overhead; per-tile VMEM is only a few hundred KB, so 32-128 is comfortable even
    # within v7x's 64 MiB.
    bt = max(8, (batch_tile // 8) * 8)
    b_pad = pl.cdiv(B, bt) * bt
    tok = tokens.astype(jnp.int32)
    if b_pad != B:
        tok = jnp.pad(tok, ((0, b_pad - B), (0, 0)))
    tok_col = tok.reshape(b_pad * S, 1)            # one token id per im2col row

    # Vocab padded to a lane multiple; padded rows are never selected.
    # TODO(synk): for realistic vocabularies replace the one-hot gather with a
    # scalar-prefetch / DMA gather from an HBM-resident table.
    v_pad = pl.cdiv(V, 128) * 128
    emb_p = jnp.zeros((v_pad, D), jnp.bfloat16).at[:V, :].set(emb_weight.astype(jnp.bfloat16))

    # Block-structured im2col conv weight: rows [j*D:(j+1)*D) = tap j,
    # cols [i*K:(i+1)*K) = branch i; absent taps stay zero.
    wp = jnp.zeros((max_ks * D, C), jnp.float32)
    for i, (ks, w) in enumerate(zip(KERNEL_SIZES, conv_ws)):
        for j in range(ks):
            wp = wp.at[j * D:(j + 1) * D, i * K:(i + 1) * K].set(w[j])
    wp = wp.astype(jnp.bfloat16)

    cb_all = jnp.concatenate([b.reshape(-1) for b in conv_bs]
                             ).reshape(1, C).astype(jnp.float32)

    # Time-validity mask over (t, conv column): 1.0 iff t < S - ks + 1 for that branch.
    mask = jnp.zeros((S, C), jnp.float32)
    for i, ks in enumerate(KERNEL_SIZES):
        mask = mask.at[:S - ks + 1, i * K:(i + 1) * K].set(1.0)

    # Lane-dense FC output: pad L up to a full 128-lane register.
    l_pad = pl.cdiv(L, 128) * 128
    fcw_p = jnp.zeros((C, l_pad), jnp.float32).at[:, :L].set(fc_w.astype(jnp.float32))
    fcb_p = jnp.zeros((1, l_pad), jnp.float32).at[:, :L].set(fc_b.astype(jnp.float32))

    rows_total = b_pad * S
    flops = (2 * rows_total * v_pad * D            # one-hot embedding matmul
             + 2 * rows_total * (max_ks * D) * C   # fused im2col conv matmul
             + 2 * b_pad * C * l_pad)              # FC
    bytes_accessed = (tok_col.size * 4 + emb_p.size * 2 + wp.size * 2 + cb_all.size * 4
                      + mask.size * 4 + fcw_p.size * 4 + fcb_p.size * 4
                      + b_pad * l_pad * 4)

    out = pl.pallas_call(
        functools.partial(textcnn_kernel, seq_len=S),
        out_shape=jax.ShapeDtypeStruct((b_pad, l_pad), jnp.float32),
        grid=(b_pad // bt,),
        in_specs=[
            pl.BlockSpec((bt * S, 1), lambda i: (i, 0)),       # tokens: per batch tile
            pl.BlockSpec((v_pad, D), lambda i: (0, 0)),        # emb table: VMEM-resident
            pl.BlockSpec((max_ks * D, C), lambda i: (0, 0)),   # packed im2col conv weight
            pl.BlockSpec((1, C), lambda i: (0, 0)),            # packed conv biases
            pl.BlockSpec((S, C), lambda i: (0, 0)),            # time-validity mask
            pl.BlockSpec((C, l_pad), lambda i: (0, 0)),        # FC weight (L padded)
            pl.BlockSpec((1, l_pad), lambda i: (0, 0)),        # FC bias (L padded)
        ],
        out_specs=pl.BlockSpec((bt, l_pad), lambda i: (i, 0)),
        compiler_params=pltpu.CompilerParams(
            dimension_semantics=("parallel",),                 # shard batch tiles across TCs
            vmem_limit_bytes=32 * 1024 * 1024,
        ),
        cost_estimate=pl.CostEstimate(
            flops=flops, transcendentals=0, bytes_accessed=bytes_accessed),
    )(tok_col, emb_p, wp, cb_all, mask, fcw_p, fcb_p)
    return out[:B, :L]


def textcnn_reference(tokens, emb_weight, conv_ws, conv_bs, fc_w, fc_b):
    """Pure-JAX replica of the PyTorch forward (eval mode) for sanity checking."""
    x = emb_weight[tokens].astype(jnp.float32)       # (B, S, D)
    B, S, D = x.shape
    feats = []
    for ks, w, b in zip(KERNEL_SIZES, conv_ws, conv_bs):
        T = S - ks + 1
        s = jnp.zeros((B, T, w.shape[-1]), jnp.float32)
        for j in range(ks):
            s = s + jnp.einsum('btd,dk->btk', x[:, j:j + T, :], w[j],
                               precision="highest")
        s = jax.nn.relu(s + b[None, None, :])
        feats.append(s.max(axis=1))
    feat = jnp.concatenate(feats, axis=1)
    return jnp.dot(feat, fc_w, precision="highest") + fc_b[None, :]


if __name__ == "__main__":
    # Small, deterministic config implied by the module's __init__.
    vocab_size = 50       # weight.size(0)
    embed_dim = 32        # weight.size(1)
    seq_len = 16
    batch = 128           # 4 batch tiles of 32 -> >=2 pipelined grid steps per v7x TC
    kernel_num = 16       # args.kernel_num
    label_num = 4         # args.label_num

    key = jax.random.PRNGKey(0)
    keys = jax.random.split(key, 10)

    # Quantize embedding/conv weights to bf16-representable values (stored as f32)
    # so the f32 reference and the bf16-compute kernel see identical parameters.
    def q(a):
        return a.astype(jnp.bfloat16).astype(jnp.float32)

    emb_weight = q(0.1 * jax.random.normal(keys[0], (vocab_size, embed_dim), jnp.float32))
    tokens = jax.random.randint(keys[1], (batch, seq_len), 0, vocab_size, jnp.int32)

    conv_ws = []
    conv_bs = []
    for i, ks in enumerate(KERNEL_SIZES):
        conv_ws.append(q(0.1 * jax.random.normal(keys[2 + i], (ks, embed_dim, kernel_num), jnp.float32)))
        conv_bs.append(0.01 * jax.random.normal(keys[5 + i], (kernel_num,), jnp.float32))

    fc_w = 0.1 * jax.random.normal(keys[8], (len(KERNEL_SIZES) * kernel_num, label_num), jnp.float32)
    fc_b = 0.01 * jax.random.normal(keys[9], (label_num,), jnp.float32)

    logits = textcnn_forward(tokens, emb_weight, conv_ws, conv_bs, fc_w, fc_b, batch_tile=32)
    logits = jax.block_until_ready(logits)

    ref = textcnn_reference(tokens, emb_weight, conv_ws, conv_bs, fc_w, fc_b)
    assert logits.shape == (batch, label_num), logits.shape
    # Loose-ish tolerance: covers f32-matmul precision-mode differences between the
    # Mosaic kernel and XLA reference; structural bugs would be orders larger.
    assert jnp.allclose(logits, ref, rtol=1e-2, atol=1e-3), (logits, ref)

    print("KERNEL_OK")
</pallas_src>

<mosaic_0001>
module attributes {stable_mosaic.version = 11 : i64} {
  func.func @textcnn_kernel(%arg0: i32, %arg1: memref<512x1xi32, #tpu.memory_space<vmem>>, %arg2: memref<128x32xbf16, #tpu.memory_space<vmem>>, %arg3: memref<160x48xbf16, #tpu.memory_space<vmem>>, %arg4: memref<1x48xf32, #tpu.memory_space<vmem>>, %arg5: memref<16x48xf32, #tpu.memory_space<vmem>>, %arg6: memref<48x128xf32, #tpu.memory_space<vmem>>, %arg7: memref<1x128xf32, #tpu.memory_space<vmem>>, %arg8: memref<32x128xf32, #tpu.memory_space<vmem>>) attributes {dimension_semantics = [#tpu.dimension_semantics<parallel>], iteration_bounds = array<i64: 4>, scalar_prefetch = 0 : i64, scratch_operands = 0 : i64, tpu.core_type = #tpu.core_type<tc>, window_params = [{transform_indices = @transform_0, window_bounds = array<i64: 512, 1>}, {pipeline_mode = #tpu.pipeline_mode<synchronous>, transform_indices = @transform_1, window_bounds = array<i64: 128, 32>}, {pipeline_mode = #tpu.pipeline_mode<synchronous>, transform_indices = @transform_2, window_bounds = array<i64: 160, 48>}, {pipeline_mode = #tpu.pipeline_mode<synchronous>, transform_indices = @transform_3, window_bounds = array<i64: 1, 48>}, {pipeline_mode = #tpu.pipeline_mode<synchronous>, transform_indices = @transform_4, window_bounds = array<i64: 16, 48>}, {pipeline_mode = #tpu.pipeline_mode<synchronous>, transform_indices = @transform_5, window_bounds = array<i64: 48, 128>}, {pipeline_mode = #tpu.pipeline_mode<synchronous>, transform_indices = @transform_6, window_bounds = array<i64: 1, 128>}, {transform_indices = @transform_7, window_bounds = array<i64: 32, 128>}]} {
    %c0 = arith.constant 0 : index
    %c0_0 = arith.constant 0 : index
    %0 = vector.load %arg1[%c0, %c0_0] : memref<512x1xi32, #tpu.memory_space<vmem>>, vector<512x1xi32>
    %1 = tpu.iota {dimensions = array<i32: 1>} : vector<512x128xi32>
    %2 = vector.broadcast %0 : vector<512x1xi32> to vector<512x128xi32>
    %3 = arith.cmpi eq, %2, %1 : vector<512x128xi32>
    %4 = arith.extui %3 : vector<512x128xi1> to vector<512x128xi32>
    %5 = arith.sitofp %4 : vector<512x128xi32> to vector<512x128xf32>
    %6 = arith.truncf %5 : vector<512x128xf32> to vector<512x128xbf16>
    %c0_1 = arith.constant 0 : index
    %c0_2 = arith.constant 0 : index
    %7 = vector.load %arg2[%c0_1, %c0_2] : memref<128x32xbf16, #tpu.memory_space<vmem>>, vector<128x32xbf16>
    %cst = arith.constant dense<0.000000e+00> : vector<512x32xf32>
    %8 = tpu.matmul %6, %7, %cst {dimension_numbers = #tpu.dot_dimension_numbers<[1], [0], [0], [1], [0, 0, 1, 1], [], []>} : vector<512x128xbf16>, vector<128x32xbf16>, vector<512x32xf32> -> vector<512x32xf32>
    %c511_i32 = arith.constant 511 : i32
    %9 = tpu.dynamic_rotate %8 by %c511_i32 dim 0 : vector<512x32xf32>, i32 -> vector<512x32xf32>
    %c510_i32 = arith.constant 510 : i32
    %10 = tpu.dynamic_rotate %8 by %c510_i32 dim 0 : vector<512x32xf32>, i32 -> vector<512x32xf32>
    %c509_i32 = arith.constant 509 : i32
    %11 = tpu.dynamic_rotate %8 by %c509_i32 dim 0 : vector<512x32xf32>, i32 -> vector<512x32xf32>
    %c508_i32 = arith.constant 508 : i32
    %12 = tpu.dynamic_rotate %8 by %c508_i32 dim 0 : vector<512x32xf32>, i32 -> vector<512x32xf32>
    %13 = tpu.concatenate %8, %9, %10, %11, %12 in 1 : vector<512x32xf32>, vector<512x32xf32>, vector<512x32xf32>, vector<512x32xf32>, vector<512x32xf32> -> vector<512x160xf32>
    %14 = arith.truncf %13 : vector<512x160xf32> to vector<512x160xbf16>
    %c0_3 = arith.constant 0 : index
    %c0_4 = arith.constant 0 : index
    %15 = vector.load %arg3[%c0_3, %c0_4] : memref<160x48xbf16, #tpu.memory_space<vmem>>, vector<160x48xbf16>
    %cst_5 = arith.constant dense<0.000000e+00> : vector<512x48xf32>
    %16 = tpu.matmul %14, %15, %cst_5 {dimension_numbers = #tpu.dot_dimension_numbers<[1], [0], [0], [1], [0, 0, 1, 1], [], []>} : vector<512x160xbf16>, vector<160x48xbf16>, vector<512x48xf32> -> vector<512x48xf32>
    %c0_6 = arith.constant 0 : index
    %c0_7 = arith.constant 0 : index
    %17 = vector.load %arg4[%c0_6, %c0_7] : memref<1x48xf32, #tpu.memory_space<vmem>>, vector<1x48xf32>
    %18 = vector.broadcast %17 : vector<1x48xf32> to vector<512x48xf32>
    %19 = arith.addf %16, %18 : vector<512x48xf32>
    %cst_8 = arith.constant 0.000000e+00 : f32
    %20 = vector.broadcast %cst_8 : f32 to vector<512x48xf32>
    %21 = arith.maximumf %19, %20 : vector<512x48xf32>
    %22 = vector.shape_cast %21 : vector<512x48xf32> to vector<32x16x48xf32>
    %c0_9 = arith.constant 0 : index
    %c0_10 = arith.constant 0 : index
    %23 = vector.load %arg5[%c0_9, %c0_10] : memref<16x48xf32, #tpu.memory_space<vmem>>, vector<16x48xf32>
    %24 = vector.shape_cast %23 : vector<16x48xf32> to vector<1x16x48xf32>
    %25 = vector.broadcast %24 : vector<1x16x48xf32> to vector<32x16x48xf32>
    %26 = arith.mulf %22, %25 : vector<32x16x48xf32>
    %cst_11 = arith.constant dense<0xFF800000> : vector<32x48xf32>
    %27 = vector.multi_reduction <maximumf>, %26, %cst_11 [1] : vector<32x16x48xf32> to vector<32x48xf32>
    %c0_12 = arith.constant 0 : index
    %c0_13 = arith.constant 0 : index
    %28 = vector.load %arg6[%c0_12, %c0_13] : memref<48x128xf32, #tpu.memory_space<vmem>>, vector<48x128xf32>
    %cst_14 = arith.constant dense<0.000000e+00> : vector<32x128xf32>
    %29 = tpu.matmul %27, %28, %cst_14 {dimension_numbers = #tpu.dot_dimension_numbers<[1], [0], [0], [1], [0, 0, 1, 1], [], []>} : vector<32x48xf32>, vector<48x128xf32>, vector<32x128xf32> -> vector<32x128xf32>
    %c0_15 = arith.constant 0 : index
    %c0_16 = arith.constant 0 : index
    %30 = vector.load %arg7[%c0_15, %c0_16] : memref<1x128xf32, #tpu.memory_space<vmem>>, vector<1x128xf32>
    %31 = vector.broadcast %30 : vector<1x128xf32> to vector<32x128xf32>
    %32 = arith.addf %29, %31 : vector<32x128xf32>
    %c0_17 = arith.constant 0 : index
    %c0_18 = arith.constant 0 : index
    %33 = vector.load %arg8[%c0_17, %c0_18] : memref<32x128xf32, #tpu.memory_space<vmem>>, vector<32x128xf32>
    tpu.vector_store %arg8[%c0_17, %c0_18], %32 {strides = array<i32>} : memref<32x128xf32, #tpu.memory_space<vmem>>, vector<32x128xf32>,
    return
  }
  func.func @transform_0(%arg0: i32) -> (i32, i32) {
    %c0_i32 = arith.constant 0 : i32
    %c0_i32_0 = arith.constant 0 : i32
    return %arg0, %c0_i32 : i32, i32
  }
  func.func @transform_1(%arg0: i32) -> (i32, i32) {
    %c0_i32 = arith.constant 0 : i32
    %c0_i32_0 = arith.constant 0 : i32
    %c0_i32_1 = arith.constant 0 : i32
    return %c0_i32, %c0_i32_0 : i32, i32
  }
  func.func @transform_2(%arg0: i32) -> (i32, i32) {
    %c0_i32 = arith.constant 0 : i32
    %c0_i32_0 = arith.constant 0 : i32
    %c0_i32_1 = arith.constant 0 : i32
    return %c0_i32, %c0_i32_0 : i32, i32
  }
  func.func @transform_3(%arg0: i32) -> (i32, i32) {
    %c0_i32 = arith.constant 0 : i32
    %c0_i32_0 = arith.constant 0 : i32
    %c0_i32_1 = arith.constant 0 : i32
    return %c0_i32, %c0_i32_0 : i32, i32
  }
  func.func @transform_4(%arg0: i32) -> (i32, i32) {
    %c0_i32 = arith.constant 0 : i32
    %c0_i32_0 = arith.constant 0 : i32
    %c0_i32_1 = arith.constant 0 : i32
    return %c0_i32, %c0_i32_0 : i32, i32
  }
  func.func @transform_5(%arg0: i32) -> (i32, i32) {
    %c0_i32 = arith.constant 0 : i32
    %c0_i32_0 = arith.constant 0 : i32
    %c0_i32_1 = arith.constant 0 : i32
    return %c0_i32, %c0_i32_0 : i32, i32
  }
  func.func @transform_6(%arg0: i32) -> (i32, i32) {
    %c0_i32 = arith.constant 0 : i32
    %c0_i32_0 = arith.constant 0 : i32
    %c0_i32_1 = arith.constant 0 : i32
    return %c0_i32, %c0_i32_0 : i32, i32
  }
  func.func @transform_7(%arg0: i32) -> (i32, i32) {
    %c0_i32 = arith.constant 0 : i32
    %c0_i32_0 = arith.constant 0 : i32
    return %arg0, %c0_i32 : i32, i32
  }
}

</mosaic_0001>

<llo_original>
// kernel: tpu_custom_call.1
$region0: #{tpu_custom_call.1}
  #allocation0 [shape = 'u32[]', space=smem, size = 0x4, offset = 0x4, fixed_abs, tag = 'smem constant byte address 0x4 - core index']
  #allocation1 [shape = 'u32[144,128]{1,0:T(1,128)}', space=vmem, size = 0x12000, scoped, tag = 'internal scratch']
  %s0 = inlined_call_operand.vmem [shape: s32[2048,1], index: 0, kind: input, shape index: {}]
  %s1 = inlined_call_operand.vmem [shape: bf16[128,32], index: 1, kind: input, shape index: {}]
  %s2 = inlined_call_operand.vmem [shape: bf16[160,48], index: 2, kind: input, shape index: {}]
  %s3 = inlined_call_operand.vmem [shape: f32[1,48], index: 3, kind: input, shape index: {}]
  %s4 = inlined_call_operand.vmem [shape: f32[16,48], index: 4, kind: input, shape index: {}]
  %s5 = inlined_call_operand.vmem [shape: f32[48,128], index: 5, kind: input, shape index: {}]
  %s6 = inlined_call_operand.vmem [shape: f32[1,128], index: 6, kind: input, shape index: {}]
  %s7 = inlined_call_operand.hbm [shape: f32[128,128], index: 7, kind: output, shape index: {}]
  %s8 = sld [smem:[#allocation0]]
  $region61: #{tpu_custom_call.1} parent=0
    _
  %s10 = ssub.s32 1, %s8
  %s11 = scalar_select 0, %s10, %s8
  $region1: #{tpu_custom_call.1} parent=0
    #allocation2 [shape = 'u8[32768]{0}', space=vmem, size = 0x8000, scoped, tag = 'output window, operand 0']
    #allocation3 [shape = 's32[2]{0}', space=sflag, size = 0x8, scoped, tag = 'scoped memory for tpu_custom_call.1']
    %12 = vsyncpa [#allocation3], 0
    %s13 = scalar_lea.sflag [#allocation3], 1
    %14 = vsyncpa %s13, 0
    loop: start=0, step=1, limit=6
    $region2: #{tpu_custom_call.1} parent=1 // loop_pre_header
      _
    $region3: #{tpu_custom_call.1} parent=1 // loop_header
      %s16 = sphi 0, %s20
      %p17 = scmp.ge.s32.totalorder %s16, 6
      %s26 = sphi 0, %s28
      %s29 = sphi 0, %s26
      %s30 = sphi 0, %s29
      %s46 = sphi 0, %s30
      %s50 = sphi 0, %s50
      %s52 = sphi 0, %s50
      %s53 = sphi 0, %s52
      %s67 = sphi 0, %s53
      %s71 = sphi 0, %s71
      %s73 = sphi 0, %s71
      %s74 = sphi 0, %s73
      %s88 = sphi 0, %s74
      %s92 = sphi 0, %s92
      %s94 = sphi 0, %s92
      %s95 = sphi 0, %s94
      %s109 = sphi 0, %s95
      %s113 = sphi 0, %s113
      %s115 = sphi 0, %s113
      %s116 = sphi 0, %s115
      %s130 = sphi 0, %s116
      %s134 = sphi 0, %s134
      %s136 = sphi 0, %s134
      %s137 = sphi 0, %s136
      %s151 = sphi 0, %s137
      %s155 = sphi 0, %s155
      %s157 = sphi 0, %s155
      %s158 = sphi 0, %s157
      %s172 = sphi 0, %s158
      %s178 = sphi 0, %s180
      %s181 = sphi 0, %s178
      %s182 = sphi 0, %s181
      %s198 = sphi 0, %s182
    $region4: #{tpu_custom_call.1} parent=1 // loop_header_branch
      %19 = sbr.rel (%p17) target = $region8
    $region5: #{tpu_custom_call.1} parent=1 // loop_body
      %s21 = ssub.s32 %s16, 1
      %s22 = ssub.s32 %s16, 2
      %s23 = sadd.s32 %s16, 1
      %s24 = ssub.s32 %s16, %s23
      %p25 = scmp.eq.s32.totalorder %s24, 0
      %s27 = sadd.s32 %s26, 1
      %s28 = scalar_select %p25, %s26, %s27
      %p31 = pneg %p25
      %p32 = scmp.eq.s32.totalorder %s16, 3
      %p33 = por %p31, %p32
      %p34 = scmp.ne.s32.totalorder %s26, %s29
      %p35 = scmp.eq.s32.totalorder %s16, 0
      %p36 = por %p34, %p35
      %p37 = scmp.ne.s32.totalorder %s26, %s29
      %p38 = scmp.eq.s32.totalorder %s21, 3
      %p39 = por %p37, %p38
      %p40 = scmp.ne.s32.totalorder %s29, %s30
      %p41 = scmp.eq.s32.totalorder %s21, 0
      %p42 = por %p40, %p41
      %p43 = scmp.ne.s32.totalorder %s29, %s30
      %p44 = scmp.eq.s32.totalorder %s22, 3
      %p45 = por %p43, %p44
      %p47 = scmp.ne.s32.totalorder %s30, %s46
      %p48 = scmp.eq.s32.totalorder %s22, 0
      %p49 = por %p47, %p48
      %s51 = sadd.s32 %s50, 1
      %p54 = scmp.eq.s32.totalorder %s16, 3
      %p55 = scmp.ne.s32.totalorder %s50, %s52
      %p56 = scmp.eq.s32.totalorder %s16, 0
      %p57 = por %p55, %p56
      %p58 = scmp.ne.s32.totalorder %s50, %s52
      %p59 = scmp.eq.s32.totalorder %s21, 3
      %p60 = por %p58, %p59
      %p61 = scmp.ne.s32.totalorder %s52, %s53
      %p62 = scmp.eq.s32.totalorder %s21, 0
      %p63 = por %p61, %p62
      %p64 = scmp.ne.s32.totalorder %s52, %s53
      %p65 = scmp.eq.s32.totalorder %s22, 3
      %p66 = por %p64, %p65
      %p68 = scmp.ne.s32.totalorder %s53, %s67
      %p69 = scmp.eq.s32.totalorder %s22, 0
      %p70 = por %p68, %p69
      %s72 = sadd.s32 %s71, 1
      %p75 = scmp.eq.s32.totalorder %s16, 3
      %p76 = scmp.ne.s32.totalorder %s71, %s73
      %p77 = scmp.eq.s32.totalorder %s16, 0
      %p78 = por %p76, %p77
      %p79 = scmp.ne.s32.totalorder %s71, %s73
      %p80 = scmp.eq.s32.totalorder %s21, 3
      %p81 = por %p79, %p80
      %p82 = scmp.ne.s32.totalorder %s73, %s74
      %p83 = scmp.eq.s32.totalorder %s21, 0
      %p84 = por %p82, %p83
      %p85 = scmp.ne.s32.totalorder %s73, %s74
      %p86 = scmp.eq.s32.totalorder %s22, 3
      %p87 = por %p85, %p86
      %p89 = scmp.ne.s32.totalorder %s74, %s88
      %p90 = scmp.eq.s32.totalorder %s22, 0
      %p91 = por %p89, %p90
      %s93 = sadd.s32 %s92, 1
      %p96 = scmp.eq.s32.totalorder %s16, 3
      %p97 = scmp.ne.s32.totalorder %s92, %s94
      %p98 = scmp.eq.s32.totalorder %s16, 0
      %p99 = por %p97, %p98
      %p100 = scmp.ne.s32.totalorder %s92, %s94
      %p101 = scmp.eq.s32.totalorder %s21, 3
      %p102 = por %p100, %p101
      %p103 = scmp.ne.s32.totalorder %s94, %s95
      %p104 = scmp.eq.s32.totalorder %s21, 0
      %p105 = por %p103, %p104
      %p106 = scmp.ne.s32.totalorder %s94, %s95
      %p107 = scmp.eq.s32.totalorder %s22, 3
      %p108 = por %p106, %p107
      %p110 = scmp.ne.s32.totalorder %s95, %s109
      %p111 = scmp.eq.s32.totalorder %s22, 0
      %p112 = por %p110, %p111
      %s114 = sadd.s32 %s113, 1
      %p117 = scmp.eq.s32.totalorder %s16, 3
      %p118 = scmp.ne.s32.totalorder %s113, %s115
      %p119 = scmp.eq.s32.totalorder %s16, 0
      %p120 = por %p118, %p119
      %p121 = scmp.ne.s32.totalorder %s113, %s115
      %p122 = scmp.eq.s32.totalorder %s21, 3
      %p123 = por %p121, %p122
      %p124 = scmp.ne.s32.totalorder %s115, %s116
      %p125 = scmp.eq.s32.totalorder %s21, 0
      %p126 = por %p124, %p125
      %p127 = scmp.ne.s32.totalorder %s115, %s116
      %p128 = scmp.eq.s32.totalorder %s22, 3
      %p129 = por %p127, %p128
      %p131 = scmp.ne.s32.totalorder %s116, %s130
      %p132 = scmp.eq.s32.totalorder %s22, 0
      %p133 = por %p131, %p132
      %s135 = sadd.s32 %s134, 1
      %p138 = scmp.eq.s32.totalorder %s16, 3
      %p139 = scmp.ne.s32.totalorder %s134, %s136
      %p140 = scmp.eq.s32.totalorder %s16, 0
      %p141 = por %p139, %p140
      %p142 = scmp.ne.s32.totalorder %s134, %s136
      %p143 = scmp.eq.s32.totalorder %s21, 3
      %p144 = por %p142, %p143
      %p145 = scmp.ne.s32.totalorder %s136, %s137
      %p146 = scmp.eq.s32.totalorder %s21, 0
      %p147 = por %p145, %p146
      %p148 = scmp.ne.s32.totalorder %s136, %s137
      %p149 = scmp.eq.s32.totalorder %s22, 3
      %p150 = por %p148, %p149
      %p152 = scmp.ne.s32.totalorder %s137, %s151
      %p153 = scmp.eq.s32.totalorder %s22, 0
      %p154 = por %p152, %p153
      %s156 = sadd.s32 %s155, 1
      %p159 = scmp.eq.s32.totalorder %s16, 3
      %p160 = scmp.ne.s32.totalorder %s155, %s157
      %p161 = scmp.eq.s32.totalorder %s16, 0
      %p162 = por %p160, %p161
      %p163 = scmp.ne.s32.totalorder %s155, %s157
      %p164 = scmp.eq.s32.totalorder %s21, 3
      %p165 = por %p163, %p164
      %p166 = scmp.ne.s32.totalorder %s157, %s158
      %p167 = scmp.eq.s32.totalorder %s21, 0
      %p168 = por %p166, %p167
      %p169 = scmp.ne.s32.totalorder %s157, %s158
      %p170 = scmp.eq.s32.totalorder %s22, 3
      %p171 = por %p169, %p170
      %p173 = scmp.ne.s32.totalorder %s158, %s172
      %p174 = scmp.eq.s32.totalorder %s22, 0
      %p175 = por %p173, %p174
      %s176 = ssub.s32 %s16, %s23
      %p177 = scmp.eq.s32.totalorder %s176, 0
      %s179 = sadd.s32 %s178, 1
      %s180 = scalar_select %p177, %s178, %s179
      %p183 = pneg %p177
      %p184 = scmp.eq.s32.totalorder %s16, 3
      %p185 = por %p183, %p184
      %p186 = scmp.ne.s32.totalorder %s178, %s181
      %p187 = scmp.eq.s32.totalorder %s16, 0
      %p188 = por %p186, %p187
      %p189 = scmp.ne.s32.totalorder %s178, %s181
      %p190 = scmp.eq.s32.totalorder %s21, 3
      %p191 = por %p189, %p190
      %p192 = scmp.ne.s32.totalorder %s181, %s182
      %p193 = scmp.eq.s32.totalorder %s21, 0
      %p194 = por %p192, %p193
      %p195 = scmp.ne.s32.totalorder %s181, %s182
      %p196 = scmp.eq.s32.totalorder %s22, 3
      %p197 = por %p195, %p196
      %p199 = scmp.ne.s32.totalorder %s182, %s198
      %p200 = scmp.eq.s32.totalorder %s22, 0
      %p201 = por %p199, %p200
      %p202 = scmp.le.s32.totalorder 1, %s16
      %p203 = scmp.lt.s32.totalorder %s16, 5
      %p204 = pnand %p202, %p203
      %p205 = pneg %p204
      // Predicated region
      $region9: #{tpu_custom_call.1} parent=5 // pred_check
        _
      $region10: #{tpu_custom_call.1} parent=5 // pred_check_branch
        %207 = sbr.rel (%p204) target = $region12
      $region11: #{tpu_custom_call.1} parent=5 // pred_region
        %s208 = ssub.s32 %s16, 1
        // Predicated region
        $region13: #{tpu_custom_call.1} parent=11 // pred_check
          %p209 = pneg %p63
        $region14: #{tpu_custom_call.1} parent=11 // pred_check_branch
          %211 = sbr.rel (%p209) target = $region16
        $region15: #{tpu_custom_call.1} parent=11 // pred_region
          _
        $region16: #{tpu_custom_call.1} parent=11 // pred_fallthru
          _
        // Predicated region
        $region17: #{tpu_custom_call.1} parent=11 // pred_check
          %p212 = pneg %p84
        $region18: #{tpu_custom_call.1} parent=11 // pred_check_branch
          %214 = sbr.rel (%p212) target = $region20
        $region19: #{tpu_custom_call.1} parent=11 // pred_region
          _
        $region20: #{tpu_custom_call.1} parent=11 // pred_fallthru
          _
        // Predicated region
        $region21: #{tpu_custom_call.1} parent=11 // pred_check
          %p215 = pneg %p105
        $region22: #{tpu_custom_call.1} parent=11 // pred_check_branch
          %217 = sbr.rel (%p215) target = $region24
        $region23: #{tpu_custom_call.1} parent=11 // pred_region
          _
        $region24: #{tpu_custom_call.1} parent=11 // pred_fallthru
          _
        // Predicated region
        $region25: #{tpu_custom_call.1} parent=11 // pred_check
          %p218 = pneg %p126
        $region26: #{tpu_custom_call.1} parent=11 // pred_check_branch
          %220 = sbr.rel (%p218) target = $region28
        $region27: #{tpu_custom_call.1} parent=11 // pred_region
          _
        $region28: #{tpu_custom_call.1} parent=11 // pred_fallthru
          _
        // Predicated region
        $region29: #{tpu_custom_call.1} parent=11 // pred_check
          %p221 = pneg %p147
        $region30: #{tpu_custom_call.1} parent=11 // pred_check_branch
          %223 = sbr.rel (%p221) target = $region32
        $region31: #{tpu_custom_call.1} parent=11 // pred_region
          _
        $region32: #{tpu_custom_call.1} parent=11 // pred_fallthru
          _
        // Predicated region
        $region33: #{tpu_custom_call.1} parent=11 // pred_check
          %p224 = pneg %p168
        $region34: #{tpu_custom_call.1} parent=11 // pred_check_branch
          %226 = sbr.rel (%p224) target = $region36
        $region35: #{tpu_custom_call.1} parent=11 // pred_region
          _
        $region36: #{tpu_custom_call.1} parent=11 // pred_fallthru
          _
      $region12: #{tpu_custom_call.1} parent=5 // pred_fallthru
        _
      %p227 = scmp.lt.s32.totalorder %s16, 4
      // Predicated region
      $region37: #{tpu_custom_call.1} parent=5 // pred_check
        %p228 = pneg %p227
      $region38: #{tpu_custom_call.1} parent=5 // pred_check_branch
        %230 = sbr.rel (%p228) target = $region40
      $region39: #{tpu_custom_call.1} parent=5 // pred_region
        // Predicated region
        $region41: #{tpu_custom_call.1} parent=39 // pred_check
          %p231 = pneg %p36
        $region42: #{tpu_custom_call.1} parent=39 // pred_check_branch
          %233 = sbr.rel (%p231) target = $region44
        $region43: #{tpu_custom_call.1} parent=39 // pred_region
          %s234 = smul.u32 64, %s16
          %p235 = scmp.lt.s32.totalorder %s234, 255
          %s236 = scalar_select %p235, %s234, 255
          %s237 = smul.addr %s236, 8
          %s238 = scalar_lea.vmem %s0, %s237
          %s239 = smul.u32 64, %s16
        $region44: #{tpu_custom_call.1} parent=39 // pred_fallthru
          _
      $region40: #{tpu_custom_call.1} parent=5 // pred_fallthru
        _
      %p240 = scmp.le.s32.totalorder 1, %s16
      %p241 = scmp.lt.s32.totalorder %s16, 5
      %p242 = pnand %p240, %p241
      %p243 = pneg %p242
      // Predicated region
      $region45: #{tpu_custom_call.1} parent=5 // pred_check
        _
      $region46: #{tpu_custom_call.1} parent=5 // pred_check_branch
        %245 = sbr.rel (%p242) target = $region48
      $region47: #{tpu_custom_call.1} parent=5 // pred_region
        %s246 = ssub.s32 %s16, 1
        %s247 = smul.u32 64, %s21
        %p248 = scmp.lt.s32.totalorder %s247, 255
        %s249 = scalar_select %p248, %s247, 255
        %s250 = smul.addr %s249, 8
        %s251 = scalar_lea.vmem %s0, %s250
        %p252 = pneg %p42
        %p253 = pneg %p39
        %p254 = pneg %p63
        %p255 = pneg %p60
        %p256 = pneg %p84
        %p257 = pneg %p81
        %p258 = pneg %p105
        %p259 = pneg %p102
        %p260 = pneg %p126
        %p261 = pneg %p123
        %p262 = pneg %p147
        %p263 = pneg %p144
        %p264 = pneg %p168
        %p265 = pneg %p165
        %p266 = pneg %p194
        %p267 = pneg %p191
        %s268 = sand.u32 %s181, 1
        %s269 = scalar_lea.sflag [#allocation3], %s268
        %s270 = sand.u32 %s181, 1
        %s271 = smul.addr %s270, 32
        %s272 = scalar_lea.vmem [#allocation2], %s271
        %s273 = smul.u32 64, %s21
        %p274 = scmp.lt.s32.totalorder %s273, 255
        %s275 = scalar_select %p274, %s273, 255
        %s276 = smul.addr %s275, 8
        %s277 = scalar_lea.vmem %s0, %s276
        %s278 = smul.u32 64, %s21
        %s279 = smul.u32 4, %s21
        %v281 = vld [vmem:[%s277] sm:$0xff]
        %v282 = vld [vmem:[%s277 + $0x8] sm:$0xff]
        %v283 = vld [vmem:[%s277 + $0x10] sm:$0xff]
        %v284 = vld [vmem:[%s277 + $0x18] sm:$0xff]
        %v285 = vld [vmem:[%s277 + $0x20] sm:$0xff]
        %v286 = vld [vmem:[%s277 + $0x28] sm:$0xff]
        %v287 = vld [vmem:[%s277 + $0x30] sm:$0xff]
        %v288 = vld [vmem:[%s277 + $0x38] sm:$0xff]
        %v289 = vld [vmem:[%s277 + $0x40] sm:$0xff]
        %v290 = vld [vmem:[%s277 + $0x48] sm:$0xff]
        %v291 = vld [vmem:[%s277 + $0x50] sm:$0xff]
        %v292 = vld [vmem:[%s277 + $0x58] sm:$0xff]
        %v293 = vld [vmem:[%s277 + $0x60] sm:$0xff]
        %v294 = vld [vmem:[%s277 + $0x68] sm:$0xff]
        %v295 = vld [vmem:[%s277 + $0x70] sm:$0xff]
        %v296 = vld [vmem:[%s277 + $0x78] sm:$0xff]
        %v297 = vld [vmem:[%s277 + $0x80] sm:$0xff]
        %v298 = vld [vmem:[%s277 + $0x88] sm:$0xff]
        %v299 = vld [vmem:[%s277 + $0x90] sm:$0xff]
        %v300 = vld [vmem:[%s277 + $0x98] sm:$0xff]
        %v301 = vld [vmem:[%s277 + $0xa0] sm:$0xff]
        %v302 = vld [vmem:[%s277 + $0xa8] sm:$0xff]
        %v303 = vld [vmem:[%s277 + $0xb0] sm:$0xff]
        %v304 = vld [vmem:[%s277 + $0xb8] sm:$0xff]
        %v305 = vld [vmem:[%s277 + $0xc0] sm:$0xff]
        %v306 = vld [vmem:[%s277 + $0xc8] sm:$0xff]
        %v307 = vld [vmem:[%s277 + $0xd0] sm:$0xff]
        %v308 = vld [vmem:[%s277 + $0xd8] sm:$0xff]
        %v309 = vld [vmem:[%s277 + $0xe0] sm:$0xff]
        %v310 = vld [vmem:[%s277 + $0xe8] sm:$0xff]
        %v311 = vld [vmem:[%s277 + $0xf0] sm:$0xff]
        %v312 = vld [vmem:[%s277 + $0xf8] sm:$0xff]
        %v313 = vld [vmem:[%s277 + $0x100] sm:$0xff]
        %v314 = vld [vmem:[%s277 + $0x108] sm:$0xff]
        %v315 = vld [vmem:[%s277 + $0x110] sm:$0xff]
        %v316 = vld [vmem:[%s277 + $0x118] sm:$0xff]
        %v317 = vld [vmem:[%s277 + $0x120] sm:$0xff]
        %v318 = vld [vmem:[%s277 + $0x128] sm:$0xff]
        %v319 = vld [vmem:[%s277 + $0x130] sm:$0xff]
        %v320 = vld [vmem:[%s277 + $0x138] sm:$0xff]
        %v321 = vld [vmem:[%s277 + $0x140] sm:$0xff]
        %v322 = vld [vmem:[%s277 + $0x148] sm:$0xff]
        %v323 = vld [vmem:[%s277 + $0x150] sm:$0xff]
        %v324 = vld [vmem:[%s277 + $0x158] sm:$0xff]
        %v325 = vld [vmem:[%s277 + $0x160] sm:$0xff]
        %v326 = vld [vmem:[%s277 + $0x168] sm:$0xff]
        %v327 = vld [vmem:[%s277 + $0x170] sm:$0xff]
        %v328 = vld [vmem:[%s277 + $0x178] sm:$0xff]
        %v329 = vld [vmem:[%s277 + $0x180] sm:$0xff]
        %v330 = vld [vmem:[%s277 + $0x188] sm:$0xff]
        %v331 = vld [vmem:[%s277 + $0x190] sm:$0xff]
        %v332 = vld [vmem:[%s277 + $0x198] sm:$0xff]
        %v333 = vld [vmem:[%s277 + $0x1a0] sm:$0xff]
        %v334 = vld [vmem:[%s277 + $0x1a8] sm:$0xff]
        %v335 = vld [vmem:[%s277 + $0x1b0] sm:$0xff]
        %v336 = vld [vmem:[%s277 + $0x1b8] sm:$0xff]
        %v337 = vld [vmem:[%s277 + $0x1c0] sm:$0xff]
        %v338 = vld [vmem:[%s277 + $0x1c8] sm:$0xff]
        %v339 = vld [vmem:[%s277 + $0x1d0] sm:$0xff]
        %v340 = vld [vmem:[%s277 + $0x1d8] sm:$0xff]
        %v341 = vld [vmem:[%s277 + $0x1e0] sm:$0xff]
        %v342 = vld [vmem:[%s277 + $0x1e8] sm:$0xff]
        %v343 = vld [vmem:[%s277 + $0x1f0] sm:$0xff]
        %v344 = vld [vmem:[%s277 + $0x1f8] sm:$0xff]
        %v345 = vlaneseq
        %v346 = vand.u32 %v345, 127
        %347 = vset.pattern.permute.xlu0 0
        %348 = vperm.xlu0 %347, %v281
        %v349 = vpop.permute.xlu0 %348
        %350 = vset.pattern.permute.xlu0 0
        %351 = vperm.xlu0 %350, %v282
        %v352 = vpop.permute.xlu0 %351
        %353 = vset.pattern.permute.xlu0 0
        %354 = vperm.xlu0 %353, %v283
        %v355 = vpop.permute.xlu0 %354
        %356 = vset.pattern.permute.xlu0 0
        %357 = vperm.xlu0 %356, %v284
        %v358 = vpop.permute.xlu0 %357
        %359 = vset.pattern.permute.xlu0 0
        %360 = vperm.xlu0 %359, %v285
        %v361 = vpop.permute.xlu0 %360
        %362 = vset.pattern.permute.xlu0 0
        %363 = vperm.xlu0 %362, %v286
        %v364 = vpop.permute.xlu0 %363
        %365 = vset.pattern.permute.xlu0 0
        %366 = vperm.xlu0 %365, %v287
        %v367 = vpop.permute.xlu0 %366
        %368 = vset.pattern.permute.xlu0 0
        %369 = vperm.xlu0 %368, %v288
        %v370 = vpop.permute.xlu0 %369
        %371 = vset.pattern.permute.xlu0 0
        %372 = vperm.xlu0 %371, %v289
        %v373 = vpop.permute.xlu0 %372
        %374 = vset.pattern.permute.xlu0 0
        %375 = vperm.xlu0 %374, %v290
        %v376 = vpop.permute.xlu0 %375
        %377 = vset.pattern.permute.xlu0 0
        %378 = vperm.xlu0 %377, %v291
        %v379 = vpop.permute.xlu0 %378
        %380 = vset.pattern.permute.xlu0 0
        %381 = vperm.xlu0 %380, %v292
        %v382 = vpop.permute.xlu0 %381
        %383 = vset.pattern.permute.xlu0 0
        %384 = vperm.xlu0 %383, %v293
        %v385 = vpop.permute.xlu0 %384
        %386 = vset.pattern.permute.xlu0 0
        %387 = vperm.xlu0 %386, %v294
        %v388 = vpop.permute.xlu0 %387
        %389 = vset.pattern.permute.xlu0 0
        %390 = vperm.xlu0 %389, %v295
        %v391 = vpop.permute.xlu0 %390
        %392 = vset.pattern.permute.xlu0 0
        %393 = vperm.xlu0 %392, %v296
        %v394 = vpop.permute.xlu0 %393
        %395 = vset.pattern.permute.xlu0 0
        %396 = vperm.xlu0 %395, %v297
        %v397 = vpop.permute.xlu0 %396
        %398 = vset.pattern.permute.xlu0 0
        %399 = vperm.xlu0 %398, %v298
        %v400 = vpop.permute.xlu0 %399
        %401 = vset.pattern.permute.xlu0 0
        %402 = vperm.xlu0 %401, %v299
        %v403 = vpop.permute.xlu0 %402
        %404 = vset.pattern.permute.xlu0 0
        %405 = vperm.xlu0 %404, %v300
        %v406 = vpop.permute.xlu0 %405
        %407 = vset.pattern.permute.xlu0 0
        %408 = vperm.xlu0 %407, %v301
        %v409 = vpop.permute.xlu0 %408
        %410 = vset.pattern.permute.xlu0 0
        %411 = vperm.xlu0 %410, %v302
        %v412 = vpop.permute.xlu0 %411
        %413 = vset.pattern.permute.xlu0 0
        %414 = vperm.xlu0 %413, %v303
        %v415 = vpop.permute.xlu0 %414
        %416 = vset.pattern.permute.xlu0 0
        %417 = vperm.xlu0 %416, %v304
        %v418 = vpop.permute.xlu0 %417
        %419 = vset.pattern.permute.xlu0 0
        %420 = vperm.xlu0 %419, %v305
        %v421 = vpop.permute.xlu0 %420
        %422 = vset.pattern.permute.xlu0 0
        %423 = vperm.xlu0 %422, %v306
        %v424 = vpop.permute.xlu0 %423
        %425 = vset.pattern.permute.xlu0 0
        %426 = vperm.xlu0 %425, %v307
        %v427 = vpop.permute.xlu0 %426
        %428 = vset.pattern.permute.xlu0 0
        %429 = vperm.xlu0 %428, %v308
        %v430 = vpop.permute.xlu0 %429
        %431 = vset.pattern.permute.xlu0 0
        %432 = vperm.xlu0 %431, %v309
        %v433 = vpop.permute.xlu0 %432
        %434 = vset.pattern.permute.xlu0 0
        %435 = vperm.xlu0 %434, %v310
        %v436 = vpop.permute.xlu0 %435
        %437 = vset.pattern.permute.xlu0 0
        %438 = vperm.xlu0 %437, %v311
        %v439 = vpop.permute.xlu0 %438
        %440 = vset.pattern.permute.xlu0 0
        %441 = vperm.xlu0 %440, %v312
        %v442 = vpop.permute.xlu0 %441
        %443 = vset.pattern.permute.xlu0 0
        %444 = vperm.xlu0 %443, %v313
        %v445 = vpop.permute.xlu0 %444
        %446 = vset.pattern.permute.xlu0 0
        %447 = vperm.xlu0 %446, %v314
        %v448 = vpop.permute.xlu0 %447
        %449 = vset.pattern.permute.xlu0 0
        %450 = vperm.xlu0 %449, %v315
        %v451 = vpop.permute.xlu0 %450
        %452 = vset.pattern.permute.xlu0 0
        %453 = vperm.xlu0 %452, %v316
        %v454 = vpop.permute.xlu0 %453
        %455 = vset.pattern.permute.xlu0 0
        %456 = vperm.xlu0 %455, %v317
        %v457 = vpop.permute.xlu0 %456
        %458 = vset.pattern.permute.xlu0 0
        %459 = vperm.xlu0 %458, %v318
        %v460 = vpop.permute.xlu0 %459
        %461 = vset.pattern.permute.xlu0 0
        %462 = vperm.xlu0 %461, %v319
        %v463 = vpop.permute.xlu0 %462
        %464 = vset.pattern.permute.xlu0 0
        %465 = vperm.xlu0 %464, %v320
        %v466 = vpop.permute.xlu0 %465
        %467 = vset.pattern.permute.xlu0 0
        %468 = vperm.xlu0 %467, %v321
        %v469 = vpop.permute.xlu0 %468
        %470 = vset.pattern.permute.xlu0 0
        %471 = vperm.xlu0 %470, %v322
        %v472 = vpop.permute.xlu0 %471
        %473 = vset.pattern.permute.xlu0 0
        %474 = vperm.xlu0 %473, %v323
        %v475 = vpop.permute.xlu0 %474
        %476 = vset.pattern.permute.xlu0 0
        %477 = vperm.xlu0 %476, %v324
        %v478 = vpop.permute.xlu0 %477
        %479 = vset.pattern.permute.xlu0 0
        %480 = vperm.xlu0 %479, %v325
        %v481 = vpop.permute.xlu0 %480
        %482 = vset.pattern.permute.xlu0 0
        %483 = vperm.xlu0 %482, %v326
        %v484 = vpop.permute.xlu0 %483
        %485 = vset.pattern.permute.xlu0 0
        %486 = vperm.xlu0 %485, %v327
        %v487 = vpop.permute.xlu0 %486
        %488 = vset.pattern.permute.xlu0 0
        %489 = vperm.xlu0 %488, %v328
        %v490 = vpop.permute.xlu0 %489
        %491 = vset.pattern.permute.xlu0 0
        %492 = vperm.xlu0 %491, %v329
        %v493 = vpop.permute.xlu0 %492
        %494 = vset.pattern.permute.xlu0 0
        %495 = vperm.xlu0 %494, %v330
        %v496 = vpop.permute.xlu0 %495
        %497 = vset.pattern.permute.xlu0 0
        %498 = vperm.xlu0 %497, %v331
        %v499 = vpop.permute.xlu0 %498
        %500 = vset.pattern.permute.xlu0 0
        %501 = vperm.xlu0 %500, %v332
        %v502 = vpop.permute.xlu0 %501
        %503 = vset.pattern.permute.xlu0 0
        %504 = vperm.xlu0 %503, %v333
        %v505 = vpop.permute.xlu0 %504
        %506 = vset.pattern.permute.xlu0 0
        %507 = vperm.xlu0 %506, %v334
        %v508 = vpop.permute.xlu0 %507
        %509 = vset.pattern.permute.xlu0 0
        %510 = vperm.xlu0 %509, %v335
        %v511 = vpop.permute.xlu0 %510
        %512 = vset.pattern.permute.xlu0 0
        %513 = vperm.xlu0 %512, %v336
        %v514 = vpop.permute.xlu0 %513
        %515 = vset.pattern.permute.xlu0 0
        %516 = vperm.xlu0 %515, %v337
        %v517 = vpop.permute.xlu0 %516
        %518 = vset.pattern.permute.xlu0 0
        %519 = vperm.xlu0 %518, %v338
        %v520 = vpop.permute.xlu0 %519
        %521 = vset.pattern.permute.xlu0 0
        %522 = vperm.xlu0 %521, %v339
        %v523 = vpop.permute.xlu0 %522
        %524 = vset.pattern.permute.xlu0 0
        %525 = vperm.xlu0 %524, %v340
        %v526 = vpop.permute.xlu0 %525
        %527 = vset.pattern.permute.xlu0 0
        %528 = vperm.xlu0 %527, %v341
        %v529 = vpop.permute.xlu0 %528
        %530 = vset.pattern.permute.xlu0 0
        %531 = vperm.xlu0 %530, %v342
        %v532 = vpop.permute.xlu0 %531
        %533 = vset.pattern.permute.xlu0 0
        %534 = vperm.xlu0 %533, %v343
        %v535 = vpop.permute.xlu0 %534
        %536 = vset.pattern.permute.xlu0 0
        %537 = vperm.xlu0 %536, %v344
        %v538 = vpop.permute.xlu0 %537
        %vm539 = vcmp.eq.s32.totalorder %v349, %v346
        %vm540 = vcmp.eq.s32.totalorder %v352, %v346
        %vm541 = vcmp.eq.s32.totalorder %v355, %v346
        %vm542 = vcmp.eq.s32.totalorder %v358, %v346
        %vm543 = vcmp.eq.s32.totalorder %v361, %v346
        %vm544 = vcmp.eq.s32.totalorder %v364, %v346
        %vm545 = vcmp.eq.s32.totalorder %v367, %v346
        %vm546 = vcmp.eq.s32.totalorder %v370, %v346
        %vm547 = vcmp.eq.s32.totalorder %v373, %v346
        %vm548 = vcmp.eq.s32.totalorder %v376, %v346
        %vm549 = vcmp.eq.s32.totalorder %v379, %v346
        %vm550 = vcmp.eq.s32.totalorder %v382, %v346
        %vm551 = vcmp.eq.s32.totalorder %v385, %v346
        %vm552 = vcmp.eq.s32.totalorder %v388, %v346
        %vm553 = vcmp.eq.s32.totalorder %v391, %v346
        %vm554 = vcmp.eq.s32.totalorder %v394, %v346
        %vm555 = vcmp.eq.s32.totalorder %v397, %v346
        %vm556 = vcmp.eq.s32.totalorder %v400, %v346
        %vm557 = vcmp.eq.s32.totalorder %v403, %v346
        %vm558 = vcmp.eq.s32.totalorder %v406, %v346
        %vm559 = vcmp.eq.s32.totalorder %v409, %v346
        %vm560 = vcmp.eq.s32.totalorder %v412, %v346
        %vm561 = vcmp.eq.s32.totalorder %v415, %v346
        %vm562 = vcmp.eq.s32.totalorder %v418, %v346
        %vm563 = vcmp.eq.s32.totalorder %v421, %v346
        %vm564 = vcmp.eq.s32.totalorder %v424, %v346
        %vm565 = vcmp.eq.s32.totalorder %v427, %v346
        %vm566 = vcmp.eq.s32.totalorder %v430, %v346
        %vm567 = vcmp.eq.s32.totalorder %v433, %v346
        %vm568 = vcmp.eq.s32.totalorder %v436, %v346
        %vm569 = vcmp.eq.s32.totalorder %v439, %v346
        %vm570 = vcmp.eq.s32.totalorder %v442, %v346
        %vm571 = vcmp.eq.s32.totalorder %v445, %v346
        %vm572 = vcmp.eq.s32.totalorder %v448, %v346
        %vm573 = vcmp.eq.s32.totalorder %v451, %v346
        %vm574 = vcmp.eq.s32.totalorder %v454, %v346
        %vm575 = vcmp.eq.s32.totalorder %v457, %v346
        %vm576 = vcmp.eq.s32.totalorder %v460, %v346
        %vm577 = vcmp.eq.s32.totalorder %v463, %v346
        %vm578 = vcmp.eq.s32.totalorder %v466, %v346
        %vm579 = vcmp.eq.s32.totalorder %v469, %v346
        %vm580 = vcmp.eq.s32.totalorder %v472, %v346
        %vm581 = vcmp.eq.s32.totalorder %v475, %v346
        %vm582 = vcmp.eq.s32.totalorder %v478, %v346
        %vm583 = vcmp.eq.s32.totalorder %v481, %v346
        %vm584 = vcmp.eq.s32.totalorder %v484, %v346
        %vm585 = vcmp.eq.s32.totalorder %v487, %v346
        %vm586 = vcmp.eq.s32.totalorder %v490, %v346
        %vm587 = vcmp.eq.s32.totalorder %v493, %v346
        %vm588 = vcmp.eq.s32.totalorder %v496, %v346
        %vm589 = vcmp.eq.s32.totalorder %v499, %v346
        %vm590 = vcmp.eq.s32.totalorder %v502, %v346
        %vm591 = vcmp.eq.s32.totalorder %v505, %v346
        %vm592 = vcmp.eq.s32.totalorder %v508, %v346
        %vm593 = vcmp.eq.s32.totalorder %v511, %v346
        %vm594 = vcmp.eq.s32.totalorder %v514, %v346
        %vm595 = vcmp.eq.s32.totalorder %v517, %v346
        %vm596 = vcmp.eq.s32.totalorder %v520, %v346
        %vm597 = vcmp.eq.s32.totalorder %v523, %v346
        %vm598 = vcmp.eq.s32.totalorder %v526, %v346
        %vm599 = vcmp.eq.s32.totalorder %v529, %v346
        %vm600 = vcmp.eq.s32.totalorder %v532, %v346
        %vm601 = vcmp.eq.s32.totalorder %v535, %v346
        %vm602 = vcmp.eq.s32.totalorder %v538, %v346
        %v603 = vsel %vm539, 1, 0
        %v604 = vsel %vm540, 1, 0
        %v605 = vsel %vm541, 1, 0
        %v606 = vsel %vm542, 1, 0
        %v607 = vsel %vm543, 1, 0
        %v608 = vsel %vm544, 1, 0
        %v609 = vsel %vm545, 1, 0
        %v610 = vsel %vm546, 1, 0
        %v611 = vsel %vm547, 1, 0
        %v612 = vsel %vm548, 1, 0
        %v613 = vsel %vm549, 1, 0
        %v614 = vsel %vm550, 1, 0
        %v615 = vsel %vm551, 1, 0
        %v616 = vsel %vm552, 1, 0
        %v617 = vsel %vm553, 1, 0
        %v618 = vsel %vm554, 1, 0
        %v619 = vsel %vm555, 1, 0
        %v620 = vsel %vm556, 1, 0
        %v621 = vsel %vm557, 1, 0
        %v622 = vsel %vm558, 1, 0
        %v623 = vsel %vm559, 1, 0
        %v624 = vsel %vm560, 1, 0
        %v625 = vsel %vm561, 1, 0
        %v626 = vsel %vm562, 1, 0
        %v627 = vsel %vm563, 1, 0
        %v628 = vsel %vm564, 1, 0
        %v629 = vsel %vm565, 1, 0
        %v630 = vsel %vm566, 1, 0
        %v631 = vsel %vm567, 1, 0
        %v632 = vsel %vm568, 1, 0
        %v633 = vsel %vm569, 1, 0
        %v634 = vsel %vm570, 1, 0
        %v635 = vsel %vm571, 1, 0
        %v636 = vsel %vm572, 1, 0
        %v637 = vsel %vm573, 1, 0
        %v638 = vsel %vm574, 1, 0
        %v639 = vsel %vm575, 1, 0
        %v640 = vsel %vm576, 1, 0
        %v641 = vsel %vm577, 1, 0
        %v642 = vsel %vm578, 1, 0
        %v643 = vsel %vm579, 1, 0
        %v644 = vsel %vm580, 1, 0
        %v645 = vsel %vm581, 1, 0
        %v646 = vsel %vm582, 1, 0
        %v647 = vsel %vm583, 1, 0
        %v648 = vsel %vm584, 1, 0
        %v649 = vsel %vm585, 1, 0
        %v650 = vsel %vm586, 1, 0
        %v651 = vsel %vm587, 1, 0
        %v652 = vsel %vm588, 1, 0
        %v653 = vsel %vm589, 1, 0
        %v654 = vsel %vm590, 1, 0
        %v655 = vsel %vm591, 1, 0
        %v656 = vsel %vm592, 1, 0
        %v657 = vsel %vm593, 1, 0
        %v658 = vsel %vm594, 1, 0
        %v659 = vsel %vm595, 1, 0
        %v660 = vsel %vm596, 1, 0
        %v661 = vsel %vm597, 1, 0
        %v662 = vsel %vm598, 1, 0
        %v663 = vsel %vm599, 1, 0
        %v664 = vsel %vm600, 1, 0
        %v665 = vsel %vm601, 1, 0
        %v666 = vsel %vm602, 1, 0
        %v667 = vcvt.s32.f32 %v603
        %v668 = vcvt.s32.f32 %v604
        %v669 = vcvt.s32.f32 %v605
        %v670 = vcvt.s32.f32 %v606
        %v671 = vcvt.s32.f32 %v607
        %v672 = vcvt.s32.f32 %v608
        %v673 = vcvt.s32.f32 %v609
        %v674 = vcvt.s32.f32 %v610
        %v675 = vcvt.s32.f32 %v611
        %v676 = vcvt.s32.f32 %v612
        %v677 = vcvt.s32.f32 %v613
        %v678 = vcvt.s32.f32 %v614
        %v679 = vcvt.s32.f32 %v615
        %v680 = vcvt.s32.f32 %v616
        %v681 = vcvt.s32.f32 %v617
        %v682 = vcvt.s32.f32 %v618
        %v683 = vcvt.s32.f32 %v619
        %v684 = vcvt.s32.f32 %v620
        %v685 = vcvt.s32.f32 %v621
        %v686 = vcvt.s32.f32 %v622
        %v687 = vcvt.s32.f32 %v623
        %v688 = vcvt.s32.f32 %v624
        %v689 = vcvt.s32.f32 %v625
        %v690 = vcvt.s32.f32 %v626
        %v691 = vcvt.s32.f32 %v627
        %v692 = vcvt.s32.f32 %v628
        %v693 = vcvt.s32.f32 %v629
        %v694 = vcvt.s32.f32 %v630
        %v695 = vcvt.s32.f32 %v631
        %v696 = vcvt.s32.f32 %v632
        %v697 = vcvt.s32.f32 %v633
        %v698 = vcvt.s32.f32 %v634
        %v699 = vcvt.s32.f32 %v635
        %v700 = vcvt.s32.f32 %v636
        %v701 = vcvt.s32.f32 %v637
        %v702 = vcvt.s32.f32 %v638
        %v703 = vcvt.s32.f32 %v639
        %v704 = vcvt.s32.f32 %v640
        %v705 = vcvt.s32.f32 %v641
        %v706 = vcvt.s32.f32 %v642
        %v707 = vcvt.s32.f32 %v643
        %v708 = vcvt.s32.f32 %v644
        %v709 = vcvt.s32.f32 %v645
        %v710 = vcvt.s32.f32 %v646
        %v711 = vcvt.s32.f32 %v647
        %v712 = vcvt.s32.f32 %v648
        %v713 = vcvt.s32.f32 %v649
        %v714 = vcvt.s32.f32 %v650
        %v715 = vcvt.s32.f32 %v651
        %v716 = vcvt.s32.f32 %v652
        %v717 = vcvt.s32.f32 %v653
        %v718 = vcvt.s32.f32 %v654
        %v719 = vcvt.s32.f32 %v655
        %v720 = vcvt.s32.f32 %v656
        %v721 = vcvt.s32.f32 %v657
        %v722 = vcvt.s32.f32 %v658
        %v723 = vcvt.s32.f32 %v659
        %v724 = vcvt.s32.f32 %v660
        %v725 = vcvt.s32.f32 %v661
        %v726 = vcvt.s32.f32 %v662
        %v727 = vcvt.s32.f32 %v663
        %v728 = vcvt.s32.f32 %v664
        %v729 = vcvt.s32.f32 %v665
        %v730 = vcvt.s32.f32 %v666
        %v731 = vpack.c.bf16 %v668, %v667
        %v732 = vpack.c.bf16 %v670, %v669
        %v733 = vpack.c.bf16 %v672, %v671
        %v734 = vpack.c.bf16 %v674, %v673
        %v735 = vpack.c.bf16 %v676, %v675
        %v736 = vpack.c.bf16 %v678, %v677
        %v737 = vpack.c.bf16 %v680, %v679
        %v738 = vpack.c.bf16 %v682, %v681
        %v739 = vpack.c.bf16 %v684, %v683
        %v740 = vpack.c.bf16 %v686, %v685
        %v741 = vpack.c.bf16 %v688, %v687
        %v742 = vpack.c.bf16 %v690, %v689
        %v743 = vpack.c.bf16 %v692, %v691
        %v744 = vpack.c.bf16 %v694, %v693
        %v745 = vpack.c.bf16 %v696, %v695
        %v746 = vpack.c.bf16 %v698, %v697
        %v747 = vpack.c.bf16 %v700, %v699
        %v748 = vpack.c.bf16 %v702, %v701
        %v749 = vpack.c.bf16 %v704, %v703
        %v750 = vpack.c.bf16 %v706, %v705
        %v751 = vpack.c.bf16 %v708, %v707
        %v752 = vpack.c.bf16 %v710, %v709
        %v753 = vpack.c.bf16 %v712, %v711
        %v754 = vpack.c.bf16 %v714, %v713
        %v755 = vpack.c.bf16 %v716, %v715
        %v756 = vpack.c.bf16 %v718, %v717
        %v757 = vpack.c.bf16 %v720, %v719
        %v758 = vpack.c.bf16 %v722, %v721
        %v759 = vpack.c.bf16 %v724, %v723
        %v760 = vpack.c.bf16 %v726, %v725
        %v761 = vpack.c.bf16 %v728, %v727
        %v762 = vpack.c.bf16 %v730, %v729
        %v763 = vld [vmem:[%s1] sm:$0xf]
        %v764 = vld [vmem:[%s1 + $0x4] sm:$0xf]
        %v765 = vld [vmem:[%s1 + $0x8] sm:$0xf]
        %v766 = vld [vmem:[%s1 + $0xc] sm:$0xf]
        %v767 = vld [vmem:[%s1 + $0x10] sm:$0xf]
        %v768 = vld [vmem:[%s1 + $0x14] sm:$0xf]
        %v769 = vld [vmem:[%s1 + $0x18] sm:$0xf]
        %v770 = vld [vmem:[%s1 + $0x1c] sm:$0xf]
        %v771 = vld [vmem:[%s1 + $0x20] sm:$0xf]
        %v772 = vld [vmem:[%s1 + $0x24] sm:$0xf]
        %v773 = vld [vmem:[%s1 + $0x28] sm:$0xf]
        %v774 = vld [vmem:[%s1 + $0x2c] sm:$0xf]
        %v775 = vld [vmem:[%s1 + $0x30] sm:$0xf]
        %v776 = vld [vmem:[%s1 + $0x34] sm:$0xf]
        %v777 = vld [vmem:[%s1 + $0x38] sm:$0xf]
        %v778 = vld [vmem:[%s1 + $0x3c] sm:$0xf]
        %v795 = vunpack.c.l.b16 %v763
        %v796 = vunpack.c.l.b16 %v764
        %v797 = vunpack.c.l.b16 %v765
        %v798 = vunpack.c.l.b16 %v766
        %v799 = vunpack.c.l.b16 %v767
        %v800 = vunpack.c.l.b16 %v768
        %v801 = vunpack.c.l.b16 %v769
        %v802 = vunpack.c.l.b16 %v770
        %v803 = vunpack.c.l.b16 %v771
        %v804 = vunpack.c.l.b16 %v772
        %v805 = vunpack.c.l.b16 %v773
        %v806 = vunpack.c.l.b16 %v774
        %v807 = vunpack.c.l.b16 %v775
        %v808 = vunpack.c.l.b16 %v776
        %v809 = vunpack.c.l.b16 %v777
        %v810 = vunpack.c.l.b16 %v778
        %v811 = vpack.c.b16 %v796, %v795
        %v812 = vpack.c.b16 %v798, %v797
        %v813 = vpack.c.b16 %v800, %v799
        %v814 = vpack.c.b16 %v802, %v801
        %v815 = vpack.c.b16 %v804, %v803
        %v816 = vpack.c.b16 %v806, %v805
        %v817 = vpack.c.b16 %v808, %v807
        %v818 = vpack.c.b16 %v810, %v809
        %827 = vmatprep.subr.bf16.mxu0 0
        %828 = vmatpush1.bf16.msra.mxu0 %v811
        %829 = vmatprep.subr.bf16.mxu0 0
        %830 = vmatpush1.bf16.msra.mxu0 %v812
        %831 = vmatprep.subr.bf16.mxu0 0
        %832 = vmatpush1.bf16.msra.mxu0 %v813
        %833 = vmatprep.subr.bf16.mxu0 0
        %834 = vmatpush1.bf16.msra.mxu0 %v814
        %835 = vmatprep.subr.bf16.mxu0 0
        %836 = vmatpush1.bf16.msra.mxu0 %v815
        %837 = vmatprep.subr.bf16.mxu0 0
        %838 = vmatpush1.bf16.msra.mxu0 %v816
        %839 = vmatprep.subr.bf16.mxu0 0
        %840 = vmatpush1.bf16.msra.mxu0 %v817
        %841 = vmatprep.subr.bf16.mxu0 0
        %842 = vmatpush1.bf16.msra.mxu0 %v818
        %843 = vmatprep.subr.bf16.mxu0 0
        %844 = vmatpush1.bf16.msra.mxu0 0
        %845 = vmatprep.subr.bf16.mxu0 0
        %846 = vmatpush1.bf16.msra.mxu0 0
        %847 = vmatprep.subr.bf16.mxu0 0
        %848 = vmatpush1.bf16.msra.mxu0 0
        %849 = vmatprep.subr.bf16.mxu0 0
        %850 = vmatpush1.bf16.msra.mxu0 0
        %851 = vmatprep.subr.bf16.mxu0 0
        %852 = vmatpush1.bf16.msra.mxu0 0
        %853 = vmatprep.subr.bf16.mxu0 0
        %854 = vmatpush1.bf16.msra.mxu0 0
        %855 = vmatprep.subr.bf16.mxu0 0
        %856 = vmatpush1.bf16.msra.mxu0 0
        %857 = vmatprep.subr.bf16.mxu0 0
        %858 = vmatpush1.bf16.msra.mxu0 0
        %859 = vmatprep.mubr.bf16.mxu0 0
        %860 = vmatmul.mubr.bf16.gmra.mrb[0].mxu0 %v731
        %v861 = vpop.f32.mrb[0].mxu0
        %v862 = vadd.f32 0.0, %v861
        %v863 = vpop.f32.mrb[0].mxu0
        %v864 = vpop.f32.mrb[0].mxu0
        %v865 = vadd.f32 0.0, %v864
        %v866 = vpop.f32.mrb[0].mxu0
        %867 = vmatprep.mubr.bf16.mxu0 0
        %868 = vmatmul.mubr.bf16.gmra.mrb[0].mxu0 %v732
        %v869 = vpop.f32.mrb[0].mxu0
        %v870 = vadd.f32 0.0, %v869
        %v871 = vpop.f32.mrb[0].mxu0
        %v872 = vpop.f32.mrb[0].mxu0
        %v873 = vadd.f32 0.0, %v872
        %v874 = vpop.f32.mrb[0].mxu0
        %875 = vmatprep.mubr.bf16.mxu0 0
        %876 = vmatmul.mubr.bf16.gmra.mrb[0].mxu0 %v733
        %v877 = vpop.f32.mrb[0].mxu0
        %v878 = vadd.f32 0.0, %v877
        %v879 = vpop.f32.mrb[0].mxu0
        %v880 = vpop.f32.mrb[0].mxu0
        %v881 = vadd.f32 0.0, %v880
        %v882 = vpop.f32.mrb[0].mxu0
        %883 = vmatprep.mubr.bf16.mxu0 0
        %884 = vmatmul.mubr.bf16.gmra.mrb[0].mxu0 %v734
        %v885 = vpop.f32.mrb[0].mxu0
        %v886 = vadd.f32 0.0, %v885
        %v887 = vpop.f32.mrb[0].mxu0
        %v888 = vpop.f32.mrb[0].mxu0
        %v889 = vadd.f32 0.0, %v888
        %v890 = vpop.f32.mrb[0].mxu0
        %891 = vmatprep.mubr.bf16.mxu0 0
        %892 = vmatmul.mubr.bf16.gmra.mrb[0].mxu0 %v735
        %v893 = vpop.f32.mrb[0].mxu0
        %v894 = vadd.f32 0.0, %v893
        %v895 = vpop.f32.mrb[0].mxu0
        %v896 = vpop.f32.mrb[0].mxu0
        %v897 = vadd.f32 0.0, %v896
        %v898 = vpop.f32.mrb[0].mxu0
        %899 = vmatprep.mubr.bf16.mxu0 0
        %900 = vmatmul.mubr.bf16.gmra.mrb[0].mxu0 %v736
        %v901 = vpop.f32.mrb[0].mxu0
        %v902 = vadd.f32 0.0, %v901
        %v903 = vpop.f32.mrb[0].mxu0
        %v904 = vpop.f32.mrb[0].mxu0
        %v905 = vadd.f32 0.0, %v904
        %v906 = vpop.f32.mrb[0].mxu0
        %907 = vmatprep.mubr.bf16.mxu0 0
        %908 = vmatmul.mubr.bf16.gmra.mrb[0].mxu0 %v737
        %v909 = vpop.f32.mrb[0].mxu0
        %v910 = vadd.f32 0.0, %v909
        %v911 = vpop.f32.mrb[0].mxu0
        %v912 = vpop.f32.mrb[0].mxu0
        %v913 = vadd.f32 0.0, %v912
        %v914 = vpop.f32.mrb[0].mxu0
        %915 = vmatprep.mubr.bf16.mxu0 0
        %916 = vmatmul.mubr.bf16.gmra.mrb[0].mxu0 %v738
        %v917 = vpop.f32.mrb[0].mxu0
        %v918 = vadd.f32 0.0, %v917
        %v919 = vpop.f32.mrb[0].mxu0
        %v920 = vpop.f32.mrb[0].mxu0
        %v921 = vadd.f32 0.0, %v920
        %v922 = vpop.f32.mrb[0].mxu0
        %923 = vmatprep.mubr.bf16.mxu0 0
        %924 = vmatmul.mubr.bf16.gmra.mrb[0].mxu0 %v739
        %v925 = vpop.f32.mrb[0].mxu0
        %v926 = vadd.f32 0.0, %v925
        %v927 = vpop.f32.mrb[0].mxu0
        %v928 = vpop.f32.mrb[0].mxu0
        %v929 = vadd.f32 0.0, %v928
        %v930 = vpop.f32.mrb[0].mxu0
        %931 = vmatprep.mubr.bf16.mxu0 0
        %932 = vmatmul.mubr.bf16.gmra.mrb[0].mxu0 %v740
        %v933 = vpop.f32.mrb[0].mxu0
        %v934 = vadd.f32 0.0, %v933
        %v935 = vpop.f32.mrb[0].mxu0
        %v936 = vpop.f32.mrb[0].mxu0
        %v937 = vadd.f32 0.0, %v936
        %v938 = vpop.f32.mrb[0].mxu0
        %939 = vmatprep.mubr.bf16.mxu0 0
        %940 = vmatmul.mubr.bf16.gmra.mrb[0].mxu0 %v741
        %v941 = vpop.f32.mrb[0].mxu0
        %v942 = vadd.f32 0.0, %v941
        %v943 = vpop.f32.mrb[0].mxu0
        %v944 = vpop.f32.mrb[0].mxu0
        %v945 = vadd.f32 0.0, %v944
        %v946 = vpop.f32.mrb[0].mxu0
        %947 = vmatprep.mubr.bf16.mxu0 0
        %948 = vmatmul.mubr.bf16.gmra.mrb[0].mxu0 %v742
        %v949 = vpop.f32.mrb[0].mxu0
        %v950 = vadd.f32 0.0, %v949
        %v951 = vpop.f32.mrb[0].mxu0
        %v952 = vpop.f32.mrb[0].mxu0
        %v953 = vadd.f32 0.0, %v952
        %v954 = vpop.f32.mrb[0].mxu0
        %955 = vmatprep.mubr.bf16.mxu0 0
        %956 = vmatmul.mubr.bf16.gmra.mrb[0].mxu0 %v743
        %v957 = vpop.f32.mrb[0].mxu0
        %v958 = vadd.f32 0.0, %v957
        %v959 = vpop.f32.mrb[0].mxu0
        %v960 = vpop.f32.mrb[0].mxu0
        %v961 = vadd.f32 0.0, %v960
        %v962 = vpop.f32.mrb[0].mxu0
        %963 = vmatprep.mubr.bf16.mxu0 0
        %964 = vmatmul.mubr.bf16.gmra.mrb[0].mxu0 %v744
        %v965 = vpop.f32.mrb[0].mxu0
        %v966 = vadd.f32 0.0, %v965
        %v967 = vpop.f32.mrb[0].mxu0
        %v968 = vpop.f32.mrb[0].mxu0
        %v969 = vadd.f32 0.0, %v968
        %v970 = vpop.f32.mrb[0].mxu0
        %971 = vmatprep.mubr.bf16.mxu0 0
        %972 = vmatmul.mubr.bf16.gmra.mrb[0].mxu0 %v745
        %v973 = vpop.f32.mrb[0].mxu0
        %v974 = vadd.f32 0.0, %v973
        %v975 = vpop.f32.mrb[0].mxu0
        %v976 = vpop.f32.mrb[0].mxu0
        %v977 = vadd.f32 0.0, %v976
        %v978 = vpop.f32.mrb[0].mxu0
        %979 = vmatprep.mubr.bf16.mxu0 0
        %980 = vmatmul.mubr.bf16.gmra.mrb[0].mxu0 %v746
        %v981 = vpop.f32.mrb[0].mxu0
        %v982 = vadd.f32 0.0, %v981
        %v983 = vpop.f32.mrb[0].mxu0
        %v984 = vpop.f32.mrb[0].mxu0
        %v985 = vadd.f32 0.0, %v984
        %v986 = vpop.f32.mrb[0].mxu0
        %987 = vmatprep.mubr.bf16.mxu0 0
        %988 = vmatmul.mubr.bf16.gmra.mrb[0].mxu0 %v747
        %v989 = vpop.f32.mrb[0].mxu0
        %v990 = vadd.f32 0.0, %v989
        %v991 = vpop.f32.mrb[0].mxu0
        %v992 = vpop.f32.mrb[0].mxu0
        %v993 = vadd.f32 0.0, %v992
        %v994 = vpop.f32.mrb[0].mxu0
        %995 = vmatprep.mubr.bf16.mxu0 0
        %996 = vmatmul.mubr.bf16.gmra.mrb[0].mxu0 %v748
        %v997 = vpop.f32.mrb[0].mxu0
        %v998 = vadd.f32 0.0, %v997
        %v999 = vpop.f32.mrb[0].mxu0
        %v1000 = vpop.f32.mrb[0].mxu0
        %v1001 = vadd.f32 0.0, %v1000
        %v1002 = vpop.f32.mrb[0].mxu0
        %1003 = vmatprep.mubr.bf16.mxu0 0
        %1004 = vmatmul.mubr.bf16.gmra.mrb[0].mxu0 %v749
        %v1005 = vpop.f32.mrb[0].mxu0
        %v1006 = vadd.f32 0.0, %v1005
        %v1007 = vpop.f32.mrb[0].mxu0
        %v1008 = vpop.f32.mrb[0].mxu0
        %v1009 = vadd.f32 0.0, %v1008
        %v1010 = vpop.f32.mrb[0].mxu0
        %1011 = vmatprep.mubr.bf16.mxu0 0
        %1012 = vmatmul.mubr.bf16.gmra.mrb[0].mxu0 %v750
        %v1013 = vpop.f32.mrb[0].mxu0
        %v1014 = vadd.f32 0.0, %v1013
        %v1015 = vpop.f32.mrb[0].mxu0
        %v1016 = vpop.f32.mrb[0].mxu0
        %v1017 = vadd.f32 0.0, %v1016
        %v1018 = vpop.f32.mrb[0].mxu0
        %1019 = vmatprep.mubr.bf16.mxu0 0
        %1020 = vmatmul.mubr.bf16.gmra.mrb[0].mxu0 %v751
        %v1021 = vpop.f32.mrb[0].mxu0
        %v1022 = vadd.f32 0.0, %v1021
        %v1023 = vpop.f32.mrb[0].mxu0
        %v1024 = vpop.f32.mrb[0].mxu0
        %v1025 = vadd.f32 0.0, %v1024
        %v1026 = vpop.f32.mrb[0].mxu0
        %1027 = vmatprep.mubr.bf16.mxu0 0
        %1028 = vmatmul.mubr.bf16.gmra.mrb[0].mxu0 %v752
        %v1029 = vpop.f32.mrb[0].mxu0
        %v1030 = vadd.f32 0.0, %v1029
        %v1031 = vpop.f32.mrb[0].mxu0
        %v1032 = vpop.f32.mrb[0].mxu0
        %v1033 = vadd.f32 0.0, %v1032
        %v1034 = vpop.f32.mrb[0].mxu0
        %1035 = vmatprep.mubr.bf16.mxu0 0
        %1036 = vmatmul.mubr.bf16.gmra.mrb[0].mxu0 %v753
        %v1037 = vpop.f32.mrb[0].mxu0
        %v1038 = vadd.f32 0.0, %v1037
        %v1039 = vpop.f32.mrb[0].mxu0
        %v1040 = vpop.f32.mrb[0].mxu0
        %v1041 = vadd.f32 0.0, %v1040
        %v1042 = vpop.f32.mrb[0].mxu0
        %1043 = vmatprep.mubr.bf16.mxu0 0
        %1044 = vmatmul.mubr.bf16.gmra.mrb[0].mxu0 %v754
        %v1045 = vpop.f32.mrb[0].mxu0
        %v1046 = vadd.f32 0.0, %v1045
        %v1047 = vpop.f32.mrb[0].mxu0
        %v1048 = vpop.f32.mrb[0].mxu0
        %v1049 = vadd.f32 0.0, %v1048
        %v1050 = vpop.f32.mrb[0].mxu0
        %1051 = vmatprep.mubr.bf16.mxu0 0
        %1052 = vmatmul.mubr.bf16.gmra.mrb[0].mxu0 %v755
        %v1053 = vpop.f32.mrb[0].mxu0
        %v1054 = vadd.f32 0.0, %v1053
        %v1055 = vpop.f32.mrb[0].mxu0
        %v1056 = vpop.f32.mrb[0].mxu0
        %v1057 = vadd.f32 0.0, %v1056
        %v1058 = vpop.f32.mrb[0].mxu0
        %1059 = vmatprep.mubr.bf16.mxu0 0
        %1060 = vmatmul.mubr.bf16.gmra.mrb[0].mxu0 %v756
        %v1061 = vpop.f32.mrb[0].mxu0
        %v1062 = vadd.f32 0.0, %v1061
        %v1063 = vpop.f32.mrb[0].mxu0
        %v1064 = vpop.f32.mrb[0].mxu0
        %v1065 = vadd.f32 0.0, %v1064
        %v1066 = vpop.f32.mrb[0].mxu0
        %1067 = vmatprep.mubr.bf16.mxu0 0
        %1068 = vmatmul.mubr.bf16.gmra.mrb[0].mxu0 %v757
        %v1069 = vpop.f32.mrb[0].mxu0
        %v1070 = vadd.f32 0.0, %v1069
        %v1071 = vpop.f32.mrb[0].mxu0
        %v1072 = vpop.f32.mrb[0].mxu0
        %v1073 = vadd.f32 0.0, %v1072
        %v1074 = vpop.f32.mrb[0].mxu0
        %1075 = vmatprep.mubr.bf16.mxu0 0
        %1076 = vmatmul.mubr.bf16.gmra.mrb[0].mxu0 %v758
        %v1077 = vpop.f32.mrb[0].mxu0
        %v1078 = vadd.f32 0.0, %v1077
        %v1079 = vpop.f32.mrb[0].mxu0
        %v1080 = vpop.f32.mrb[0].mxu0
        %v1081 = vadd.f32 0.0, %v1080
        %v1082 = vpop.f32.mrb[0].mxu0
        %1083 = vmatprep.mubr.bf16.mxu0 0
        %1084 = vmatmul.mubr.bf16.gmra.mrb[0].mxu0 %v759
        %v1085 = vpop.f32.mrb[0].mxu0
        %v1086 = vadd.f32 0.0, %v1085
        %v1087 = vpop.f32.mrb[0].mxu0
        %v1088 = vpop.f32.mrb[0].mxu0
        %v1089 = vadd.f32 0.0, %v1088
        %v1090 = vpop.f32.mrb[0].mxu0
        %1091 = vmatprep.mubr.bf16.mxu0 0
        %1092 = vmatmul.mubr.bf16.gmra.mrb[0].mxu0 %v760
        %v1093 = vpop.f32.mrb[0].mxu0
        %v1094 = vadd.f32 0.0, %v1093
        %v1095 = vpop.f32.mrb[0].mxu0
        %v1096 = vpop.f32.mrb[0].mxu0
        %v1097 = vadd.f32 0.0, %v1096
        %v1098 = vpop.f32.mrb[0].mxu0
        %1099 = vmatprep.mubr.bf16.mxu0 0
        %1100 = vmatmul.mubr.bf16.gmra.mrb[0].mxu0 %v761
        %v1101 = vpop.f32.mrb[0].mxu0
        %v1102 = vadd.f32 0.0, %v1101
        %v1103 = vpop.f32.mrb[0].mxu0
        %v1104 = vpop.f32.mrb[0].mxu0
        %v1105 = vadd.f32 0.0, %v1104
        %v1106 = vpop.f32.mrb[0].mxu0
        %1107 = vmatprep.mubr.bf16.mxu0 0
        %1108 = vmatmul.mubr.bf16.gmra.mrb[0].mxu0 %v762
        %v1109 = vpop.f32.mrb[0].mxu0
        %v1110 = vadd.f32 0.0, %v1109
        %v1111 = vpop.f32.mrb[0].mxu0
        %v1112 = vpop.f32.mrb[0].mxu0
        %v1113 = vadd.f32 0.0, %v1112
        %v1114 = vpop.f32.mrb[0].mxu0
        %1115 = vdwg.mxu0
        %v1116 = vrot.slane %v862, 1
        %v1117 = vrot.slane %v865, 1
        %v1118 = vrot.slane %v870, 1
        %v1119 = vrot.slane %v873, 1
        %v1120 = vrot.slane %v878, 1
        %v1121 = vrot.slane %v881, 1
        %v1122 = vrot.slane %v886, 1
        %v1123 = vrot.slane %v889, 1
        %v1124 = vrot.slane %v894, 1
        %v1125 = vrot.slane %v897, 1
        %v1126 = vrot.slane %v902, 1
        %v1127 = vrot.slane %v905, 1
        %v1128 = vrot.slane %v910, 1
        %v1129 = vrot.slane %v913, 1
        %v1130 = vrot.slane %v918, 1
        %v1131 = vrot.slane %v921, 1
        %v1132 = vrot.slane %v926, 1
        %v1133 = vrot.slane %v929, 1
        %v1134 = vrot.slane %v934, 1
        %v1135 = vrot.slane %v937, 1
        %v1136 = vrot.slane %v942, 1
        %v1137 = vrot.slane %v945, 1
        %v1138 = vrot.slane %v950, 1
        %v1139 = vrot.slane %v953, 1
        %v1140 = vrot.slane %v958, 1
        %v1141 = vrot.slane %v961, 1
        %v1142 = vrot.slane %v966, 1
        %v1143 = vrot.slane %v969, 1
        %v1144 = vrot.slane %v974, 1
        %v1145 = vrot.slane %v977, 1
        %v1146 = vrot.slane %v982, 1
        %v1147 = vrot.slane %v985, 1
        %v1148 = vrot.slane %v990, 1
        %v1149 = vrot.slane %v993, 1
        %v1150 = vrot.slane %v998, 1
        %v1151 = vrot.slane %v1001, 1
        %v1152 = vrot.slane %v1006, 1
        %v1153 = vrot.slane %v1009, 1
        %v1154 = vrot.slane %v1014, 1
        %v1155 = vrot.slane %v1017, 1
        %v1156 = vrot.slane %v1022, 1
        %v1157 = vrot.slane %v1025, 1
        %v1158 = vrot.slane %v1030, 1
        %v1159 = vrot.slane %v1033, 1
        %v1160 = vrot.slane %v1038, 1
        %v1161 = vrot.slane %v1041, 1
        %v1162 = vrot.slane %v1046, 1
        %v1163 = vrot.slane %v1049, 1
        %v1164 = vrot.slane %v1054, 1
        %v1165 = vrot.slane %v1057, 1
        %v1166 = vrot.slane %v1062, 1
        %v1167 = vrot.slane %v1065, 1
        %v1168 = vrot.slane %v1070, 1
        %v1169 = vrot.slane %v1073, 1
        %v1170 = vrot.slane %v1078, 1
        %v1171 = vrot.slane %v1081, 1
        %v1172 = vrot.slane %v1086, 1
        %v1173 = vrot.slane %v1089, 1
        %v1174 = vrot.slane %v1094, 1
        %v1175 = vrot.slane %v1097, 1
        %v1176 = vrot.slane %v1102, 1
        %v1177 = vrot.slane %v1105, 1
        %v1178 = vrot.slane %v1110, 1
        %v1179 = vrot.slane %v1113, 1
        %v1180 = vlaneseq
        %v1181 = vshrl.u32 %v1180, 7
        %vm1182 = vcmp.lt.s32.totalorder %v1181, 7
        %v1183 = vsel %vm1182, %v1178, %v1179
        %v1184 = vsel %vm1182, %v1177, %v1178
        %v1185 = vsel %vm1182, %v1176, %v1177
        %v1186 = vsel %vm1182, %v1175, %v1176
        %v1187 = vsel %vm1182, %v1174, %v1175
        %v1188 = vsel %vm1182, %v1173, %v1174
        %v1189 = vsel %vm1182, %v1172, %v1173
        %v1190 = vsel %vm1182, %v1171, %v1172
        %v1191 = vsel %vm1182, %v1170, %v1171
        %v1192 = vsel %vm1182, %v1169, %v1170
        %v1193 = vsel %vm1182, %v1168, %v1169
        %v1194 = vsel %vm1182, %v1167, %v1168
        %v1195 = vsel %vm1182, %v1166, %v1167
        %v1196 = vsel %vm1182, %v1165, %v1166
        %v1197 = vsel %vm1182, %v1164, %v1165
        %v1198 = vsel %vm1182, %v1163, %v1164
        %v1199 = vsel %vm1182, %v1162, %v1163
        %v1200 = vsel %vm1182, %v1161, %v1162
        %v1201 = vsel %vm1182, %v1160, %v1161
        %v1202 = vsel %vm1182, %v1159, %v1160
        %v1203 = vsel %vm1182, %v1158, %v1159
        %v1204 = vsel %vm1182, %v1157, %v1158
        %v1205 = vsel %vm1182, %v1156, %v1157
        %v1206 = vsel %vm1182, %v1155, %v1156
        %v1207 = vsel %vm1182, %v1154, %v1155
        %v1208 = vsel %vm1182, %v1153, %v1154
        %v1209 = vsel %vm1182, %v1152, %v1153
        %v1210 = vsel %vm1182, %v1151, %v1152
        %v1211 = vsel %vm1182, %v1150, %v1151
        %v1212 = vsel %vm1182, %v1149, %v1150
        %v1213 = vsel %vm1182, %v1148, %v1149
        %v1214 = vsel %vm1182, %v1147, %v1148
        %v1215 = vsel %vm1182, %v1146, %v1147
        %v1216 = vsel %vm1182, %v1145, %v1146
        %v1217 = vsel %vm1182, %v1144, %v1145
        %v1218 = vsel %vm1182, %v1143, %v1144
        %v1219 = vsel %vm1182, %v1142, %v1143
        %v1220 = vsel %vm1182, %v1141, %v1142
        %v1221 = vsel %vm1182, %v1140, %v1141
        %v1222 = vsel %vm1182, %v1139, %v1140
        %v1223 = vsel %vm1182, %v1138, %v1139
        %v1224 = vsel %vm1182, %v1137, %v1138
        %v1225 = vsel %vm1182, %v1136, %v1137
        %v1226 = vsel %vm1182, %v1135, %v1136
        %v1227 = vsel %vm1182, %v1134, %v1135
        %v1228 = vsel %vm1182, %v1133, %v1134
        %v1229 = vsel %vm1182, %v1132, %v1133
        %v1230 = vsel %vm1182, %v1131, %v1132
        %v1231 = vsel %vm1182, %v1130, %v1131
        %v1232 = vsel %vm1182, %v1129, %v1130
        %v1233 = vsel %vm1182, %v1128, %v1129
        %v1234 = vsel %vm1182, %v1127, %v1128
        %v1235 = vsel %vm1182, %v1126, %v1127
        %v1236 = vsel %vm1182, %v1125, %v1126
        %v1237 = vsel %vm1182, %v1124, %v1125
        %v1238 = vsel %vm1182, %v1123, %v1124
        %v1239 = vsel %vm1182, %v1122, %v1123
        %v1240 = vsel %vm1182, %v1121, %v1122
        %v1241 = vsel %vm1182, %v1120, %v1121
        %v1242 = vsel %vm1182, %v1119, %v1120
        %v1243 = vsel %vm1182, %v1118, %v1119
        %v1244 = vsel %vm1182, %v1117, %v1118
        %v1245 = vsel %vm1182, %v1116, %v1117
        %v1246 = vsel %vm1182, %v1179, %v1116
        %v1247 = vrot.slane %v862, 2
        %v1248 = vrot.slane %v865, 2
        %v1249 = vrot.slane %v870, 2
        %v1250 = vrot.slane %v873, 2
        %v1251 = vrot.slane %v878, 2
        %v1252 = vrot.slane %v881, 2
        %v1253 = vrot.slane %v886, 2
        %v1254 = vrot.slane %v889, 2
        %v1255 = vrot.slane %v894, 2
        %v1256 = vrot.slane %v897, 2
        %v1257 = vrot.slane %v902, 2
        %v1258 = vrot.slane %v905, 2
        %v1259 = vrot.slane %v910, 2
        %v1260 = vrot.slane %v913, 2
        %v1261 = vrot.slane %v918, 2
        %v1262 = vrot.slane %v921, 2
        %v1263 = vrot.slane %v926, 2
        %v1264 = vrot.slane %v929, 2
        %v1265 = vrot.slane %v934, 2
        %v1266 = vrot.slane %v937, 2
        %v1267 = vrot.slane %v942, 2
        %v1268 = vrot.slane %v945, 2
        %v1269 = vrot.slane %v950, 2
        %v1270 = vrot.slane %v953, 2
        %v1271 = vrot.slane %v958, 2
        %v1272 = vrot.slane %v961, 2
        %v1273 = vrot.slane %v966, 2
        %v1274 = vrot.slane %v969, 2
        %v1275 = vrot.slane %v974, 2
        %v1276 = vrot.slane %v977, 2
        %v1277 = vrot.slane %v982, 2
        %v1278 = vrot.slane %v985, 2
        %v1279 = vrot.slane %v990, 2
        %v1280 = vrot.slane %v993, 2
        %v1281 = vrot.slane %v998, 2
        %v1282 = vrot.slane %v1001, 2
        %v1283 = vrot.slane %v1006, 2
        %v1284 = vrot.slane %v1009, 2
        %v1285 = vrot.slane %v1014, 2
        %v1286 = vrot.slane %v1017, 2
        %v1287 = vrot.slane %v1022, 2
        %v1288 = vrot.slane %v1025, 2
        %v1289 = vrot.slane %v1030, 2
        %v1290 = vrot.slane %v1033, 2
        %v1291 = vrot.slane %v1038, 2
        %v1292 = vrot.slane %v1041, 2
        %v1293 = vrot.slane %v1046, 2
        %v1294 = vrot.slane %v1049, 2
        %v1295 = vrot.slane %v1054, 2
        %v1296 = vrot.slane %v1057, 2
        %v1297 = vrot.slane %v1062, 2
        %v1298 = vrot.slane %v1065, 2
        %v1299 = vrot.slane %v1070, 2
        %v1300 = vrot.slane %v1073, 2
        %v1301 = vrot.slane %v1078, 2
        %v1302 = vrot.slane %v1081, 2
        %v1303 = vrot.slane %v1086, 2
        %v1304 = vrot.slane %v1089, 2
        %v1305 = vrot.slane %v1094, 2
        %v1306 = vrot.slane %v1097, 2
        %v1307 = vrot.slane %v1102, 2
        %v1308 = vrot.slane %v1105, 2
        %v1309 = vrot.slane %v1110, 2
        %v1310 = vrot.slane %v1113, 2
        %vm1311 = vcmp.lt.s32.totalorder %v1181, 6
        %v1312 = vsel %vm1311, %v1309, %v1310
        %v1313 = vsel %vm1311, %v1308, %v1309
        %v1314 = vsel %vm1311, %v1307, %v1308
        %v1315 = vsel %vm1311, %v1306, %v1307
        %v1316 = vsel %vm1311, %v1305, %v1306
        %v1317 = vsel %vm1311, %v1304, %v1305
        %v1318 = vsel %vm1311, %v1303, %v1304
        %v1319 = vsel %vm1311, %v1302, %v1303
        %v1320 = vsel %vm1311, %v1301, %v1302
        %v1321 = vsel %vm1311, %v1300, %v1301
        %v1322 = vsel %vm1311, %v1299, %v1300
        %v1323 = vsel %vm1311, %v1298, %v1299
        %v1324 = vsel %vm1311, %v1297, %v1298
        %v1325 = vsel %vm1311, %v1296, %v1297
        %v1326 = vsel %vm1311, %v1295, %v1296
        %v1327 = vsel %vm1311, %v1294, %v1295
        %v1328 = vsel %vm1311, %v1293, %v1294
        %v1329 = vsel %vm1311, %v1292, %v1293
        %v1330 = vsel %vm1311, %v1291, %v1292
        %v1331 = vsel %vm1311, %v1290, %v1291
        %v1332 = vsel %vm1311, %v1289, %v1290
        %v1333 = vsel %vm1311, %v1288, %v1289
        %v1334 = vsel %vm1311, %v1287, %v1288
        %v1335 = vsel %vm1311, %v1286, %v1287
        %v1336 = vsel %vm1311, %v1285, %v1286
        %v1337 = vsel %vm1311, %v1284, %v1285
        %v1338 = vsel %vm1311, %v1283, %v1284
        %v1339 = vsel %vm1311, %v1282, %v1283
        %v1340 = vsel %vm1311, %v1281, %v1282
        %v1341 = vsel %vm1311, %v1280, %v1281
        %v1342 = vsel %vm1311, %v1279, %v1280
        %v1343 = vsel %vm1311, %v1278, %v1279
        %v1344 = vsel %vm1311, %v1277, %v1278
        %v1345 = vsel %vm1311, %v1276, %v1277
        %v1346 = vsel %vm1311, %v1275, %v1276
        %v1347 = vsel %vm1311, %v1274, %v1275
        %v1348 = vsel %vm1311, %v1273, %v1274
        %v1349 = vsel %vm1311, %v1272, %v1273
        %v1350 = vsel %vm1311, %v1271, %v1272
        %v1351 = vsel %vm1311, %v1270, %v1271
        %v1352 = vsel %vm1311, %v1269, %v1270
        %v1353 = vsel %vm1311, %v1268, %v1269
        %v1354 = vsel %vm1311, %v1267, %v1268
        %v1355 = vsel %vm1311, %v1266, %v1267
        %v1356 = vsel %vm1311, %v1265, %v1266
        %v1357 = vsel %vm1311, %v1264, %v1265
        %v1358 = vsel %vm1311, %v1263, %v1264
        %v1359 = vsel %vm1311, %v1262, %v1263
        %v1360 = vsel %vm1311, %v1261, %v1262
        %v1361 = vsel %vm1311, %v1260, %v1261
        %v1362 = vsel %vm1311, %v1259, %v1260
        %v1363 = vsel %vm1311, %v1258, %v1259
        %v1364 = vsel %vm1311, %v1257, %v1258
        %v1365 = vsel %vm1311, %v1256, %v1257
        %v1366 = vsel %vm1311, %v1255, %v1256
        %v1367 = vsel %vm1311, %v1254, %v1255
        %v1368 = vsel %vm1311, %v1253, %v1254
        %v1369 = vsel %vm1311, %v1252, %v1253
        %v1370 = vsel %vm1311, %v1251, %v1252
        %v1371 = vsel %vm1311, %v1250, %v1251
        %v1372 = vsel %vm1311, %v1249, %v1250
        %v1373 = vsel %vm1311, %v1248, %v1249
        %v1374 = vsel %vm1311, %v1247, %v1248
        %v1375 = vsel %vm1311, %v1310, %v1247
        %v1376 = vrot.slane %v862, 3
        %v1377 = vrot.slane %v865, 3
        %v1378 = vrot.slane %v870, 3
        %v1379 = vrot.slane %v873, 3
        %v1380 = vrot.slane %v878, 3
        %v1381 = vrot.slane %v881, 3
        %v1382 = vrot.slane %v886, 3
        %v1383 = vrot.slane %v889, 3
        %v1384 = vrot.slane %v894, 3
        %v1385 = vrot.slane %v897, 3
        %v1386 = vrot.slane %v902, 3
        %v1387 = vrot.slane %v905, 3
        %v1388 = vrot.slane %v910, 3
        %v1389 = vrot.slane %v913, 3
        %v1390 = vrot.slane %v918, 3
        %v1391 = vrot.slane %v921, 3
        %v1392 = vrot.slane %v926, 3
        %v1393 = vrot.slane %v929, 3
        %v1394 = vrot.slane %v934, 3
        %v1395 = vrot.slane %v937, 3
        %v1396 = vrot.slane %v942, 3
        %v1397 = vrot.slane %v945, 3
        %v1398 = vrot.slane %v950, 3
        %v1399 = vrot.slane %v953, 3
        %v1400 = vrot.slane %v958, 3
        %v1401 = vrot.slane %v961, 3
        %v1402 = vrot.slane %v966, 3
        %v1403 = vrot.slane %v969, 3
        %v1404 = vrot.slane %v974, 3
        %v1405 = vrot.slane %v977, 3
        %v1406 = vrot.slane %v982, 3
        %v1407 = vrot.slane %v985, 3
        %v1408 = vrot.slane %v990, 3
        %v1409 = vrot.slane %v993, 3
        %v1410 = vrot.slane %v998, 3
        %v1411 = vrot.slane %v1001, 3
        %v1412 = vrot.slane %v1006, 3
        %v1413 = vrot.slane %v1009, 3
        %v1414 = vrot.slane %v1014, 3
        %v1415 = vrot.slane %v1017, 3
        %v1416 = vrot.slane %v1022, 3
        %v1417 = vrot.slane %v1025, 3
        %v1418 = vrot.slane %v1030, 3
        %v1419 = vrot.slane %v1033, 3
        %v1420 = vrot.slane %v1038, 3
        %v1421 = vrot.slane %v1041, 3
        %v1422 = vrot.slane %v1046, 3
        %v1423 = vrot.slane %v1049, 3
        %v1424 = vrot.slane %v1054, 3
        %v1425 = vrot.slane %v1057, 3
        %v1426 = vrot.slane %v1062, 3
        %v1427 = vrot.slane %v1065, 3
        %v1428 = vrot.slane %v1070, 3
        %v1429 = vrot.slane %v1073, 3
        %v1430 = vrot.slane %v1078, 3
        %v1431 = vrot.slane %v1081, 3
        %v1432 = vrot.slane %v1086, 3
        %v1433 = vrot.slane %v1089, 3
        %v1434 = vrot.slane %v1094, 3
        %v1435 = vrot.slane %v1097, 3
        %v1436 = vrot.slane %v1102, 3
        %v1437 = vrot.slane %v1105, 3
        %v1438 = vrot.slane %v1110, 3
        %v1439 = vrot.slane %v1113, 3
        %vm1440 = vcmp.lt.s32.totalorder %v1181, 5
        %v1441 = vsel %vm1440, %v1438, %v1439
        %v1442 = vsel %vm1440, %v1437, %v1438
        %v1443 = vsel %vm1440, %v1436, %v1437
        %v1444 = vsel %vm1440, %v1435, %v1436
        %v1445 = vsel %vm1440, %v1434, %v1435
        %v1446 = vsel %vm1440, %v1433, %v1434
        %v1447 = vsel %vm1440, %v1432, %v1433
        %v1448 = vsel %vm1440, %v1431, %v1432
        %v1449 = vsel %vm1440, %v1430, %v1431
        %v1450 = vsel %vm1440, %v1429, %v1430
        %v1451 = vsel %vm1440, %v1428, %v1429
        %v1452 = vsel %vm1440, %v1427, %v1428
        %v1453 = vsel %vm1440, %v1426, %v1427
        %v1454 = vsel %vm1440, %v1425, %v1426
        %v1455 = vsel %vm1440, %v1424, %v1425
        %v1456 = vsel %vm1440, %v1423, %v1424
        %v1457 = vsel %vm1440, %v1422, %v1423
        %v1458 = vsel %vm1440, %v1421, %v1422
        %v1459 = vsel %vm1440, %v1420, %v1421
        %v1460 = vsel %vm1440, %v1419, %v1420
        %v1461 = vsel %vm1440, %v1418, %v1419
        %v1462 = vsel %vm1440, %v1417, %v1418
        %v1463 = vsel %vm1440, %v1416, %v1417
        %v1464 = vsel %vm1440, %v1415, %v1416
        %v1465 = vsel %vm1440, %v1414, %v1415
        %v1466 = vsel %vm1440, %v1413, %v1414
        %v1467 = vsel %vm1440, %v1412, %v1413
        %v1468 = vsel %vm1440, %v1411, %v1412
        %v1469 = vsel %vm1440, %v1410, %v1411
        %v1470 = vsel %vm1440, %v1409, %v1410
        %v1471 = vsel %vm1440, %v1408, %v1409
        %v1472 = vsel %vm1440, %v1407, %v1408
        %v1473 = vsel %vm1440, %v1406, %v1407
        %v1474 = vsel %vm1440, %v1405, %v1406
        %v1475 = vsel %vm1440, %v1404, %v1405
        %v1476 = vsel %vm1440, %v1403, %v1404
        %v1477 = vsel %vm1440, %v1402, %v1403
        %v1478 = vsel %vm1440, %v1401, %v1402
        %v1479 = vsel %vm1440, %v1400, %v1401
        %v1480 = vsel %vm1440, %v1399, %v1400
        %v1481 = vsel %vm1440, %v1398, %v1399
        %v1482 = vsel %vm1440, %v1397, %v1398
        %v1483 = vsel %vm1440, %v1396, %v1397
        %v1484 = vsel %vm1440, %v1395, %v1396
        %v1485 = vsel %vm1440, %v1394, %v1395
        %v1486 = vsel %vm1440, %v1393, %v1394
        %v1487 = vsel %vm1440, %v1392, %v1393
        %v1488 = vsel %vm1440, %v1391, %v1392
        %v1489 = vsel %vm1440, %v1390, %v1391
        %v1490 = vsel %vm1440, %v1389, %v1390
        %v1491 = vsel %vm1440, %v1388, %v1389
        %v1492 = vsel %vm1440, %v1387, %v1388
        %v1493 = vsel %vm1440, %v1386, %v1387
        %v1494 = vsel %vm1440, %v1385, %v1386
        %v1495 = vsel %vm1440, %v1384, %v1385
        %v1496 = vsel %vm1440, %v1383, %v1384
        %v1497 = vsel %vm1440, %v1382, %v1383
        %v1498 = vsel %vm1440, %v1381, %v1382
        %v1499 = vsel %vm1440, %v1380, %v1381
        %v1500 = vsel %vm1440, %v1379, %v1380
        %v1501 = vsel %vm1440, %v1378, %v1379
        %v1502 = vsel %vm1440, %v1377, %v1378
        %v1503 = vsel %vm1440, %v1376, %v1377
        %v1504 = vsel %vm1440, %v1439, %v1376
        %v1505 = vrot.slane %v862, 4
        %v1506 = vrot.slane %v865, 4
        %v1507 = vrot.slane %v870, 4
        %v1508 = vrot.slane %v873, 4
        %v1509 = vrot.slane %v878, 4
        %v1510 = vrot.slane %v881, 4
        %v1511 = vrot.slane %v886, 4
        %v1512 = vrot.slane %v889, 4
        %v1513 = vrot.slane %v894, 4
        %v1514 = vrot.slane %v897, 4
        %v1515 = vrot.slane %v902, 4
        %v1516 = vrot.slane %v905, 4
        %v1517 = vrot.slane %v910, 4
        %v1518 = vrot.slane %v913, 4
        %v1519 = vrot.slane %v918, 4
        %v1520 = vrot.slane %v921, 4
        %v1521 = vrot.slane %v926, 4
        %v1522 = vrot.slane %v929, 4
        %v1523 = vrot.slane %v934, 4
        %v1524 = vrot.slane %v937, 4
        %v1525 = vrot.slane %v942, 4
        %v1526 = vrot.slane %v945, 4
        %v1527 = vrot.slane %v950, 4
        %v1528 = vrot.slane %v953, 4
        %v1529 = vrot.slane %v958, 4
        %v1530 = vrot.slane %v961, 4
        %v1531 = vrot.slane %v966, 4
        %v1532 = vrot.slane %v969, 4
        %v1533 = vrot.slane %v974, 4
        %v1534 = vrot.slane %v977, 4
        %v1535 = vrot.slane %v982, 4
        %v1536 = vrot.slane %v985, 4
        %v1537 = vrot.slane %v990, 4
        %v1538 = vrot.slane %v993, 4
        %v1539 = vrot.slane %v998, 4
        %v1540 = vrot.slane %v1001, 4
        %v1541 = vrot.slane %v1006, 4
        %v1542 = vrot.slane %v1009, 4
        %v1543 = vrot.slane %v1014, 4
        %v1544 = vrot.slane %v1017, 4
        %v1545 = vrot.slane %v1022, 4
        %v1546 = vrot.slane %v1025, 4
        %v1547 = vrot.slane %v1030, 4
        %v1548 = vrot.slane %v1033, 4
        %v1549 = vrot.slane %v1038, 4
        %v1550 = vrot.slane %v1041, 4
        %v1551 = vrot.slane %v1046, 4
        %v1552 = vrot.slane %v1049, 4
        %v1553 = vrot.slane %v1054, 4
        %v1554 = vrot.slane %v1057, 4
        %v1555 = vrot.slane %v1062, 4
        %v1556 = vrot.slane %v1065, 4
        %v1557 = vrot.slane %v1070, 4
        %v1558 = vrot.slane %v1073, 4
        %v1559 = vrot.slane %v1078, 4
        %v1560 = vrot.slane %v1081, 4
        %v1561 = vrot.slane %v1086, 4
        %v1562 = vrot.slane %v1089, 4
        %v1563 = vrot.slane %v1094, 4
        %v1564 = vrot.slane %v1097, 4
        %v1565 = vrot.slane %v1102, 4
        %v1566 = vrot.slane %v1105, 4
        %v1567 = vrot.slane %v1110, 4
        %v1568 = vrot.slane %v1113, 4
        %vm1569 = vcmp.lt.s32.totalorder %v1181, 4
        %v1570 = vsel %vm1569, %v1567, %v1568
        %v1571 = vsel %vm1569, %v1566, %v1567
        %v1572 = vsel %vm1569, %v1565, %v1566
        %v1573 = vsel %vm1569, %v1564, %v1565
        %v1574 = vsel %vm1569, %v1563, %v1564
        %v1575 = vsel %vm1569, %v1562, %v1563
        %v1576 = vsel %vm1569, %v1561, %v1562
        %v1577 = vsel %vm1569, %v1560, %v1561
        %v1578 = vsel %vm1569, %v1559, %v1560
        %v1579 = vsel %vm1569, %v1558, %v1559
        %v1580 = vsel %vm1569, %v1557, %v1558
        %v1581 = vsel %vm1569, %v1556, %v1557
        %v1582 = vsel %vm1569, %v1555, %v1556
        %v1583 = vsel %vm1569, %v1554, %v1555
        %v1584 = vsel %vm1569, %v1553, %v1554
        %v1585 = vsel %vm1569, %v1552, %v1553
        %v1586 = vsel %vm1569, %v1551, %v1552
        %v1587 = vsel %vm1569, %v1550, %v1551
        %v1588 = vsel %vm1569, %v1549, %v1550
        %v1589 = vsel %vm1569, %v1548, %v1549
        %v1590 = vsel %vm1569, %v1547, %v1548
        %v1591 = vsel %vm1569, %v1546, %v1547
        %v1592 = vsel %vm1569, %v1545, %v1546
        %v1593 = vsel %vm1569, %v1544, %v1545
        %v1594 = vsel %vm1569, %v1543, %v1544
        %v1595 = vsel %vm1569, %v1542, %v1543
        %v1596 = vsel %vm1569, %v1541, %v1542
        %v1597 = vsel %vm1569, %v1540, %v1541
        %v1598 = vsel %vm1569, %v1539, %v1540
        %v1599 = vsel %vm1569, %v1538, %v1539
        %v1600 = vsel %vm1569, %v1537, %v1538
        %v1601 = vsel %vm1569, %v1536, %v1537
        %v1602 = vsel %vm1569, %v1535, %v1536
        %v1603 = vsel %vm1569, %v1534, %v1535
        %v1604 = vsel %vm1569, %v1533, %v1534
        %v1605 = vsel %vm1569, %v1532, %v1533
        %v1606 = vsel %vm1569, %v1531, %v1532
        %v1607 = vsel %vm1569, %v1530, %v1531
        %v1608 = vsel %vm1569, %v1529, %v1530
        %v1609 = vsel %vm1569, %v1528, %v1529
        %v1610 = vsel %vm1569, %v1527, %v1528
        %v1611 = vsel %vm1569, %v1526, %v1527
        %v1612 = vsel %vm1569, %v1525, %v1526
        %v1613 = vsel %vm1569, %v1524, %v1525
        %v1614 = vsel %vm1569, %v1523, %v1524
        %v1615 = vsel %vm1569, %v1522, %v1523
        %v1616 = vsel %vm1569, %v1521, %v1522
        %v1617 = vsel %vm1569, %v1520, %v1521
        %v1618 = vsel %vm1569, %v1519, %v1520
        %v1619 = vsel %vm1569, %v1518, %v1519
        %v1620 = vsel %vm1569, %v1517, %v1518
        %v1621 = vsel %vm1569, %v1516, %v1517
        %v1622 = vsel %vm1569, %v1515, %v1516
        %v1623 = vsel %vm1569, %v1514, %v1515
        %v1624 = vsel %vm1569, %v1513, %v1514
        %v1625 = vsel %vm1569, %v1512, %v1513
        %v1626 = vsel %vm1569, %v1511, %v1512
        %v1627 = vsel %vm1569, %v1510, %v1511
        %v1628 = vsel %vm1569, %v1509, %v1510
        %v1629 = vsel %vm1569, %v1508, %v1509
        %v1630 = vsel %vm1569, %v1507, %v1508
        %v1631 = vsel %vm1569, %v1506, %v1507
        %v1632 = vsel %vm1569, %v1505, %v1506
        %v1633 = vsel %vm1569, %v1568, %v1505
        %1698 = vrot.lane.b32.xlu0 %v1245, 32
        %v1699 = vpop.permute.xlu0 %1698
        %1700 = vrot.lane.b32.xlu0 %v1244, 32
        %v1701 = vpop.permute.xlu0 %1700
        %1702 = vrot.lane.b32.xlu0 %v1243, 32
        %v1703 = vpop.permute.xlu0 %1702
        %1704 = vrot.lane.b32.xlu0 %v1242, 32
        %v1705 = vpop.permute.xlu0 %1704
        %1706 = vrot.lane.b32.xlu0 %v1241, 32
        %v1707 = vpop.permute.xlu0 %1706
        %1708 = vrot.lane.b32.xlu0 %v1240, 32
        %v1709 = vpop.permute.xlu0 %1708
        %1710 = vrot.lane.b32.xlu0 %v1239, 32
        %v1711 = vpop.permute.xlu0 %1710
        %1712 = vrot.lane.b32.xlu0 %v1238, 32
        %v1713 = vpop.permute.xlu0 %1712
        %1714 = vrot.lane.b32.xlu0 %v1237, 32
        %v1715 = vpop.permute.xlu0 %1714
        %1716 = vrot.lane.b32.xlu0 %v1236, 32
        %v1717 = vpop.permute.xlu0 %1716
        %1718 = vrot.lane.b32.xlu0 %v1235, 32
        %v1719 = vpop.permute.xlu0 %1718
        %1720 = vrot.lane.b32.xlu0 %v1234, 32
        %v1721 = vpop.permute.xlu0 %1720
        %1722 = vrot.lane.b32.xlu0 %v1233, 32
        %v1723 = vpop.permute.xlu0 %1722
        %1724 = vrot.lane.b32.xlu0 %v1232, 32
        %v1725 = vpop.permute.xlu0 %1724
        %1726 = vrot.lane.b32.xlu0 %v1231, 32
        %v1727 = vpop.permute.xlu0 %1726
        %1728 = vrot.lane.b32.xlu0 %v1230, 32
        %v1729 = vpop.permute.xlu0 %1728
        %1730 = vrot.lane.b32.xlu0 %v1229, 32
        %v1731 = vpop.permute.xlu0 %1730
        %1732 = vrot.lane.b32.xlu0 %v1228, 32
        %v1733 = vpop.permute.xlu0 %1732
        %1734 = vrot.lane.b32.xlu0 %v1227, 32
        %v1735 = vpop.permute.xlu0 %1734
        %1736 = vrot.lane.b32.xlu0 %v1226, 32
        %v1737 = vpop.permute.xlu0 %1736
        %1738 = vrot.lane.b32.xlu0 %v1225, 32
        %v1739 = vpop.permute.xlu0 %1738
        %1740 = vrot.lane.b32.xlu0 %v1224, 32
        %v1741 = vpop.permute.xlu0 %1740
        %1742 = vrot.lane.b32.xlu0 %v1223, 32
        %v1743 = vpop.permute.xlu0 %1742
        %1744 = vrot.lane.b32.xlu0 %v1222, 32
        %v1745 = vpop.permute.xlu0 %1744
        %1746 = vrot.lane.b32.xlu0 %v1221, 32
        %v1747 = vpop.permute.xlu0 %1746
        %1748 = vrot.lane.b32.xlu0 %v1220, 32
        %v1749 = vpop.permute.xlu0 %1748
        %1750 = vrot.lane.b32.xlu0 %v1219, 32
        %v1751 = vpop.permute.xlu0 %1750
        %1752 = vrot.lane.b32.xlu0 %v1218, 32
        %v1753 = vpop.permute.xlu0 %1752
        %1754 = vrot.lane.b32.xlu0 %v1217, 32
        %v1755 = vpop.permute.xlu0 %1754
        %1756 = vrot.lane.b32.xlu0 %v1216, 32
        %v1757 = vpop.permute.xlu0 %1756
        %1758 = vrot.lane.b32.xlu0 %v1215, 32
        %v1759 = vpop.permute.xlu0 %1758
        %1760 = vrot.lane.b32.xlu0 %v1214, 32
        %v1761 = vpop.permute.xlu0 %1760
        %1762 = vrot.lane.b32.xlu0 %v1213, 32
        %v1763 = vpop.permute.xlu0 %1762
        %1764 = vrot.lane.b32.xlu0 %v1212, 32
        %v1765 = vpop.permute.xlu0 %1764
        %1766 = vrot.lane.b32.xlu0 %v1211, 32
        %v1767 = vpop.permute.xlu0 %1766
        %1768 = vrot.lane.b32.xlu0 %v1210, 32
        %v1769 = vpop.permute.xlu0 %1768
        %1770 = vrot.lane.b32.xlu0 %v1209, 32
        %v1771 = vpop.permute.xlu0 %1770
        %1772 = vrot.lane.b32.xlu0 %v1208, 32
        %v1773 = vpop.permute.xlu0 %1772
        %1774 = vrot.lane.b32.xlu0 %v1207, 32
        %v1775 = vpop.permute.xlu0 %1774
        %1776 = vrot.lane.b32.xlu0 %v1206, 32
        %v1777 = vpop.permute.xlu0 %1776
        %1778 = vrot.lane.b32.xlu0 %v1205, 32
        %v1779 = vpop.permute.xlu0 %1778
        %1780 = vrot.lane.b32.xlu0 %v1204, 32
        %v1781 = vpop.permute.xlu0 %1780
        %1782 = vrot.lane.b32.xlu0 %v1203, 32
        %v1783 = vpop.permute.xlu0 %1782
        %1784 = vrot.lane.b32.xlu0 %v1202, 32
        %v1785 = vpop.permute.xlu0 %1784
        %1786 = vrot.lane.b32.xlu0 %v1201, 32
        %v1787 = vpop.permute.xlu0 %1786
        %1788 = vrot.lane.b32.xlu0 %v1200, 32
        %v1789 = vpop.permute.xlu0 %1788
        %1790 = vrot.lane.b32.xlu0 %v1199, 32
        %v1791 = vpop.permute.xlu0 %1790
        %1792 = vrot.lane.b32.xlu0 %v1198, 32
        %v1793 = vpop.permute.xlu0 %1792
        %1794 = vrot.lane.b32.xlu0 %v1197, 32
        %v1795 = vpop.permute.xlu0 %1794
        %1796 = vrot.lane.b32.xlu0 %v1196, 32
        %v1797 = vpop.permute.xlu0 %1796
        %1798 = vrot.lane.b32.xlu0 %v1195, 32
        %v1799 = vpop.permute.xlu0 %1798
        %1800 = vrot.lane.b32.xlu0 %v1194, 32
        %v1801 = vpop.permute.xlu0 %1800
        %1802 = vrot.lane.b32.xlu0 %v1193, 32
        %v1803 = vpop.permute.xlu0 %1802
        %1804 = vrot.lane.b32.xlu0 %v1192, 32
        %v1805 = vpop.permute.xlu0 %1804
        %1806 = vrot.lane.b32.xlu0 %v1191, 32
        %v1807 = vpop.permute.xlu0 %1806
        %1808 = vrot.lane.b32.xlu0 %v1190, 32
        %v1809 = vpop.permute.xlu0 %1808
        %1810 = vrot.lane.b32.xlu0 %v1189, 32
        %v1811 = vpop.permute.xlu0 %1810
        %1812 = vrot.lane.b32.xlu0 %v1188, 32
        %v1813 = vpop.permute.xlu0 %1812
        %1814 = vrot.lane.b32.xlu0 %v1187, 32
        %v1815 = vpop.permute.xlu0 %1814
        %1816 = vrot.lane.b32.xlu0 %v1186, 32
        %v1817 = vpop.permute.xlu0 %1816
        %1818 = vrot.lane.b32.xlu0 %v1185, 32
        %v1819 = vpop.permute.xlu0 %1818
        %1820 = vrot.lane.b32.xlu0 %v1184, 32
        %v1821 = vpop.permute.xlu0 %1820
        %1822 = vrot.lane.b32.xlu0 %v1183, 32
        %v1823 = vpop.permute.xlu0 %1822
        %1824 = vrot.lane.b32.xlu0 %v1246, 32
        %v1825 = vpop.permute.xlu0 %1824
        %1954 = vrot.lane.b32.xlu0 %v1374, 64
        %v1955 = vpop.permute.xlu0 %1954
        %1956 = vrot.lane.b32.xlu0 %v1373, 64
        %v1957 = vpop.permute.xlu0 %1956
        %1958 = vrot.lane.b32.xlu0 %v1372, 64
        %v1959 = vpop.permute.xlu0 %1958
        %1960 = vrot.lane.b32.xlu0 %v1371, 64
        %v1961 = vpop.permute.xlu0 %1960
        %1962 = vrot.lane.b32.xlu0 %v1370, 64
        %v1963 = vpop.permute.xlu0 %1962
        %1964 = vrot.lane.b32.xlu0 %v1369, 64
        %v1965 = vpop.permute.xlu0 %1964
        %1966 = vrot.lane.b32.xlu0 %v1368, 64
        %v1967 = vpop.permute.xlu0 %1966
        %1968 = vrot.lane.b32.xlu0 %v1367, 64
        %v1969 = vpop.permute.xlu0 %1968
        %1970 = vrot.lane.b32.xlu0 %v1366, 64
        %v1971 = vpop.permute.xlu0 %1970
        %1972 = vrot.lane.b32.xlu0 %v1365, 64
        %v1973 = vpop.permute.xlu0 %1972
        %1974 = vrot.lane.b32.xlu0 %v1364, 64
        %v1975 = vpop.permute.xlu0 %1974
        %1976 = vrot.lane.b32.xlu0 %v1363, 64
        %v1977 = vpop.permute.xlu0 %1976
        %1978 = vrot.lane.b32.xlu0 %v1362, 64
        %v1979 = vpop.permute.xlu0 %1978
        %1980 = vrot.lane.b32.xlu0 %v1361, 64
        %v1981 = vpop.permute.xlu0 %1980
        %1982 = vrot.lane.b32.xlu0 %v1360, 64
        %v1983 = vpop.permute.xlu0 %1982
        %1984 = vrot.lane.b32.xlu0 %v1359, 64
        %v1985 = vpop.permute.xlu0 %1984
        %1986 = vrot.lane.b32.xlu0 %v1358, 64
        %v1987 = vpop.permute.xlu0 %1986
        %1988 = vrot.lane.b32.xlu0 %v1357, 64
        %v1989 = vpop.permute.xlu0 %1988
        %1990 = vrot.lane.b32.xlu0 %v1356, 64
        %v1991 = vpop.permute.xlu0 %1990
        %1992 = vrot.lane.b32.xlu0 %v1355, 64
        %v1993 = vpop.permute.xlu0 %1992
        %1994 = vrot.lane.b32.xlu0 %v1354, 64
        %v1995 = vpop.permute.xlu0 %1994
        %1996 = vrot.lane.b32.xlu0 %v1353, 64
        %v1997 = vpop.permute.xlu0 %1996
        %1998 = vrot.lane.b32.xlu0 %v1352, 64
        %v1999 = vpop.permute.xlu0 %1998
        %2000 = vrot.lane.b32.xlu0 %v1351, 64
        %v2001 = vpop.permute.xlu0 %2000
        %2002 = vrot.lane.b32.xlu0 %v1350, 64
        %v2003 = vpop.permute.xlu0 %2002
        %2004 = vrot.lane.b32.xlu0 %v1349, 64
        %v2005 = vpop.permute.xlu0 %2004
        %2006 = vrot.lane.b32.xlu0 %v1348, 64
        %v2007 = vpop.permute.xlu0 %2006
        %2008 = vrot.lane.b32.xlu0 %v1347, 64
        %v2009 = vpop.permute.xlu0 %2008
        %2010 = vrot.lane.b32.xlu0 %v1346, 64
        %v2011 = vpop.permute.xlu0 %2010
        %2012 = vrot.lane.b32.xlu0 %v1345, 64
        %v2013 = vpop.permute.xlu0 %2012
        %2014 = vrot.lane.b32.xlu0 %v1344, 64
        %v2015 = vpop.permute.xlu0 %2014
        %2016 = vrot.lane.b32.xlu0 %v1343, 64
        %v2017 = vpop.permute.xlu0 %2016
        %2018 = vrot.lane.b32.xlu0 %v1342, 64
        %v2019 = vpop.permute.xlu0 %2018
        %2020 = vrot.lane.b32.xlu0 %v1341, 64
        %v2021 = vpop.permute.xlu0 %2020
        %2022 = vrot.lane.b32.xlu0 %v1340, 64
        %v2023 = vpop.permute.xlu0 %2022
        %2024 = vrot.lane.b32.xlu0 %v1339, 64
        %v2025 = vpop.permute.xlu0 %2024
        %2026 = vrot.lane.b32.xlu0 %v1338, 64
        %v2027 = vpop.permute.xlu0 %2026
        %2028 = vrot.lane.b32.xlu0 %v1337, 64
        %v2029 = vpop.permute.xlu0 %2028
        %2030 = vrot.lane.b32.xlu0 %v1336, 64
        %v2031 = vpop.permute.xlu0 %2030
        %2032 = vrot.lane.b32.xlu0 %v1335, 64
        %v2033 = vpop.permute.xlu0 %2032
        %2034 = vrot.lane.b32.xlu0 %v1334, 64
        %v2035 = vpop.permute.xlu0 %2034
        %2036 = vrot.lane.b32.xlu0 %v1333, 64
        %v2037 = vpop.permute.xlu0 %2036
        %2038 = vrot.lane.b32.xlu0 %v1332, 64
        %v2039 = vpop.permute.xlu0 %2038
        %2040 = vrot.lane.b32.xlu0 %v1331, 64
        %v2041 = vpop.permute.xlu0 %2040
        %2042 = vrot.lane.b32.xlu0 %v1330, 64
        %v2043 = vpop.permute.xlu0 %2042
        %2044 = vrot.lane.b32.xlu0 %v1329, 64
        %v2045 = vpop.permute.xlu0 %2044
        %2046 = vrot.lane.b32.xlu0 %v1328, 64
        %v2047 = vpop.permute.xlu0 %2046
        %2048 = vrot.lane.b32.xlu0 %v1327, 64
        %v2049 = vpop.permute.xlu0 %2048
        %2050 = vrot.lane.b32.xlu0 %v1326, 64
        %v2051 = vpop.permute.xlu0 %2050
        %2052 = vrot.lane.b32.xlu0 %v1325, 64
        %v2053 = vpop.permute.xlu0 %2052
        %2054 = vrot.lane.b32.xlu0 %v1324, 64
        %v2055 = vpop.permute.xlu0 %2054
        %2056 = vrot.lane.b32.xlu0 %v1323, 64
        %v2057 = vpop.permute.xlu0 %2056
        %2058 = vrot.lane.b32.xlu0 %v1322, 64
        %v2059 = vpop.permute.xlu0 %2058
        %2060 = vrot.lane.b32.xlu0 %v1321, 64
        %v2061 = vpop.permute.xlu0 %2060
        %2062 = vrot.lane.b32.xlu0 %v1320, 64
        %v2063 = vpop.permute.xlu0 %2062
        %2064 = vrot.lane.b32.xlu0 %v1319, 64
        %v2065 = vpop.permute.xlu0 %2064
        %2066 = vrot.lane.b32.xlu0 %v1318, 64
        %v2067 = vpop.permute.xlu0 %2066
        %2068 = vrot.lane.b32.xlu0 %v1317, 64
        %v2069 = vpop.permute.xlu0 %2068
        %2070 = vrot.lane.b32.xlu0 %v1316, 64
        %v2071 = vpop.permute.xlu0 %2070
        %2072 = vrot.lane.b32.xlu0 %v1315, 64
        %v2073 = vpop.permute.xlu0 %2072
        %2074 = vrot.lane.b32.xlu0 %v1314, 64
        %v2075 = vpop.permute.xlu0 %2074
        %2076 = vrot.lane.b32.xlu0 %v1313, 64
        %v2077 = vpop.permute.xlu0 %2076
        %2078 = vrot.lane.b32.xlu0 %v1312, 64
        %v2079 = vpop.permute.xlu0 %2078
        %2080 = vrot.lane.b32.xlu0 %v1375, 64
        %v2081 = vpop.permute.xlu0 %2080
        %2210 = vrot.lane.b32.xlu0 %v1503, 96
        %v2211 = vpop.permute.xlu0 %2210
        %2212 = vrot.lane.b32.xlu0 %v1502, 96
        %v2213 = vpop.permute.xlu0 %2212
        %2214 = vrot.lane.b32.xlu0 %v1501, 96
        %v2215 = vpop.permute.xlu0 %2214
        %2216 = vrot.lane.b32.xlu0 %v1500, 96
        %v2217 = vpop.permute.xlu0 %2216
        %2218 = vrot.lane.b32.xlu0 %v1499, 96
        %v2219 = vpop.permute.xlu0 %2218
        %2220 = vrot.lane.b32.xlu0 %v1498, 96
        %v2221 = vpop.permute.xlu0 %2220
        %2222 = vrot.lane.b32.xlu0 %v1497, 96
        %v2223 = vpop.permute.xlu0 %2222
        %2224 = vrot.lane.b32.xlu0 %v1496, 96
        %v2225 = vpop.permute.xlu0 %2224
        %2226 = vrot.lane.b32.xlu0 %v1495, 96
        %v2227 = vpop.permute.xlu0 %2226
        %2228 = vrot.lane.b32.xlu0 %v1494, 96
        %v2229 = vpop.permute.xlu0 %2228
        %2230 = vrot.lane.b32.xlu0 %v1493, 96
        %v2231 = vpop.permute.xlu0 %2230
        %2232 = vrot.lane.b32.xlu0 %v1492, 96
        %v2233 = vpop.permute.xlu0 %2232
        %2234 = vrot.lane.b32.xlu0 %v1491, 96
        %v2235 = vpop.permute.xlu0 %2234
        %2236 = vrot.lane.b32.xlu0 %v1490, 96
        %v2237 = vpop.permute.xlu0 %2236
        %2238 = vrot.lane.b32.xlu0 %v1489, 96
        %v2239 = vpop.permute.xlu0 %2238
        %2240 = vrot.lane.b32.xlu0 %v1488, 96
        %v2241 = vpop.permute.xlu0 %2240
        %2242 = vrot.lane.b32.xlu0 %v1487, 96
        %v2243 = vpop.permute.xlu0 %2242
        %2244 = vrot.lane.b32.xlu0 %v1486, 96
        %v2245 = vpop.permute.xlu0 %2244
        %2246 = vrot.lane.b32.xlu0 %v1485, 96
        %v2247 = vpop.permute.xlu0 %2246
        %2248 = vrot.lane.b32.xlu0 %v1484, 96
        %v2249 = vpop.permute.xlu0 %2248
        %2250 = vrot.lane.b32.xlu0 %v1483, 96
        %v2251 = vpop.permute.xlu0 %2250
        %2252 = vrot.lane.b32.xlu0 %v1482, 96
        %v2253 = vpop.permute.xlu0 %2252
        %2254 = vrot.lane.b32.xlu0 %v1481, 96
        %v2255 = vpop.permute.xlu0 %2254
        %2256 = vrot.lane.b32.xlu0 %v1480, 96
        %v2257 = vpop.permute.xlu0 %2256
        %2258 = vrot.lane.b32.xlu0 %v1479, 96
        %v2259 = vpop.permute.xlu0 %2258
        %2260 = vrot.lane.b32.xlu0 %v1478, 96
        %v2261 = vpop.permute.xlu0 %2260
        %2262 = vrot.lane.b32.xlu0 %v1477, 96
        %v2263 = vpop.permute.xlu0 %2262
        %2264 = vrot.lane.b32.xlu0 %v1476, 96
        %v2265 = vpop.permute.xlu0 %2264
        %2266 = vrot.lane.b32.xlu0 %v1475, 96
        %v2267 = vpop.permute.xlu0 %2266
        %2268 = vrot.lane.b32.xlu0 %v1474, 96
        %v2269 = vpop.permute.xlu0 %2268
        %2270 = vrot.lane.b32.xlu0 %v1473, 96
        %v2271 = vpop.permute.xlu0 %2270
        %2272 = vrot.lane.b32.xlu0 %v1472, 96
        %v2273 = vpop.permute.xlu0 %2272
        %2274 = vrot.lane.b32.xlu0 %v1471, 96
        %v2275 = vpop.permute.xlu0 %2274
        %2276 = vrot.lane.b32.xlu0 %v1470, 96
        %v2277 = vpop.permute.xlu0 %2276
        %2278 = vrot.lane.b32.xlu0 %v1469, 96
        %v2279 = vpop.permute.xlu0 %2278
        %2280 = vrot.lane.b32.xlu0 %v1468, 96
        %v2281 = vpop.permute.xlu0 %2280
        %2282 = vrot.lane.b32.xlu0 %v1467, 96
        %v2283 = vpop.permute.xlu0 %2282
        %2284 = vrot.lane.b32.xlu0 %v1466, 96
        %v2285 = vpop.permute.xlu0 %2284
        %2286 = vrot.lane.b32.xlu0 %v1465, 96
        %v2287 = vpop.permute.xlu0 %2286
        %2288 = vrot.lane.b32.xlu0 %v1464, 96
        %v2289 = vpop.permute.xlu0 %2288
        %2290 = vrot.lane.b32.xlu0 %v1463, 96
        %v2291 = vpop.permute.xlu0 %2290
        %2292 = vrot.lane.b32.xlu0 %v1462, 96
        %v2293 = vpop.permute.xlu0 %2292
        %2294 = vrot.lane.b32.xlu0 %v1461, 96
        %v2295 = vpop.permute.xlu0 %2294
        %2296 = vrot.lane.b32.xlu0 %v1460, 96
        %v2297 = vpop.permute.xlu0 %2296
        %2298 = vrot.lane.b32.xlu0 %v1459, 96
        %v2299 = vpop.permute.xlu0 %2298
        %2300 = vrot.lane.b32.xlu0 %v1458, 96
        %v2301 = vpop.permute.xlu0 %2300
        %2302 = vrot.lane.b32.xlu0 %v1457, 96
        %v2303 = vpop.permute.xlu0 %2302
        %2304 = vrot.lane.b32.xlu0 %v1456, 96
        %v2305 = vpop.permute.xlu0 %2304
        %2306 = vrot.lane.b32.xlu0 %v1455, 96
        %v2307 = vpop.permute.xlu0 %2306
        %2308 = vrot.lane.b32.xlu0 %v1454, 96
        %v2309 = vpop.permute.xlu0 %2308
        %2310 = vrot.lane.b32.xlu0 %v1453, 96
        %v2311 = vpop.permute.xlu0 %2310
        %2312 = vrot.lane.b32.xlu0 %v1452, 96
        %v2313 = vpop.permute.xlu0 %2312
        %2314 = vrot.lane.b32.xlu0 %v1451, 96
        %v2315 = vpop.permute.xlu0 %2314
        %2316 = vrot.lane.b32.xlu0 %v1450, 96
        %v2317 = vpop.permute.xlu0 %2316
        %2318 = vrot.lane.b32.xlu0 %v1449, 96
        %v2319 = vpop.permute.xlu0 %2318
        %2320 = vrot.lane.b32.xlu0 %v1448, 96
        %v2321 = vpop.permute.xlu0 %2320
        %2322 = vrot.lane.b32.xlu0 %v1447, 96
        %v2323 = vpop.permute.xlu0 %2322
        %2324 = vrot.lane.b32.xlu0 %v1446, 96
        %v2325 = vpop.permute.xlu0 %2324
        %2326 = vrot.lane.b32.xlu0 %v1445, 96
        %v2327 = vpop.permute.xlu0 %2326
        %2328 = vrot.lane.b32.xlu0 %v1444, 96
        %v2329 = vpop.permute.xlu0 %2328
        %2330 = vrot.lane.b32.xlu0 %v1443, 96
        %v2331 = vpop.permute.xlu0 %2330
        %2332 = vrot.lane.b32.xlu0 %v1442, 96
        %v2333 = vpop.permute.xlu0 %2332
        %2334 = vrot.lane.b32.xlu0 %v1441, 96
        %v2335 = vpop.permute.xlu0 %2334
        %2336 = vrot.lane.b32.xlu0 %v1504, 96
        %v2337 = vpop.permute.xlu0 %2336
        %vm2402 = vcmask 261120
        %v2403 = vsel %vm2402, %v862, %v1699
        %v2404 = vsel %vm2402, %v865, %v1701
        %v2405 = vsel %vm2402, %v870, %v1703
        %v2406 = vsel %vm2402, %v873, %v1705
        %v2407 = vsel %vm2402, %v878, %v1707
        %v2408 = vsel %vm2402, %v881, %v1709
        %v2409 = vsel %vm2402, %v886, %v1711
        %v2410 = vsel %vm2402, %v889, %v1713
        %v2411 = vsel %vm2402, %v894, %v1715
        %v2412 = vsel %vm2402, %v897, %v1717
        %v2413 = vsel %vm2402, %v902, %v1719
        %v2414 = vsel %vm2402, %v905, %v1721
        %v2415 = vsel %vm2402, %v910, %v1723
        %v2416 = vsel %vm2402, %v913, %v1725
        %v2417 = vsel %vm2402, %v918, %v1727
        %v2418 = vsel %vm2402, %v921, %v1729
        %v2419 = vsel %vm2402, %v926, %v1731
        %v2420 = vsel %vm2402, %v929, %v1733
        %v2421 = vsel %vm2402, %v934, %v1735
        %v2422 = vsel %vm2402, %v937, %v1737
        %v2423 = vsel %vm2402, %v942, %v1739
        %v2424 = vsel %vm2402, %v945, %v1741
        %v2425 = vsel %vm2402, %v950, %v1743
        %v2426 = vsel %vm2402, %v953, %v1745
        %v2427 = vsel %vm2402, %v958, %v1747
        %v2428 = vsel %vm2402, %v961, %v1749
        %v2429 = vsel %vm2402, %v966, %v1751
        %v2430 = vsel %vm2402, %v969, %v1753
        %v2431 = vsel %vm2402, %v974, %v1755
        %v2432 = vsel %vm2402, %v977, %v1757
        %v2433 = vsel %vm2402, %v982, %v1759
        %v2434 = vsel %vm2402, %v985, %v1761
        %v2435 = vsel %vm2402, %v990, %v1763
        %v2436 = vsel %vm2402, %v993, %v1765
        %v2437 = vsel %vm2402, %v998, %v1767
        %v2438 = vsel %vm2402, %v1001, %v1769
        %v2439 = vsel %vm2402, %v1006, %v1771
        %v2440 = vsel %vm2402, %v1009, %v1773
        %v2441 = vsel %vm2402, %v1014, %v1775
        %v2442 = vsel %vm2402, %v1017, %v1777
        %v2443 = vsel %vm2402, %v1022, %v1779
        %v2444 = vsel %vm2402, %v1025, %v1781
        %v2445 = vsel %vm2402, %v1030, %v1783
        %v2446 = vsel %vm2402, %v1033, %v1785
        %v2447 = vsel %vm2402, %v1038, %v1787
        %v2448 = vsel %vm2402, %v1041, %v1789
        %v2449 = vsel %vm2402, %v1046, %v1791
        %v2450 = vsel %vm2402, %v1049, %v1793
        %v2451 = vsel %vm2402, %v1054, %v1795
        %v2452 = vsel %vm2402, %v1057, %v1797
        %v2453 = vsel %vm2402, %v1062, %v1799
        %v2454 = vsel %vm2402, %v1065, %v1801
        %v2455 = vsel %vm2402, %v1070, %v1803
        %v2456 = vsel %vm2402, %v1073, %v1805
        %v2457 = vsel %vm2402, %v1078, %v1807
        %v2458 = vsel %vm2402, %v1081, %v1809
        %v2459 = vsel %vm2402, %v1086, %v1811
        %v2460 = vsel %vm2402, %v1089, %v1813
        %v2461 = vsel %vm2402, %v1094, %v1815
        %v2462 = vsel %vm2402, %v1097, %v1817
        %v2463 = vsel %vm2402, %v1102, %v1819
        %v2464 = vsel %vm2402, %v1105, %v1821
        %v2465 = vsel %vm2402, %v1110, %v1823
        %v2466 = vsel %vm2402, %v1113, %v1825
        %vm2467 = vcmask 523264
        %v2468 = vsel %vm2467, %v2403, %v1955
        %v2469 = vsel %vm2467, %v2404, %v1957
        %v2470 = vsel %vm2467, %v2405, %v1959
        %v2471 = vsel %vm2467, %v2406, %v1961
        %v2472 = vsel %vm2467, %v2407, %v1963
        %v2473 = vsel %vm2467, %v2408, %v1965
        %v2474 = vsel %vm2467, %v2409, %v1967
        %v2475 = vsel %vm2467, %v2410, %v1969
        %v2476 = vsel %vm2467, %v2411, %v1971
        %v2477 = vsel %vm2467, %v2412, %v1973
        %v2478 = vsel %vm2467, %v2413, %v1975
        %v2479 = vsel %vm2467, %v2414, %v1977
        %v2480 = vsel %vm2467, %v2415, %v1979
        %v2481 = vsel %vm2467, %v2416, %v1981
        %v2482 = vsel %vm2467, %v2417, %v1983
        %v2483 = vsel %vm2467, %v2418, %v1985
        %v2484 = vsel %vm2467, %v2419, %v1987
        %v2485 = vsel %vm2467, %v2420, %v1989
        %v2486 = vsel %vm2467, %v2421, %v1991
        %v2487 = vsel %vm2467, %v2422, %v1993
        %v2488 = vsel %vm2467, %v2423, %v1995
        %v2489 = vsel %vm2467, %v2424, %v1997
        %v2490 = vsel %vm2467, %v2425, %v1999
        %v2491 = vsel %vm2467, %v2426, %v2001
        %v2492 = vsel %vm2467, %v2427, %v2003
        %v2493 = vsel %vm2467, %v2428, %v2005
        %v2494 = vsel %vm2467, %v2429, %v2007
        %v2495 = vsel %vm2467, %v2430, %v2009
        %v2496 = vsel %vm2467, %v2431, %v2011
        %v2497 = vsel %vm2467, %v2432, %v2013
        %v2498 = vsel %vm2467, %v2433, %v2015
        %v2499 = vsel %vm2467, %v2434, %v2017
        %v2500 = vsel %vm2467, %v2435, %v2019
        %v2501 = vsel %vm2467, %v2436, %v2021
        %v2502 = vsel %vm2467, %v2437, %v2023
        %v2503 = vsel %vm2467, %v2438, %v2025
        %v2504 = vsel %vm2467, %v2439, %v2027
        %v2505 = vsel %vm2467, %v2440, %v2029
        %v2506 = vsel %vm2467, %v2441, %v2031
        %v2507 = vsel %vm2467, %v2442, %v2033
        %v2508 = vsel %vm2467, %v2443, %v2035
        %v2509 = vsel %vm2467, %v2444, %v2037
        %v2510 = vsel %vm2467, %v2445, %v2039
        %v2511 = vsel %vm2467, %v2446, %v2041
        %v2512 = vsel %vm2467, %v2447, %v2043
        %v2513 = vsel %vm2467, %v2448, %v2045
        %v2514 = vsel %vm2467, %v2449, %v2047
        %v2515 = vsel %vm2467, %v2450, %v2049
        %v2516 = vsel %vm2467, %v2451, %v2051
        %v2517 = vsel %vm2467, %v2452, %v2053
        %v2518 = vsel %vm2467, %v2453, %v2055
        %v2519 = vsel %vm2467, %v2454, %v2057
        %v2520 = vsel %vm2467, %v2455, %v2059
        %v2521 = vsel %vm2467, %v2456, %v2061
        %v2522 = vsel %vm2467, %v2457, %v2063
        %v2523 = vsel %vm2467, %v2458, %v2065
        %v2524 = vsel %vm2467, %v2459, %v2067
        %v2525 = vsel %vm2467, %v2460, %v2069
        %v2526 = vsel %vm2467, %v2461, %v2071
        %v2527 = vsel %vm2467, %v2462, %v2073
        %v2528 = vsel %vm2467, %v2463, %v2075
        %v2529 = vsel %vm2467, %v2464, %v2077
        %v2530 = vsel %vm2467, %v2465, %v2079
        %v2531 = vsel %vm2467, %v2466, %v2081
        %vm2532 = vcmask 785408
        %v2533 = vsel %vm2532, %v2468, %v2211
        %v2534 = vsel %vm2532, %v2469, %v2213
        %v2535 = vsel %vm2532, %v2470, %v2215
        %v2536 = vsel %vm2532, %v2471, %v2217
        %v2537 = vsel %vm2532, %v2472, %v2219
        %v2538 = vsel %vm2532, %v2473, %v2221
        %v2539 = vsel %vm2532, %v2474, %v2223
        %v2540 = vsel %vm2532, %v2475, %v2225
        %v2541 = vsel %vm2532, %v2476, %v2227
        %v2542 = vsel %vm2532, %v2477, %v2229
        %v2543 = vsel %vm2532, %v2478, %v2231
        %v2544 = vsel %vm2532, %v2479, %v2233
        %v2545 = vsel %vm2532, %v2480, %v2235
        %v2546 = vsel %vm2532, %v2481, %v2237
        %v2547 = vsel %vm2532, %v2482, %v2239
        %v2548 = vsel %vm2532, %v2483, %v2241
        %v2549 = vsel %vm2532, %v2484, %v2243
        %v2550 = vsel %vm2532, %v2485, %v2245
        %v2551 = vsel %vm2532, %v2486, %v2247
        %v2552 = vsel %vm2532, %v2487, %v2249
        %v2553 = vsel %vm2532, %v2488, %v2251
        %v2554 = vsel %vm2532, %v2489, %v2253
        %v2555 = vsel %vm2532, %v2490, %v2255
        %v2556 = vsel %vm2532, %v2491, %v2257
        %v2557 = vsel %vm2532, %v2492, %v2259
        %v2558 = vsel %vm2532, %v2493, %v2261
        %v2559 = vsel %vm2532, %v2494, %v2263
        %v2560 = vsel %vm2532, %v2495, %v2265
        %v2561 = vsel %vm2532, %v2496, %v2267
        %v2562 = vsel %vm2532, %v2497, %v2269
        %v2563 = vsel %vm2532, %v2498, %v2271
        %v2564 = vsel %vm2532, %v2499, %v2273
        %v2565 = vsel %vm2532, %v2500, %v2275
        %v2566 = vsel %vm2532, %v2501, %v2277
        %v2567 = vsel %vm2532, %v2502, %v2279
        %v2568 = vsel %vm2532, %v2503, %v2281
        %v2569 = vsel %vm2532, %v2504, %v2283
        %v2570 = vsel %vm2532, %v2505, %v2285
        %v2571 = vsel %vm2532, %v2506, %v2287
        %v2572 = vsel %vm2532, %v2507, %v2289
        %v2573 = vsel %vm2532, %v2508, %v2291
        %v2574 = vsel %vm2532, %v2509, %v2293
        %v2575 = vsel %vm2532, %v2510, %v2295
        %v2576 = vsel %vm2532, %v2511, %v2297
        %v2577 = vsel %vm2532, %v2512, %v2299
        %v2578 = vsel %vm2532, %v2513, %v2301
        %v2579 = vsel %vm2532, %v2514, %v2303
        %v2580 = vsel %vm2532, %v2515, %v2305
        %v2581 = vsel %vm2532, %v2516, %v2307
        %v2582 = vsel %vm2532, %v2517, %v2309
        %v2583 = vsel %vm2532, %v2518, %v2311
        %v2584 = vsel %vm2532, %v2519, %v2313
        %v2585 = vsel %vm2532, %v2520, %v2315
        %v2586 = vsel %vm2532, %v2521, %v2317
        %v2587 = vsel %vm2532, %v2522, %v2319
        %v2588 = vsel %vm2532, %v2523, %v2321
        %v2589 = vsel %vm2532, %v2524, %v2323
        %v2590 = vsel %vm2532, %v2525, %v2325
        %v2591 = vsel %vm2532, %v2526, %v2327
        %v2592 = vsel %vm2532, %v2527, %v2329
        %v2593 = vsel %vm2532, %v2528, %v2331
        %v2594 = vsel %vm2532, %v2529, %v2333
        %v2595 = vsel %vm2532, %v2530, %v2335
        %v2596 = vsel %vm2532, %v2531, %v2337
        %v2597 = vpack.c.bf16 %v2534, %v2533
        %v2598 = vpack.c.bf16 %v1631, %v1632
        %v2599 = vpack.c.bf16 %v2536, %v2535
        %v2600 = vpack.c.bf16 %v1629, %v1630
        %v2601 = vpack.c.bf16 %v2538, %v2537
        %v2602 = vpack.c.bf16 %v1627, %v1628
        %v2603 = vpack.c.bf16 %v2540, %v2539
        %v2604 = vpack.c.bf16 %v1625, %v1626
        %v2605 = vpack.c.bf16 %v2542, %v2541
        %v2606 = vpack.c.bf16 %v1623, %v1624
        %v2607 = vpack.c.bf16 %v2544, %v2543
        %v2608 = vpack.c.bf16 %v1621, %v1622
        %v2609 = vpack.c.bf16 %v2546, %v2545
        %v2610 = vpack.c.bf16 %v1619, %v1620
        %v2611 = vpack.c.bf16 %v2548, %v2547
        %v2612 = vpack.c.bf16 %v1617, %v1618
        %v2613 = vpack.c.bf16 %v2550, %v2549
        %v2614 = vpack.c.bf16 %v1615, %v1616
        %v2615 = vpack.c.bf16 %v2552, %v2551
        %v2616 = vpack.c.bf16 %v1613, %v1614
        %v2617 = vpack.c.bf16 %v2554, %v2553
        %v2618 = vpack.c.bf16 %v1611, %v1612
        %v2619 = vpack.c.bf16 %v2556, %v2555
        %v2620 = vpack.c.bf16 %v1609, %v1610
        %v2621 = vpack.c.bf16 %v2558, %v2557
        %v2622 = vpack.c.bf16 %v1607, %v1608
        %v2623 = vpack.c.bf16 %v2560, %v2559
        %v2624 = vpack.c.bf16 %v1605, %v1606
        %v2625 = vpack.c.bf16 %v2562, %v2561
        %v2626 = vpack.c.bf16 %v1603, %v1604
        %v2627 = vpack.c.bf16 %v2564, %v2563
        %v2628 = vpack.c.bf16 %v1601, %v1602
        %v2629 = vpack.c.bf16 %v2566, %v2565
        %v2630 = vpack.c.bf16 %v1599, %v1600
        %v2631 = vpack.c.bf16 %v2568, %v2567
        %v2632 = vpack.c.bf16 %v1597, %v1598
        %v2633 = vpack.c.bf16 %v2570, %v2569
        %v2634 = vpack.c.bf16 %v1595, %v1596
        %v2635 = vpack.c.bf16 %v2572, %v2571
        %v2636 = vpack.c.bf16 %v1593, %v1594
        %v2637 = vpack.c.bf16 %v2574, %v2573
        %v2638 = vpack.c.bf16 %v1591, %v1592
        %v2639 = vpack.c.bf16 %v2576, %v2575
        %v2640 = vpack.c.bf16 %v1589, %v1590
        %v2641 = vpack.c.bf16 %v2578, %v2577
        %v2642 = vpack.c.bf16 %v1587, %v1588
        %v2643 = vpack.c.bf16 %v2580, %v2579
        %v2644 = vpack.c.bf16 %v1585, %v1586
        %v2645 = vpack.c.bf16 %v2582, %v2581
        %v2646 = vpack.c.bf16 %v1583, %v1584
        %v2647 = vpack.c.bf16 %v2584, %v2583
        %v2648 = vpack.c.bf16 %v1581, %v1582
        %v2649 = vpack.c.bf16 %v2586, %v2585
        %v2650 = vpack.c.bf16 %v1579, %v1580
        %v2651 = vpack.c.bf16 %v2588, %v2587
        %v2652 = vpack.c.bf16 %v1577, %v1578
        %v2653 = vpack.c.bf16 %v2590, %v2589
        %v2654 = vpack.c.bf16 %v1575, %v1576
        %v2655 = vpack.c.bf16 %v2592, %v2591
        %v2656 = vpack.c.bf16 %v1573, %v1574
        %v2657 = vpack.c.bf16 %v2594, %v2593
        %v2658 = vpack.c.bf16 %v1571, %v1572
        %v2659 = vpack.c.bf16 %v2596, %v2595
        %v2660 = vpack.c.bf16 %v1633, %v1570
        %v2661 = vld [vmem:[%s2] sm:$0xf]
        %v2662 = vld [vmem:[%s2 + $0x4] sm:$0xf]
        %v2663 = vld [vmem:[%s2 + $0x8] sm:$0xf]
        %v2664 = vld [vmem:[%s2 + $0xc] sm:$0xf]
        %v2665 = vld [vmem:[%s2 + $0x10] sm:$0xf]
        %v2666 = vld [vmem:[%s2 + $0x14] sm:$0xf]
        %v2667 = vld [vmem:[%s2 + $0x18] sm:$0xf]
        %v2668 = vld [vmem:[%s2 + $0x1c] sm:$0xf]
        %v2669 = vld [vmem:[%s2 + $0x20] sm:$0xf]
        %v2670 = vld [vmem:[%s2 + $0x24] sm:$0xf]
        %v2671 = vld [vmem:[%s2 + $0x28] sm:$0xf]
        %v2672 = vld [vmem:[%s2 + $0x2c] sm:$0xf]
        %v2673 = vld [vmem:[%s2 + $0x30] sm:$0xf]
        %v2674 = vld [vmem:[%s2 + $0x34] sm:$0xf]
        %v2675 = vld [vmem:[%s2 + $0x38] sm:$0xf]
        %v2676 = vld [vmem:[%s2 + $0x3c] sm:$0xf]
        %v2677 = vld [vmem:[%s2 + $0x40] sm:$0xf]
        %v2678 = vld [vmem:[%s2 + $0x44] sm:$0xf]
        %v2679 = vld [vmem:[%s2 + $0x48] sm:$0xf]
        %v2680 = vld [vmem:[%s2 + $0x4c] sm:$0xf]
        %v2681 = vld [vmem:[%s3] sm:$0x1]
        %v2683 = vlaneseq
        %v2684 = vshrl.u32 %v2683, 7
        %v2685 = vsub.s32 0, %v2684
        %v2686 = vrot.slane %v2681, %v2685
        %v2708 = vunpack.c.l.b16 %v2661
        %v2709 = vunpack.c.l.b16 %v2662
        %v2710 = vunpack.c.l.b16 %v2663
        %v2711 = vunpack.c.l.b16 %v2664
        %v2712 = vunpack.c.l.b16 %v2665
        %v2713 = vunpack.c.l.b16 %v2666
        %v2714 = vunpack.c.l.b16 %v2667
        %v2715 = vunpack.c.l.b16 %v2668
        %v2716 = vunpack.c.l.b16 %v2669
        %v2717 = vunpack.c.l.b16 %v2670
        %v2718 = vunpack.c.l.b16 %v2671
        %v2719 = vunpack.c.l.b16 %v2672
        %v2720 = vunpack.c.l.b16 %v2673
        %v2721 = vunpack.c.l.b16 %v2674
        %v2722 = vunpack.c.l.b16 %v2675
        %v2723 = vunpack.c.l.b16 %v2676
        %v2724 = vunpack.c.l.b16 %v2677
        %v2725 = vunpack.c.l.b16 %v2678
        %v2726 = vunpack.c.l.b16 %v2679
        %v2727 = vunpack.c.l.b16 %v2680
        %v2728 = vpack.c.b16 %v2709, %v2708
        %v2729 = vpack.c.b16 %v2711, %v2710
        %v2730 = vpack.c.b16 %v2713, %v2712
        %v2731 = vpack.c.b16 %v2715, %v2714
        %v2732 = vpack.c.b16 %v2717, %v2716
        %v2733 = vpack.c.b16 %v2719, %v2718
        %v2734 = vpack.c.b16 %v2721, %v2720
        %v2735 = vpack.c.b16 %v2723, %v2722
        %v2736 = vpack.c.b16 %v2725, %v2724
        %v2737 = vpack.c.b16 %v2727, %v2726
        %v2749 = vsel %vm2402, %v2598, 0
        %v2752 = vsel %vm2402, %v2600, 0
        %v2755 = vsel %vm2402, %v2602, 0
        %v2758 = vsel %vm2402, %v2604, 0
        %v2761 = vsel %vm2402, %v2606, 0
        %v2764 = vsel %vm2402, %v2608, 0
        %v2767 = vsel %vm2402, %v2610, 0
        %v2770 = vsel %vm2402, %v2612, 0
        %v2773 = vsel %vm2402, %v2614, 0
        %v2776 = vsel %vm2402, %v2616, 0
        %v2779 = vsel %vm2402, %v2618, 0
        %v2782 = vsel %vm2402, %v2620, 0
        %v2785 = vsel %vm2402, %v2622, 0
        %v2788 = vsel %vm2402, %v2624, 0
        %v2791 = vsel %vm2402, %v2626, 0
        %v2794 = vsel %vm2402, %v2628, 0
        %v2797 = vsel %vm2402, %v2630, 0
        %v2800 = vsel %vm2402, %v2632, 0
        %v2803 = vsel %vm2402, %v2634, 0
        %v2806 = vsel %vm2402, %v2636, 0
        %v2809 = vsel %vm2402, %v2638, 0
        %v2812 = vsel %vm2402, %v2640, 0
        %v2815 = vsel %vm2402, %v2642, 0
        %v2818 = vsel %vm2402, %v2644, 0
        %v2821 = vsel %vm2402, %v2646, 0
        %v2824 = vsel %vm2402, %v2648, 0
        %v2827 = vsel %vm2402, %v2650, 0
        %v2830 = vsel %vm2402, %v2652, 0
        %v2833 = vsel %vm2402, %v2654, 0
        %v2836 = vsel %vm2402, %v2656, 0
        %v2839 = vsel %vm2402, %v2658, 0
        %v2842 = vsel %vm2402, %v2660, 0
        %2844 = vmatprep.subr.bf16.mxu0 0
        %2845 = vmatpush1.bf16.msra.mxu0 %v2728
        %2846 = vmatprep.subr.bf16.mxu0 0
        %2847 = vmatpush1.bf16.msra.mxu0 %v2729
        %2848 = vmatprep.subr.bf16.mxu0 0
        %2849 = vmatpush1.bf16.msra.mxu0 %v2730
        %2850 = vmatprep.subr.bf16.mxu0 0
        %2851 = vmatpush1.bf16.msra.mxu0 %v2731
        %2852 = vmatprep.subr.bf16.mxu0 0
        %2853 = vmatpush1.bf16.msra.mxu0 %v2732
        %2854 = vmatprep.subr.bf16.mxu0 0
        %2855 = vmatpush1.bf16.msra.mxu0 %v2733
        %2856 = vmatprep.subr.bf16.mxu0 0
        %2857 = vmatpush1.bf16.msra.mxu0 %v2734
        %2858 = vmatprep.subr.bf16.mxu0 0
        %2859 = vmatpush1.bf16.msra.mxu0 %v2735
        %2860 = vmatprep.subr.bf16.mxu0 0
        %2861 = vmatpush1.bf16.msra.mxu0 %v2736
        %2862 = vmatprep.subr.bf16.mxu0 0
        %2863 = vmatpush1.bf16.msra.mxu0 %v2737
        %2864 = vmatprep.subr.bf16.mxu0 0
        %2865 = vmatpush1.bf16.msra.mxu0 0
        %2866 = vmatprep.subr.bf16.mxu0 0
        %2867 = vmatpush1.bf16.msra.mxu0 0
        %2868 = vmatprep.subr.bf16.mxu0 0
        %2869 = vmatpush1.bf16.msra.mxu0 0
        %2870 = vmatprep.subr.bf16.mxu0 0
        %2871 = vmatpush1.bf16.msra.mxu0 0
        %2872 = vmatprep.subr.bf16.mxu0 0
        %2873 = vmatpush1.bf16.msra.mxu0 0
        %2874 = vmatprep.subr.bf16.mxu0 0
        %2875 = vmatpush1.bf16.msra.mxu0 0
        %2876 = vmatprep.mubr.bf16.mxu0 %v2749
        %2877 = vmatmul.mubr.bf16.gmra.mrb[0].mxu0 %v2597
        %v2878 = vpop.f32.mrb[0].mxu0
        %v2879 = vadd.f32 %v2686, %v2878
        %v2880 = vpop.f32.mrb[0].mxu0
        %v2881 = vpop.f32.mrb[0].mxu0
        %v2882 = vadd.f32 %v2686, %v2881
        %v2883 = vpop.f32.mrb[0].mxu0
        %2884 = vmatprep.mubr.bf16.mxu0 %v2752
        %2885 = vmatmul.mubr.bf16.gmra.mrb[0].mxu0 %v2599
        %v2886 = vpop.f32.mrb[0].mxu0
        %v2887 = vadd.f32 %v2686, %v2886
        %v2888 = vpop.f32.mrb[0].mxu0
        %v2889 = vpop.f32.mrb[0].mxu0
        %v2890 = vadd.f32 %v2686, %v2889
        %v2891 = vpop.f32.mrb[0].mxu0
        %2892 = vmatprep.mubr.bf16.mxu0 %v2755
        %2893 = vmatmul.mubr.bf16.gmra.mrb[0].mxu0 %v2601
        %v2894 = vpop.f32.mrb[0].mxu0
        %v2895 = vadd.f32 %v2686, %v2894
        %v2896 = vpop.f32.mrb[0].mxu0
        %v2897 = vpop.f32.mrb[0].mxu0
        %v2898 = vadd.f32 %v2686, %v2897
        %v2899 = vpop.f32.mrb[0].mxu0
        %2900 = vmatprep.mubr.bf16.mxu0 %v2758
        %2901 = vmatmul.mubr.bf16.gmra.mrb[0].mxu0 %v2603
        %v2902 = vpop.f32.mrb[0].mxu0
        %v2903 = vadd.f32 %v2686, %v2902
        %v2904 = vpop.f32.mrb[0].mxu0
        %v2905 = vpop.f32.mrb[0].mxu0
        %v2906 = vadd.f32 %v2686, %v2905
        %v2907 = vpop.f32.mrb[0].mxu0
        %2908 = vmatprep.mubr.bf16.mxu0 %v2761
        %2909 = vmatmul.mubr.bf16.gmra.mrb[0].mxu0 %v2605
        %v2910 = vpop.f32.mrb[0].mxu0
        %v2911 = vadd.f32 %v2686, %v2910
        %v2912 = vpop.f32.mrb[0].mxu0
        %v2913 = vpop.f32.mrb[0].mxu0
        %v2914 = vadd.f32 %v2686, %v2913
        %v2915 = vpop.f32.mrb[0].mxu0
        %2916 = vmatprep.mubr.bf16.mxu0 %v2764
        %2917 = vmatmul.mubr.bf16.gmra.mrb[0].mxu0 %v2607
        %v2918 = vpop.f32.mrb[0].mxu0
        %v2919 = vadd.f32 %v2686, %v2918
        %v2920 = vpop.f32.mrb[0].mxu0
        %v2921 = vpop.f32.mrb[0].mxu0
        %v2922 = vadd.f32 %v2686, %v2921
        %v2923 = vpop.f32.mrb[0].mxu0
        %2924 = vmatprep.mubr.bf16.mxu0 %v2767
        %2925 = vmatmul.mubr.bf16.gmra.mrb[0].mxu0 %v2609
        %v2926 = vpop.f32.mrb[0].mxu0
        %v2927 = vadd.f32 %v2686, %v2926
        %v2928 = vpop.f32.mrb[0].mxu0
        %v2929 = vpop.f32.mrb[0].mxu0
        %v2930 = vadd.f32 %v2686, %v2929
        %v2931 = vpop.f32.mrb[0].mxu0
        %2932 = vmatprep.mubr.bf16.mxu0 %v2770
        %2933 = vmatmul.mubr.bf16.gmra.mrb[0].mxu0 %v2611
        %v2934 = vpop.f32.mrb[0].mxu0
        %v2935 = vadd.f32 %v2686, %v2934
        %v2936 = vpop.f32.mrb[0].mxu0
        %v2937 = vpop.f32.mrb[0].mxu0
        %v2938 = vadd.f32 %v2686, %v2937
        %v2939 = vpop.f32.mrb[0].mxu0
        %2940 = vmatprep.mubr.bf16.mxu0 %v2773
        %2941 = vmatmul.mubr.bf16.gmra.mrb[0].mxu0 %v2613
        %v2942 = vpop.f32.mrb[0].mxu0
        %v2943 = vadd.f32 %v2686, %v2942
        %v2944 = vpop.f32.mrb[0].mxu0
        %v2945 = vpop.f32.mrb[0].mxu0
        %v2946 = vadd.f32 %v2686, %v2945
        %v2947 = vpop.f32.mrb[0].mxu0
        %2948 = vmatprep.mubr.bf16.mxu0 %v2776
        %2949 = vmatmul.mubr.bf16.gmra.mrb[0].mxu0 %v2615
        %v2950 = vpop.f32.mrb[0].mxu0
        %v2951 = vadd.f32 %v2686, %v2950
        %v2952 = vpop.f32.mrb[0].mxu0
        %v2953 = vpop.f32.mrb[0].mxu0
        %v2954 = vadd.f32 %v2686, %v2953
        %v2955 = vpop.f32.mrb[0].mxu0
        %2956 = vmatprep.mubr.bf16.mxu0 %v2779
        %2957 = vmatmul.mubr.bf16.gmra.mrb[0].mxu0 %v2617
        %v2958 = vpop.f32.mrb[0].mxu0
        %v2959 = vadd.f32 %v2686, %v2958
        %v2960 = vpop.f32.mrb[0].mxu0
        %v2961 = vpop.f32.mrb[0].mxu0
        %v2962 = vadd.f32 %v2686, %v2961
        %v2963 = vpop.f32.mrb[0].mxu0
        %2964 = vmatprep.mubr.bf16.mxu0 %v2782
        %2965 = vmatmul.mubr.bf16.gmra.mrb[0].mxu0 %v2619
        %v2966 = vpop.f32.mrb[0].mxu0
        %v2967 = vadd.f32 %v2686, %v2966
        %v2968 = vpop.f32.mrb[0].mxu0
        %v2969 = vpop.f32.mrb[0].mxu0
        %v2970 = vadd.f32 %v2686, %v2969
        %v2971 = vpop.f32.mrb[0].mxu0
        %2972 = vmatprep.mubr.bf16.mxu0 %v2785
        %2973 = vmatmul.mubr.bf16.gmra.mrb[0].mxu0 %v2621
        %v2974 = vpop.f32.mrb[0].mxu0
        %v2975 = vadd.f32 %v2686, %v2974
        %v2976 = vpop.f32.mrb[0].mxu0
        %v2977 = vpop.f32.mrb[0].mxu0
        %v2978 = vadd.f32 %v2686, %v2977
        %v2979 = vpop.f32.mrb[0].mxu0
        %2980 = vmatprep.mubr.bf16.mxu0 %v2788
        %2981 = vmatmul.mubr.bf16.gmra.mrb[0].mxu0 %v2623
        %v2982 = vpop.f32.mrb[0].mxu0
        %v2983 = vadd.f32 %v2686, %v2982
        %v2984 = vpop.f32.mrb[0].mxu0
        %v2985 = vpop.f32.mrb[0].mxu0
        %v2986 = vadd.f32 %v2686, %v2985
        %v2987 = vpop.f32.mrb[0].mxu0
        %2988 = vmatprep.mubr.bf16.mxu0 %v2791
        %2989 = vmatmul.mubr.bf16.gmra.mrb[0].mxu0 %v2625
        %v2990 = vpop.f32.mrb[0].mxu0
        %v2991 = vadd.f32 %v2686, %v2990
        %v2992 = vpop.f32.mrb[0].mxu0
        %v2993 = vpop.f32.mrb[0].mxu0
        %v2994 = vadd.f32 %v2686, %v2993
        %v2995 = vpop.f32.mrb[0].mxu0
        %2996 = vmatprep.mubr.bf16.mxu0 %v2794
        %2997 = vmatmul.mubr.bf16.gmra.mrb[0].mxu0 %v2627
        %v2998 = vpop.f32.mrb[0].mxu0
        %v2999 = vadd.f32 %v2686, %v2998
        %v3000 = vpop.f32.mrb[0].mxu0
        %v3001 = vpop.f32.mrb[0].mxu0
        %v3002 = vadd.f32 %v2686, %v3001
        %v3003 = vpop.f32.mrb[0].mxu0
        %3004 = vmatprep.mubr.bf16.mxu0 %v2797
        %3005 = vmatmul.mubr.bf16.gmra.mrb[0].mxu0 %v2629
        %v3006 = vpop.f32.mrb[0].mxu0
        %v3007 = vadd.f32 %v2686, %v3006
        %v3008 = vpop.f32.mrb[0].mxu0
        %v3009 = vpop.f32.mrb[0].mxu0
        %v3010 = vadd.f32 %v2686, %v3009
        %v3011 = vpop.f32.mrb[0].mxu0
        %3012 = vmatprep.mubr.bf16.mxu0 %v2800
        %3013 = vmatmul.mubr.bf16.gmra.mrb[0].mxu0 %v2631
        %v3014 = vpop.f32.mrb[0].mxu0
        %v3015 = vadd.f32 %v2686, %v3014
        %v3016 = vpop.f32.mrb[0].mxu0
        %v3017 = vpop.f32.mrb[0].mxu0
        %v3018 = vadd.f32 %v2686, %v3017
        %v3019 = vpop.f32.mrb[0].mxu0
        %3020 = vmatprep.mubr.bf16.mxu0 %v2803
        %3021 = vmatmul.mubr.bf16.gmra.mrb[0].mxu0 %v2633
        %v3022 = vpop.f32.mrb[0].mxu0
        %v3023 = vadd.f32 %v2686, %v3022
        %v3024 = vpop.f32.mrb[0].mxu0
        %v3025 = vpop.f32.mrb[0].mxu0
        %v3026 = vadd.f32 %v2686, %v3025
        %v3027 = vpop.f32.mrb[0].mxu0
        %3028 = vmatprep.mubr.bf16.mxu0 %v2806
        %3029 = vmatmul.mubr.bf16.gmra.mrb[0].mxu0 %v2635
        %v3030 = vpop.f32.mrb[0].mxu0
        %v3031 = vadd.f32 %v2686, %v3030
        %v3032 = vpop.f32.mrb[0].mxu0
        %v3033 = vpop.f32.mrb[0].mxu0
        %v3034 = vadd.f32 %v2686, %v3033
        %v3035 = vpop.f32.mrb[0].mxu0
        %3036 = vmatprep.mubr.bf16.mxu0 %v2809
        %3037 = vmatmul.mubr.bf16.gmra.mrb[0].mxu0 %v2637
        %v3038 = vpop.f32.mrb[0].mxu0
        %v3039 = vadd.f32 %v2686, %v3038
        %v3040 = vpop.f32.mrb[0].mxu0
        %v3041 = vpop.f32.mrb[0].mxu0
        %v3042 = vadd.f32 %v2686, %v3041
        %v3043 = vpop.f32.mrb[0].mxu0
        %3044 = vmatprep.mubr.bf16.mxu0 %v2812
        %3045 = vmatmul.mubr.bf16.gmra.mrb[0].mxu0 %v2639
        %v3046 = vpop.f32.mrb[0].mxu0
        %v3047 = vadd.f32 %v2686, %v3046
        %v3048 = vpop.f32.mrb[0].mxu0
        %v3049 = vpop.f32.mrb[0].mxu0
        %v3050 = vadd.f32 %v2686, %v3049
        %v3051 = vpop.f32.mrb[0].mxu0
        %3052 = vmatprep.mubr.bf16.mxu0 %v2815
        %3053 = vmatmul.mubr.bf16.gmra.mrb[0].mxu0 %v2641
        %v3054 = vpop.f32.mrb[0].mxu0
        %v3055 = vadd.f32 %v2686, %v3054
        %v3056 = vpop.f32.mrb[0].mxu0
        %v3057 = vpop.f32.mrb[0].mxu0
        %v3058 = vadd.f32 %v2686, %v3057
        %v3059 = vpop.f32.mrb[0].mxu0
        %3060 = vmatprep.mubr.bf16.mxu0 %v2818
        %3061 = vmatmul.mubr.bf16.gmra.mrb[0].mxu0 %v2643
        %v3062 = vpop.f32.mrb[0].mxu0
        %v3063 = vadd.f32 %v2686, %v3062
        %v3064 = vpop.f32.mrb[0].mxu0
        %v3065 = vpop.f32.mrb[0].mxu0
        %v3066 = vadd.f32 %v2686, %v3065
        %v3067 = vpop.f32.mrb[0].mxu0
        %3068 = vmatprep.mubr.bf16.mxu0 %v2821
        %3069 = vmatmul.mubr.bf16.gmra.mrb[0].mxu0 %v2645
        %v3070 = vpop.f32.mrb[0].mxu0
        %v3071 = vadd.f32 %v2686, %v3070
        %v3072 = vpop.f32.mrb[0].mxu0
        %v3073 = vpop.f32.mrb[0].mxu0
        %v3074 = vadd.f32 %v2686, %v3073
        %v3075 = vpop.f32.mrb[0].mxu0
        %3076 = vmatprep.mubr.bf16.mxu0 %v2824
        %3077 = vmatmul.mubr.bf16.gmra.mrb[0].mxu0 %v2647
        %v3078 = vpop.f32.mrb[0].mxu0
        %v3079 = vadd.f32 %v2686, %v3078
        %v3080 = vpop.f32.mrb[0].mxu0
        %v3081 = vpop.f32.mrb[0].mxu0
        %v3082 = vadd.f32 %v2686, %v3081
        %v3083 = vpop.f32.mrb[0].mxu0
        %3084 = vmatprep.mubr.bf16.mxu0 %v2827
        %3085 = vmatmul.mubr.bf16.gmra.mrb[0].mxu0 %v2649
        %v3086 = vpop.f32.mrb[0].mxu0
        %v3087 = vadd.f32 %v2686, %v3086
        %v3088 = vpop.f32.mrb[0].mxu0
        %v3089 = vpop.f32.mrb[0].mxu0
        %v3090 = vadd.f32 %v2686, %v3089
        %v3091 = vpop.f32.mrb[0].mxu0
        %3092 = vmatprep.mubr.bf16.mxu0 %v2830
        %3093 = vmatmul.mubr.bf16.gmra.mrb[0].mxu0 %v2651
        %v3094 = vpop.f32.mrb[0].mxu0
        %v3095 = vadd.f32 %v2686, %v3094
        %v3096 = vpop.f32.mrb[0].mxu0
        %v3097 = vpop.f32.mrb[0].mxu0
        %v3098 = vadd.f32 %v2686, %v3097
        %v3099 = vpop.f32.mrb[0].mxu0
        %3100 = vmatprep.mubr.bf16.mxu0 %v2833
        %3101 = vmatmul.mubr.bf16.gmra.mrb[0].mxu0 %v2653
        %v3102 = vpop.f32.mrb[0].mxu0
        %v3103 = vadd.f32 %v2686, %v3102
        %v3104 = vpop.f32.mrb[0].mxu0
        %v3105 = vpop.f32.mrb[0].mxu0
        %v3106 = vadd.f32 %v2686, %v3105
        %v3107 = vpop.f32.mrb[0].mxu0
        %3108 = vmatprep.mubr.bf16.mxu0 %v2836
        %3109 = vmatmul.mubr.bf16.gmra.mrb[0].mxu0 %v2655
        %v3110 = vpop.f32.mrb[0].mxu0
        %v3111 = vadd.f32 %v2686, %v3110
        %v3112 = vpop.f32.mrb[0].mxu0
        %v3113 = vpop.f32.mrb[0].mxu0
        %v3114 = vadd.f32 %v2686, %v3113
        %v3115 = vpop.f32.mrb[0].mxu0
        %3116 = vmatprep.mubr.bf16.mxu0 %v2839
        %3117 = vmatmul.mubr.bf16.gmra.mrb[0].mxu0 %v2657
        %v3118 = vpop.f32.mrb[0].mxu0
        %v3119 = vadd.f32 %v2686, %v3118
        %v3120 = vpop.f32.mrb[0].mxu0
        %v3121 = vpop.f32.mrb[0].mxu0
        %v3122 = vadd.f32 %v2686, %v3121
        %v3123 = vpop.f32.mrb[0].mxu0
        %3124 = vmatprep.mubr.bf16.mxu0 %v2842
        %3125 = vmatmul.mubr.bf16.gmra.mrb[0].mxu0 %v2659
        %v3126 = vpop.f32.mrb[0].mxu0
        %v3127 = vadd.f32 %v2686, %v3126
        %v3128 = vpop.f32.mrb[0].mxu0
        %v3129 = vpop.f32.mrb[0].mxu0
        %v3130 = vadd.f32 %v2686, %v3129
        %v3131 = vpop.f32.mrb[0].mxu0
        %3132 = vdwg.mxu0
        %v3133 = vmax.f32 %v2879, 0.0
        %v3134 = vmax.f32 %v2882, 0.0
        %v3135 = vmax.f32 %v2887, 0.0
        %v3136 = vmax.f32 %v2890, 0.0
        %v3137 = vmax.f32 %v2895, 0.0
        %v3138 = vmax.f32 %v2898, 0.0
        %v3139 = vmax.f32 %v2903, 0.0
        %v3140 = vmax.f32 %v2906, 0.0
        %v3141 = vmax.f32 %v2911, 0.0
        %v3142 = vmax.f32 %v2914, 0.0
        %v3143 = vmax.f32 %v2919, 0.0
        %v3144 = vmax.f32 %v2922, 0.0
        %v3145 = vmax.f32 %v2927, 0.0
        %v3146 = vmax.f32 %v2930, 0.0
        %v3147 = vmax.f32 %v2935, 0.0
        %v3148 = vmax.f32 %v2938, 0.0
        %v3149 = vmax.f32 %v2943, 0.0
        %v3150 = vmax.f32 %v2946, 0.0
        %v3151 = vmax.f32 %v2951, 0.0
        %v3152 = vmax.f32 %v2954, 0.0
        %v3153 = vmax.f32 %v2959, 0.0
        %v3154 = vmax.f32 %v2962, 0.0
        %v3155 = vmax.f32 %v2967, 0.0
        %v3156 = vmax.f32 %v2970, 0.0
        %v3157 = vmax.f32 %v2975, 0.0
        %v3158 = vmax.f32 %v2978, 0.0
        %v3159 = vmax.f32 %v2983, 0.0
        %v3160 = vmax.f32 %v2986, 0.0
        %v3161 = vmax.f32 %v2991, 0.0
        %v3162 = vmax.f32 %v2994, 0.0
        %v3163 = vmax.f32 %v2999, 0.0
        %v3164 = vmax.f32 %v3002, 0.0
        %v3165 = vmax.f32 %v3007, 0.0
        %v3166 = vmax.f32 %v3010, 0.0
        %v3167 = vmax.f32 %v3015, 0.0
        %v3168 = vmax.f32 %v3018, 0.0
        %v3169 = vmax.f32 %v3023, 0.0
        %v3170 = vmax.f32 %v3026, 0.0
        %v3171 = vmax.f32 %v3031, 0.0
        %v3172 = vmax.f32 %v3034, 0.0
        %v3173 = vmax.f32 %v3039, 0.0
        %v3174 = vmax.f32 %v3042, 0.0
        %v3175 = vmax.f32 %v3047, 0.0
        %v3176 = vmax.f32 %v3050, 0.0
        %v3177 = vmax.f32 %v3055, 0.0
        %v3178 = vmax.f32 %v3058, 0.0
        %v3179 = vmax.f32 %v3063, 0.0
        %v3180 = vmax.f32 %v3066, 0.0
        %v3181 = vmax.f32 %v3071, 0.0
        %v3182 = vmax.f32 %v3074, 0.0
        %v3183 = vmax.f32 %v3079, 0.0
        %v3184 = vmax.f32 %v3082, 0.0
        %v3185 = vmax.f32 %v3087, 0.0
        %v3186 = vmax.f32 %v3090, 0.0
        %v3187 = vmax.f32 %v3095, 0.0
        %v3188 = vmax.f32 %v3098, 0.0
        %v3189 = vmax.f32 %v3103, 0.0
        %v3190 = vmax.f32 %v3106, 0.0
        %v3191 = vmax.f32 %v3111, 0.0
        %v3192 = vmax.f32 %v3114, 0.0
        %v3193 = vmax.f32 %v3119, 0.0
        %v3194 = vmax.f32 %v3122, 0.0
        %v3195 = vmax.f32 %v3127, 0.0
        %v3196 = vmax.f32 %v3130, 0.0
        %v3197 = vld [vmem:[%s4] sm:$0xff]
        %v3198 = vld [vmem:[%s4 + $0x8] sm:$0xff]
        %v3199 = vmul.f32 %v3133, %v3197
        %v3200 = vmul.f32 %v3134, %v3198
        %v3201 = vmul.f32 %v3135, %v3197
        %v3202 = vmul.f32 %v3136, %v3198
        %v3203 = vmul.f32 %v3137, %v3197
        %v3204 = vmul.f32 %v3138, %v3198
        %v3205 = vmul.f32 %v3139, %v3197
        %v3206 = vmul.f32 %v3140, %v3198
        %v3207 = vmul.f32 %v3141, %v3197
        %v3208 = vmul.f32 %v3142, %v3198
        %v3209 = vmul.f32 %v3143, %v3197
        %v3210 = vmul.f32 %v3144, %v3198
        %v3211 = vmul.f32 %v3145, %v3197
        %v3212 = vmul.f32 %v3146, %v3198
        %v3213 = vmul.f32 %v3147, %v3197
        %v3214 = vmul.f32 %v3148, %v3198
        %v3215 = vmul.f32 %v3149, %v3197
        %v3216 = vmul.f32 %v3150, %v3198
        %v3217 = vmul.f32 %v3151, %v3197
        %v3218 = vmul.f32 %v3152, %v3198
        %v3219 = vmul.f32 %v3153, %v3197
        %v3220 = vmul.f32 %v3154, %v3198
        %v3221 = vmul.f32 %v3155, %v3197
        %v3222 = vmul.f32 %v3156, %v3198
        %v3223 = vmul.f32 %v3157, %v3197
        %v3224 = vmul.f32 %v3158, %v3198
        %v3225 = vmul.f32 %v3159, %v3197
        %v3226 = vmul.f32 %v3160, %v3198
        %v3227 = vmul.f32 %v3161, %v3197
        %v3228 = vmul.f32 %v3162, %v3198
        %v3229 = vmul.f32 %v3163, %v3197
        %v3230 = vmul.f32 %v3164, %v3198
        %v3231 = vmul.f32 %v3165, %v3197
        %v3232 = vmul.f32 %v3166, %v3198
        %v3233 = vmul.f32 %v3167, %v3197
        %v3234 = vmul.f32 %v3168, %v3198
        %v3235 = vmul.f32 %v3169, %v3197
        %v3236 = vmul.f32 %v3170, %v3198
        %v3237 = vmul.f32 %v3171, %v3197
        %v3238 = vmul.f32 %v3172, %v3198
        %v3239 = vmul.f32 %v3173, %v3197
        %v3240 = vmul.f32 %v3174, %v3198
        %v3241 = vmul.f32 %v3175, %v3197
        %v3242 = vmul.f32 %v3176, %v3198
        %v3243 = vmul.f32 %v3177, %v3197
        %v3244 = vmul.f32 %v3178, %v3198
        %v3245 = vmul.f32 %v3179, %v3197
        %v3246 = vmul.f32 %v3180, %v3198
        %v3247 = vmul.f32 %v3181, %v3197
        %v3248 = vmul.f32 %v3182, %v3198
        %v3249 = vmul.f32 %v3183, %v3197
        %v3250 = vmul.f32 %v3184, %v3198
        %v3251 = vmul.f32 %v3185, %v3197
        %v3252 = vmul.f32 %v3186, %v3198
        %v3253 = vmul.f32 %v3187, %v3197
        %v3254 = vmul.f32 %v3188, %v3198
        %v3255 = vmul.f32 %v3189, %v3197
        %v3256 = vmul.f32 %v3190, %v3198
        %v3257 = vmul.f32 %v3191, %v3197
        %v3258 = vmul.f32 %v3192, %v3198
        %v3259 = vmul.f32 %v3193, %v3197
        %v3260 = vmul.f32 %v3194, %v3198
        %v3261 = vmul.f32 %v3195, %v3197
        %v3262 = vmul.f32 %v3196, %v3198
        %vm3263 = vcmask 392192
        %v3264 = vsel %vm3263, %v3199, -inf
        %v3265 = vsel %vm3263, %v3200, -inf
        %v3266 = vmax.f32 %v3264, %v3265
        %v3267 = vrot.slane %v3266, 4
        %v3268 = vmax.f32 %v3266, %v3267
        %v3269 = vrot.slane %v3268, 2
        %v3270 = vmax.f32 %v3268, %v3269
        %v3271 = vrot.slane %v3270, 1
        %v3272 = vmax.f32 %v3270, %v3271
        %v3273 = vsel %vm3263, %v3201, -inf
        %v3274 = vsel %vm3263, %v3202, -inf
        %v3275 = vmax.f32 %v3273, %v3274
        %v3276 = vrot.slane %v3275, 4
        %v3277 = vmax.f32 %v3275, %v3276
        %v3278 = vrot.slane %v3277, 2
        %v3279 = vmax.f32 %v3277, %v3278
        %v3280 = vrot.slane %v3279, 1
        %v3281 = vmax.f32 %v3279, %v3280
        %v3282 = vsel %vm3263, %v3203, -inf
        %v3283 = vsel %vm3263, %v3204, -inf
        %v3284 = vmax.f32 %v3282, %v3283
        %v3285 = vrot.slane %v3284, 4
        %v3286 = vmax.f32 %v3284, %v3285
        %v3287 = vrot.slane %v3286, 2
        %v3288 = vmax.f32 %v3286, %v3287
        %v3289 = vrot.slane %v3288, 1
        %v3290 = vmax.f32 %v3288, %v3289
        %v3291 = vsel %vm3263, %v3205, -inf
        %v3292 = vsel %vm3263, %v3206, -inf
        %v3293 = vmax.f32 %v3291, %v3292
        %v3294 = vrot.slane %v3293, 4
        %v3295 = vmax.f32 %v3293, %v3294
        %v3296 = vrot.slane %v3295, 2
        %v3297 = vmax.f32 %v3295, %v3296
        %v3298 = vrot.slane %v3297, 1
        %v3299 = vmax.f32 %v3297, %v3298
        %v3300 = vsel %vm3263, %v3207, -inf
        %v3301 = vsel %vm3263, %v3208, -inf
        %v3302 = vmax.f32 %v3300, %v3301
        %v3303 = vrot.slane %v3302, 4
        %v3304 = vmax.f32 %v3302, %v3303
        %v3305 = vrot.slane %v3304, 2
        %v3306 = vmax.f32 %v3304, %v3305
        %v3307 = vrot.slane %v3306, 1
        %v3308 = vmax.f32 %v3306, %v3307
        %v3309 = vsel %vm3263, %v3209, -inf
        %v3310 = vsel %vm3263, %v3210, -inf
        %v3311 = vmax.f32 %v3309, %v3310
        %v3312 = vrot.slane %v3311, 4
        %v3313 = vmax.f32 %v3311, %v3312
        %v3314 = vrot.slane %v3313, 2
        %v3315 = vmax.f32 %v3313, %v3314
        %v3316 = vrot.slane %v3315, 1
        %v3317 = vmax.f32 %v3315, %v3316
        %v3318 = vsel %vm3263, %v3211, -inf
        %v3319 = vsel %vm3263, %v3212, -inf
        %v3320 = vmax.f32 %v3318, %v3319
        %v3321 = vrot.slane %v3320, 4
        %v3322 = vmax.f32 %v3320, %v3321
        %v3323 = vrot.slane %v3322, 2
        %v3324 = vmax.f32 %v3322, %v3323
        %v3325 = vrot.slane %v3324, 1
        %v3326 = vmax.f32 %v3324, %v3325
        %v3327 = vsel %vm3263, %v3213, -inf
        %v3328 = vsel %vm3263, %v3214, -inf
        %v3329 = vmax.f32 %v3327, %v3328
        %v3330 = vrot.slane %v3329, 4
        %v3331 = vmax.f32 %v3329, %v3330
        %v3332 = vrot.slane %v3331, 2
        %v3333 = vmax.f32 %v3331, %v3332
        %v3334 = vrot.slane %v3333, 1
        %v3335 = vmax.f32 %v3333, %v3334
        %v3336 = vsel %vm3263, %v3215, -inf
        %v3337 = vsel %vm3263, %v3216, -inf
        %v3338 = vmax.f32 %v3336, %v3337
        %v3339 = vrot.slane %v3338, 4
        %v3340 = vmax.f32 %v3338, %v3339
        %v3341 = vrot.slane %v3340, 2
        %v3342 = vmax.f32 %v3340, %v3341
        %v3343 = vrot.slane %v3342, 1
        %v3344 = vmax.f32 %v3342, %v3343
        %v3345 = vsel %vm3263, %v3217, -inf
        %v3346 = vsel %vm3263, %v3218, -inf
        %v3347 = vmax.f32 %v3345, %v3346
        %v3348 = vrot.slane %v3347, 4
        %v3349 = vmax.f32 %v3347, %v3348
        %v3350 = vrot.slane %v3349, 2
        %v3351 = vmax.f32 %v3349, %v3350
        %v3352 = vrot.slane %v3351, 1
        %v3353 = vmax.f32 %v3351, %v3352
        %v3354 = vsel %vm3263, %v3219, -inf
        %v3355 = vsel %vm3263, %v3220, -inf
        %v3356 = vmax.f32 %v3354, %v3355
        %v3357 = vrot.slane %v3356, 4
        %v3358 = vmax.f32 %v3356, %v3357
        %v3359 = vrot.slane %v3358, 2
        %v3360 = vmax.f32 %v3358, %v3359
        %v3361 = vrot.slane %v3360, 1
        %v3362 = vmax.f32 %v3360, %v3361
        %v3363 = vsel %vm3263, %v3221, -inf
        %v3364 = vsel %vm3263, %v3222, -inf
        %v3365 = vmax.f32 %v3363, %v3364
        %v3366 = vrot.slane %v3365, 4
        %v3367 = vmax.f32 %v3365, %v3366
        %v3368 = vrot.slane %v3367, 2
        %v3369 = vmax.f32 %v3367, %v3368
        %v3370 = vrot.slane %v3369, 1
        %v3371 = vmax.f32 %v3369, %v3370
        %v3372 = vsel %vm3263, %v3223, -inf
        %v3373 = vsel %vm3263, %v3224, -inf
        %v3374 = vmax.f32 %v3372, %v3373
        %v3375 = vrot.slane %v3374, 4
        %v3376 = vmax.f32 %v3374, %v3375
        %v3377 = vrot.slane %v3376, 2
        %v3378 = vmax.f32 %v3376, %v3377
        %v3379 = vrot.slane %v3378, 1
        %v3380 = vmax.f32 %v3378, %v3379
        %v3381 = vsel %vm3263, %v3225, -inf
        %v3382 = vsel %vm3263, %v3226, -inf
        %v3383 = vmax.f32 %v3381, %v3382
        %v3384 = vrot.slane %v3383, 4
        %v3385 = vmax.f32 %v3383, %v3384
        %v3386 = vrot.slane %v3385, 2
        %v3387 = vmax.f32 %v3385, %v3386
        %v3388 = vrot.slane %v3387, 1
        %v3389 = vmax.f32 %v3387, %v3388
        %v3390 = vsel %vm3263, %v3227, -inf
        %v3391 = vsel %vm3263, %v3228, -inf
        %v3392 = vmax.f32 %v3390, %v3391
        %v3393 = vrot.slane %v3392, 4
        %v3394 = vmax.f32 %v3392, %v3393
        %v3395 = vrot.slane %v3394, 2
        %v3396 = vmax.f32 %v3394, %v3395
        %v3397 = vrot.slane %v3396, 1
        %v3398 = vmax.f32 %v3396, %v3397
        %v3399 = vsel %vm3263, %v3229, -inf
        %v3400 = vsel %vm3263, %v3230, -inf
        %v3401 = vmax.f32 %v3399, %v3400
        %v3402 = vrot.slane %v3401, 4
        %v3403 = vmax.f32 %v3401, %v3402
        %v3404 = vrot.slane %v3403, 2
        %v3405 = vmax.f32 %v3403, %v3404
        %v3406 = vrot.slane %v3405, 1
        %v3407 = vmax.f32 %v3405, %v3406
        %v3408 = vsel %vm3263, %v3231, -inf
        %v3409 = vsel %vm3263, %v3232, -inf
        %v3410 = vmax.f32 %v3408, %v3409
        %v3411 = vrot.slane %v3410, 4
        %v3412 = vmax.f32 %v3410, %v3411
        %v3413 = vrot.slane %v3412, 2
        %v3414 = vmax.f32 %v3412, %v3413
        %v3415 = vrot.slane %v3414, 1
        %v3416 = vmax.f32 %v3414, %v3415
        %v3417 = vsel %vm3263, %v3233, -inf
        %v3418 = vsel %vm3263, %v3234, -inf
        %v3419 = vmax.f32 %v3417, %v3418
        %v3420 = vrot.slane %v3419, 4
        %v3421 = vmax.f32 %v3419, %v3420
        %v3422 = vrot.slane %v3421, 2
        %v3423 = vmax.f32 %v3421, %v3422
        %v3424 = vrot.slane %v3423, 1
        %v3425 = vmax.f32 %v3423, %v3424
        %v3426 = vsel %vm3263, %v3235, -inf
        %v3427 = vsel %vm3263, %v3236, -inf
        %v3428 = vmax.f32 %v3426, %v3427
        %v3429 = vrot.slane %v3428, 4
        %v3430 = vmax.f32 %v3428, %v3429
        %v3431 = vrot.slane %v3430, 2
        %v3432 = vmax.f32 %v3430, %v3431
        %v3433 = vrot.slane %v3432, 1
        %v3434 = vmax.f32 %v3432, %v3433
        %v3435 = vsel %vm3263, %v3237, -inf
        %v3436 = vsel %vm3263, %v3238, -inf
        %v3437 = vmax.f32 %v3435, %v3436
        %v3438 = vrot.slane %v3437, 4
        %v3439 = vmax.f32 %v3437, %v3438
        %v3440 = vrot.slane %v3439, 2
        %v3441 = vmax.f32 %v3439, %v3440
        %v3442 = vrot.slane %v3441, 1
        %v3443 = vmax.f32 %v3441, %v3442
        %v3444 = vsel %vm3263, %v3239, -inf
        %v3445 = vsel %vm3263, %v3240, -inf
        %v3446 = vmax.f32 %v3444, %v3445
        %v3447 = vrot.slane %v3446, 4
        %v3448 = vmax.f32 %v3446, %v3447
        %v3449 = vrot.slane %v3448, 2
        %v3450 = vmax.f32 %v3448, %v3449
        %v3451 = vrot.slane %v3450, 1
        %v3452 = vmax.f32 %v3450, %v3451
        %v3453 = vsel %vm3263, %v3241, -inf
        %v3454 = vsel %vm3263, %v3242, -inf
        %v3455 = vmax.f32 %v3453, %v3454
        %v3456 = vrot.slane %v3455, 4
        %v3457 = vmax.f32 %v3455, %v3456
        %v3458 = vrot.slane %v3457, 2
        %v3459 = vmax.f32 %v3457, %v3458
        %v3460 = vrot.slane %v3459, 1
        %v3461 = vmax.f32 %v3459, %v3460
        %v3462 = vsel %vm3263, %v3243, -inf
        %v3463 = vsel %vm3263, %v3244, -inf
        %v3464 = vmax.f32 %v3462, %v3463
        %v3465 = vrot.slane %v3464, 4
        %v3466 = vmax.f32 %v3464, %v3465
        %v3467 = vrot.slane %v3466, 2
        %v3468 = vmax.f32 %v3466, %v3467
        %v3469 = vrot.slane %v3468, 1
        %v3470 = vmax.f32 %v3468, %v3469
        %v3471 = vsel %vm3263, %v3245, -inf
        %v3472 = vsel %vm3263, %v3246, -inf
        %v3473 = vmax.f32 %v3471, %v3472
        %v3474 = vrot.slane %v3473, 4
        %v3475 = vmax.f32 %v3473, %v3474
        %v3476 = vrot.slane %v3475, 2
        %v3477 = vmax.f32 %v3475, %v3476
        %v3478 = vrot.slane %v3477, 1
        %v3479 = vmax.f32 %v3477, %v3478
        %v3480 = vsel %vm3263, %v3247, -inf
        %v3481 = vsel %vm3263, %v3248, -inf
        %v3482 = vmax.f32 %v3480, %v3481
        %v3483 = vrot.slane %v3482, 4
        %v3484 = vmax.f32 %v3482, %v3483
        %v3485 = vrot.slane %v3484, 2
        %v3486 = vmax.f32 %v3484, %v3485
        %v3487 = vrot.slane %v3486, 1
        %v3488 = vmax.f32 %v3486, %v3487
        %v3489 = vsel %vm3263, %v3249, -inf
        %v3490 = vsel %vm3263, %v3250, -inf
        %v3491 = vmax.f32 %v3489, %v3490
        %v3492 = vrot.slane %v3491, 4
        %v3493 = vmax.f32 %v3491, %v3492
        %v3494 = vrot.slane %v3493, 2
        %v3495 = vmax.f32 %v3493, %v3494
        %v3496 = vrot.slane %v3495, 1
        %v3497 = vmax.f32 %v3495, %v3496
        %v3498 = vsel %vm3263, %v3251, -inf
        %v3499 = vsel %vm3263, %v3252, -inf
        %v3500 = vmax.f32 %v3498, %v3499
        %v3501 = vrot.slane %v3500, 4
        %v3502 = vmax.f32 %v3500, %v3501
        %v3503 = vrot.slane %v3502, 2
        %v3504 = vmax.f32 %v3502, %v3503
        %v3505 = vrot.slane %v3504, 1
        %v3506 = vmax.f32 %v3504, %v3505
        %v3507 = vsel %vm3263, %v3253, -inf
        %v3508 = vsel %vm3263, %v3254, -inf
        %v3509 = vmax.f32 %v3507, %v3508
        %v3510 = vrot.slane %v3509, 4
        %v3511 = vmax.f32 %v3509, %v3510
        %v3512 = vrot.slane %v3511, 2
        %v3513 = vmax.f32 %v3511, %v3512
        %v3514 = vrot.slane %v3513, 1
        %v3515 = vmax.f32 %v3513, %v3514
        %v3516 = vsel %vm3263, %v3255, -inf
        %v3517 = vsel %vm3263, %v3256, -inf
        %v3518 = vmax.f32 %v3516, %v3517
        %v3519 = vrot.slane %v3518, 4
        %v3520 = vmax.f32 %v3518, %v3519
        %v3521 = vrot.slane %v3520, 2
        %v3522 = vmax.f32 %v3520, %v3521
        %v3523 = vrot.slane %v3522, 1
        %v3524 = vmax.f32 %v3522, %v3523
        %v3525 = vsel %vm3263, %v3257, -inf
        %v3526 = vsel %vm3263, %v3258, -inf
        %v3527 = vmax.f32 %v3525, %v3526
        %v3528 = vrot.slane %v3527, 4
        %v3529 = vmax.f32 %v3527, %v3528
        %v3530 = vrot.slane %v3529, 2
        %v3531 = vmax.f32 %v3529, %v3530
        %v3532 = vrot.slane %v3531, 1
        %v3533 = vmax.f32 %v3531, %v3532
        %v3534 = vsel %vm3263, %v3259, -inf
        %v3535 = vsel %vm3263, %v3260, -inf
        %v3536 = vmax.f32 %v3534, %v3535
        %v3537 = vrot.slane %v3536, 4
        %v3538 = vmax.f32 %v3536, %v3537
        %v3539 = vrot.slane %v3538, 2
        %v3540 = vmax.f32 %v3538, %v3539
        %v3541 = vrot.slane %v3540, 1
        %v3542 = vmax.f32 %v3540, %v3541
        %v3543 = vsel %vm3263, %v3261, -inf
        %v3544 = vsel %vm3263, %v3262, -inf
        %v3545 = vmax.f32 %v3543, %v3544
        %v3546 = vrot.slane %v3545, 4
        %v3547 = vmax.f32 %v3545, %v3546
        %v3548 = vrot.slane %v3547, 2
        %v3549 = vmax.f32 %v3547, %v3548
        %v3550 = vrot.slane %v3549, 1
        %v3551 = vmax.f32 %v3549, %v3550
        %v3552 = vld [vmem:[%s5] sm:$0xff]
        %v3553 = vld [vmem:[%s5 + $0x8] sm:$0xff]
        %v3554 = vld [vmem:[%s5 + $0x10] sm:$0xff]
        %v3555 = vld [vmem:[%s5 + $0x18] sm:$0xff]
        %v3556 = vld [vmem:[%s5 + $0x20] sm:$0xff]
        %v3557 = vld [vmem:[%s5 + $0x28] sm:$0xff]
        %v3558 = vld [vmem:[%s6] sm:$0x1]
        %v3560 = vlaneseq
        %v3561 = vshrl.u32 %v3560, 7
        %v3562 = vsub.s32 0, %v3561
        %v3563 = vrot.slane %v3558, %v3562
        %vm3597 = vcmask 1041409
        %v3598 = vsel %vm3597, %v3281, %v3272
        %vm3599 = vcmask 1042434
        %v3600 = vsel %vm3599, %v3290, %v3598
        %vm3601 = vcmask 1043459
        %v3602 = vsel %vm3601, %v3299, %v3600
        %vm3603 = vcmask 1044484
        %v3604 = vsel %vm3603, %v3308, %v3602
        %vm3605 = vcmask 1045509
        %v3606 = vsel %vm3605, %v3317, %v3604
        %vm3607 = vcmask 1046534
        %v3608 = vsel %vm3607, %v3326, %v3606
        %vm3609 = vcmask 1047559
        %v3610 = vsel %vm3609, %v3335, %v3608
        %v3611 = vsel %vm3597, %v3353, %v3344
        %v3612 = vsel %vm3599, %v3362, %v3611
        %v3613 = vsel %vm3601, %v3371, %v3612
        %v3614 = vsel %vm3603, %v3380, %v3613
        %v3615 = vsel %vm3605, %v3389, %v3614
        %v3616 = vsel %vm3607, %v3398, %v3615
        %v3617 = vsel %vm3609, %v3407, %v3616
        %v3618 = vsel %vm3597, %v3425, %v3416
        %v3619 = vsel %vm3599, %v3434, %v3618
        %v3620 = vsel %vm3601, %v3443, %v3619
        %v3621 = vsel %vm3603, %v3452, %v3620
        %v3622 = vsel %vm3605, %v3461, %v3621
        %v3623 = vsel %vm3607, %v3470, %v3622
        %v3624 = vsel %vm3609, %v3479, %v3623
        %v3625 = vsel %vm3597, %v3497, %v3488
        %v3626 = vsel %vm3599, %v3506, %v3625
        %v3627 = vsel %vm3601, %v3515, %v3626
        %v3628 = vsel %vm3603, %v3524, %v3627
        %v3629 = vsel %vm3605, %v3533, %v3628
        %v3630 = vsel %vm3607, %v3542, %v3629
        %v3631 = vsel %vm3609, %v3551, %v3630
        %v3632 = vsel %vm3263, %v3610, 0
        %v3634 = vsel %vm3263, %v3617, 0
        %v3636 = vsel %vm3263, %v3624, 0
        %v3638 = vsel %vm3263, %v3631, 0
        %3640 = vmatprep.subr.mxu0 0.0
        %3641 = vmatpush1.msra.mxu0 %v3552
        %3642 = vmatprep.subr.mxu0 0.0
        %3643 = vmatpush1.msra.mxu0 %v3553
        %3644 = vmatprep.subr.mxu0 0.0
        %3645 = vmatpush1.msra.mxu0 %v3554
        %3646 = vmatprep.subr.mxu0 0.0
        %3647 = vmatpush1.msra.mxu0 %v3555
        %3648 = vmatprep.subr.mxu0 0.0
        %3649 = vmatpush1.msra.mxu0 %v3556
        %3650 = vmatprep.subr.mxu0 0.0
        %3651 = vmatpush1.msra.mxu0 %v3557
        %3652 = vmatprep.subr.mxu0 0.0
        %3653 = vmatpush1.msra.mxu0 0.0
        %3654 = vmatprep.subr.mxu0 0.0
        %3655 = vmatpush1.msra.mxu0 0.0
        %3656 = vmatprep.subr.mxu0 0.0
        %3657 = vmatpush1.msra.mxu0 0.0
        %3658 = vmatprep.subr.mxu0 0.0
        %3659 = vmatpush1.msra.mxu0 0.0
        %3660 = vmatprep.subr.mxu0 0.0
        %3661 = vmatpush1.msra.mxu0 0.0
        %3662 = vmatprep.subr.mxu0 0.0
        %3663 = vmatpush1.msra.mxu0 0.0
        %3664 = vmatprep.subr.mxu0 0.0
        %3665 = vmatpush1.msra.mxu0 0.0
        %3666 = vmatprep.subr.mxu0 0.0
        %3667 = vmatpush1.msra.mxu0 0.0
        %3668 = vmatprep.subr.mxu0 0.0
        %3669 = vmatpush1.msra.mxu0 0.0
        %3670 = vmatprep.subr.mxu0 0.0
        %3671 = vmatpush1.msra.mxu0 0.0
        %3672 = vmatprep.subr.mxu0 0.0
        %3673 = vmatpush1.msra.mxu0 0.0
        %3674 = vmatprep.subr.mxu0 0.0
        %3675 = vmatpush1.msra.mxu0 0.0
        %3676 = vmatprep.subr.mxu0 0.0
        %3677 = vmatpush1.msra.mxu0 0.0
        %3678 = vmatprep.subr.mxu0 0.0
        %3679 = vmatpush1.msra.mxu0 0.0
        %3680 = vmatprep.subr.mxu0 0.0
        %3681 = vmatpush1.msra.mxu0 0.0
        %3682 = vmatprep.subr.mxu0 0.0
        %3683 = vmatpush1.msra.mxu0 0.0
        %3684 = vmatprep.subr.mxu0 0.0
        %3685 = vmatpush1.msra.mxu0 0.0
        %3686 = vmatprep.subr.mxu0 0.0
        %3687 = vmatpush1.msra.mxu0 0.0
        %3688 = vmatprep.subr.mxu0 0.0
        %3689 = vmatpush1.msra.mxu0 0.0
        %3690 = vmatprep.subr.mxu0 0.0
        %3691 = vmatpush1.msra.mxu0 0.0
        %3692 = vmatprep.subr.mxu0 0.0
        %3693 = vmatpush1.msra.mxu0 0.0
        %3694 = vmatprep.subr.mxu0 0.0
        %3695 = vmatpush1.msra.mxu0 0.0
        %3696 = vmatprep.subr.mxu0 0.0
        %3697 = vmatpush1.msra.mxu0 0.0
        %3698 = vmatprep.subr.mxu0 0.0
        %3699 = vmatpush1.msra.mxu0 0.0
        %3700 = vmatprep.subr.mxu0 0.0
        %3701 = vmatpush1.msra.mxu0 0.0
        %3702 = vmatprep.subr.mxu0 0.0
        %3703 = vmatpush1.msra.mxu0 0.0
        %3704 = vmatprep.mubr.f32.mxu0 0.0
        %3705 = vmatmul.mubr.f32.gmra.mrb[0].mxu0 %v3632
        %v3706 = vpop.f32.mrb[0].mxu0
        %v3707 = vadd.f32 %v3563, %v3706
        %v3708 = vpop.f32.mrb[0].mxu0
        %3709 = vmatprep.mubr.f32.mxu0 0.0
        %3710 = vmatmul.mubr.f32.gmra.mrb[0].mxu0 %v3634
        %v3711 = vpop.f32.mrb[0].mxu0
        %v3712 = vadd.f32 %v3563, %v3711
        %v3713 = vpop.f32.mrb[0].mxu0
        %3714 = vmatprep.mubr.f32.mxu0 0.0
        %3715 = vmatmul.mubr.f32.gmra.mrb[0].mxu0 %v3636
        %v3716 = vpop.f32.mrb[0].mxu0
        %v3717 = vadd.f32 %v3563, %v3716
        %v3718 = vpop.f32.mrb[0].mxu0
        %3719 = vmatprep.mubr.f32.mxu0 0.0
        %3720 = vmatmul.mubr.f32.gmra.mrb[0].mxu0 %v3638
        %v3721 = vpop.f32.mrb[0].mxu0
        %v3722 = vadd.f32 %v3563, %v3721
        %v3723 = vpop.f32.mrb[0].mxu0
        %3724 = vdwg.mxu0
        %3725 = vst [vmem:[%s272] sm:$0xff] %v3707
        %3726 = vst [vmem:[%s272 + $0x8] sm:$0xff] %v3712
        %3727 = vst [vmem:[%s272 + $0x10] sm:$0xff] %v3717
        %3728 = vst [vmem:[%s272 + $0x18] sm:$0xff] %v3722
        %s3729 = sand.u32 %s181, 1
        %s3730 = scalar_lea.sflag [#allocation3], %s3729
        %s3731 = sand.u32 %s181, 1
        %s3732 = smul.addr %s3731, 32
        %s3733 = scalar_lea.vmem [#allocation2], %s3732
        // Predicated region
        $region49: #{tpu_custom_call.1} parent=47 // pred_check
          %p3734 = pneg %p191
        $region50: #{tpu_custom_call.1} parent=47 // pred_check_branch
          %3736 = sbr.rel (%p3734) target = $region52
        $region51: #{tpu_custom_call.1} parent=47 // pred_region
          %s3737 = smul.u32 4, %s21
          %s3739 = ssub.s32 512, 512
          %3740 = vsyncadd %s3730, %s3739
          %s3741 = smul.addr %s3737, 128
          %s3742 = scalar_lea.hbm %s7, %s3741
          %s3743 = sshll.u32 %s3733, 4
          %s3744 = int_to_ptr.vmem [resolvable:$true] %s3743
          %3749 = dma.vmem_to_hbm [thread:$0]  %s3744, 512, %s3742, %s3730, 128, 128, 8
        $region52: #{tpu_custom_call.1} parent=47 // pred_fallthru
          _
      $region48: #{tpu_custom_call.1} parent=5 // pred_fallthru
        _
      %p3750 = scmp.le.s32.totalorder 2, %s16
      // Predicated region
      $region53: #{tpu_custom_call.1} parent=5 // pred_check
        %p3751 = pneg %p3750
      $region54: #{tpu_custom_call.1} parent=5 // pred_check_branch
        %3753 = sbr.rel (%p3751) target = $region56
      $region55: #{tpu_custom_call.1} parent=5 // pred_region
        %s3754 = ssub.s32 %s16, 2
        // Predicated region
        $region57: #{tpu_custom_call.1} parent=55 // pred_check
          %p3755 = pneg %p197
        $region58: #{tpu_custom_call.1} parent=55 // pred_check_branch
          %3757 = sbr.rel (%p3755) target = $region60
        $region59: #{tpu_custom_call.1} parent=55 // pred_region
          %s3758 = sand.u32 %s182, 1
          %s3759 = scalar_lea.sflag [#allocation3], %s3758
          %s3760 = sand.u32 %s182, 1
          %s3761 = smul.addr %s3760, 32
          %s3762 = scalar_lea.vmem [#allocation2], %s3761
          %3763 = dma.done %s3759, 512
        $region60: #{tpu_custom_call.1} parent=55 // pred_fallthru
          _
      $region56: #{tpu_custom_call.1} parent=5 // pred_fallthru
        _
    $region6: #{tpu_custom_call.1} parent=1 // loop_footer
      %s20 = sadd.s32 1, %s16
    $region7: #{tpu_custom_call.1} parent=1 // loop_footer_branch
      %15 = sbr.rel target = $region3
    $region8: #{tpu_custom_call.1} parent=1 // loop_exit
      _
    %3764 = vsyncpa [#allocation3], 1
    %s3765 = scalar_lea.sflag [#allocation3], 1
    %3766 = vsyncpa %s3765, 1

</llo_original>
